<compile_context>
chip_gen: v7x
topology: tpu7x:2x2x1
jax: 0.10.0
libtpu: 0.0.40
codegen_flags: <defaults>
</compile_context>

<pallas_src>
import functools

import jax
import jax.numpy as jnp
from jax import lax
from jax.experimental import pallas as pl
from jax.experimental.pallas import tpu as pltpu


def _upconv_bn_lrelu_kernel(x_ref, w_ref, gb_ref, o_ref, sum_ref, ssq_ref, *,
                            kh, kw, oh, ow, oc, n_total, eps, neg_slope):
    phase = pl.program_id(0)   # 0: accumulate global BN stats, 1: normalize+write
    img = pl.program_id(1)     # image (batch) index

    cin = w_ref.shape[1]
    ocp = w_ref.shape[2]

    # ---- transposed conv for this image: stride-1 conv over the dilated /
    #      padded input, done as KH*KW shifted-window matmuls (in-kernel
    #      "im2col"; nothing duplicated in HBM).  f32 accumulation.
    xv = x_ref[0]                                           # (HP, WP, C) in VMEM
    acc = jnp.zeros((oh * ow, ocp), jnp.float32)
    for i in range(kh):
        for j in range(kw):
            patch = xv[i:i + oh, j:j + ow, :].reshape(oh * ow, cin)   # (M, C)
            acc = acc + jnp.dot(patch, w_ref[i * kw + j],
                                preferred_element_type=jnp.float32)   # (M, OCp)

    # ---- phase 0: global (over N*OH*OW) per-channel batch statistics.
    @pl.when(jnp.logical_and(phase == 0, img == 0))
    def _init_stats():
        sum_ref[...] = jnp.zeros_like(sum_ref)
        ssq_ref[...] = jnp.zeros_like(ssq_ref)

    @pl.when(phase == 0)
    def _accum_stats():
        sum_ref[...] += jnp.sum(acc, axis=0, keepdims=True)
        ssq_ref[...] += jnp.sum(acc * acc, axis=0, keepdims=True)

    # ---- phase 1: BatchNorm (training-mode batch stats, biased variance) +
    #      LeakyReLU, written lane-dense as (OC, OH*OW) -> NCHW in the wrapper.
    @pl.when(phase == 1)
    def _finalize():
        inv_m = 1.0 / float(n_total * oh * ow)
        mean = sum_ref[...] * inv_m                          # (1, OCp)
        # E[x^2] - mean^2 in f32; clamp for safety (review correctness note).
        var = jnp.maximum(ssq_ref[...] * inv_m - mean * mean, 0.0)
        scale = gb_ref[0:1, :] * lax.rsqrt(var + eps)        # gamma * rsqrt
        shift = gb_ref[1:2, :] - mean * scale                # beta - mean*scale
        y = acc * scale + shift
        y = jnp.where(y >= 0, y, neg_slope * y)              # LeakyReLU(0.2)
        # Transpose the fully (8,128)-aligned (M, OCp) tile, slice the real
        # channels, store (OC, OH*OW): lane-dense, unmasked stores.
        o_ref[0] = y.T[:oc, :].astype(o_ref.dtype)


def up_conv(x, weight, bias, gamma, beta, *, stride, padding,
            eps=1e-5, neg_slope=0.2, compute_dtype=jnp.float32):
    """UpConv forward (default config).

    x:      (N, C, H, W)     NCHW float32
    weight: (C, OC, KH, KW)  PyTorch ConvTranspose2d layout
    bias:   (OC,)            accepted for API parity; cancelled exactly by BN
    gamma, beta: (OC,)       BatchNorm2d affine parameters
    returns (N, OC, OH, OW) float32 with OH = (H-1)*stride - 2*padding + KH.
    """
    del bias  # per-channel constant; BN's mean subtraction removes it exactly
    n, c, h, w = x.shape
    c_w, oc, kh, kw = weight.shape
    assert c_w == c, "weight must be (C_in, C_out, KH, KW) (ConvTranspose2d layout)"
    s, p = stride, padding
    assert 0 <= p <= kh - 1 and 0 <= p <= kw - 1
    oh = (h - 1) * s - 2 * p + kh
    ow = (w - 1) * s - 2 * p + kw

    # Dilate (interior pad by stride-1) + edge pad, NCHW -> NHWC so channels
    # sit on the lane axis.  One XLA pad, ~output-sized (no im2col in HBM).
    ph, pw = kh - 1 - p, kw - 1 - p
    x_nhwc = jnp.transpose(x, (0, 2, 3, 1)).astype(compute_dtype)
    x_pad = lax.pad(x_nhwc, jnp.array(0, dtype=compute_dtype),
                    ((0, 0, 0), (ph, ph, s - 1), (pw, pw, s - 1), (0, 0, 0)))
    _, hp, wp, _ = x_pad.shape

    # Equivalent stride-1 conv kernel: swap in/out channels, flip spatially,
    # laid out (KH*KW, C, OCp), OC zero-padded to a multiple of 128.
    ocp = max(128, ((oc + 127) // 128) * 128)
    w_flip = jnp.transpose(weight, (2, 3, 0, 1))[::-1, ::-1]     # (KH, KW, C, OC)
    w_arr = jnp.pad(w_flip.reshape(kh * kw, c, oc),
                    ((0, 0), (0, 0), (0, ocp - oc))).astype(compute_dtype)

    # gamma/beta packed into one (2, OCp) block: one DMA stream, one VMEM tile.
    gb = jnp.zeros((2, ocp), jnp.float32)
    gb = gb.at[0, :oc].set(gamma.astype(jnp.float32))
    gb = gb.at[1, :oc].set(beta.astype(jnp.float32))

    m_img = oh * ow
    kernel = functools.partial(
        _upconv_bn_lrelu_kernel, kh=kh, kw=kw, oh=oh, ow=ow, oc=oc,
        n_total=n, eps=eps, neg_slope=neg_slope)

    out = pl.pallas_call(
        kernel,
        out_shape=jax.ShapeDtypeStruct((n, oc, m_img), jnp.float32),
        grid_spec=pltpu.PrefetchScalarGridSpec(
            num_scalar_prefetch=0,
            # (phase, image): phase 0 accumulates global BN stats, phase 1
            # normalizes and writes.  Both axes carry the stats scratch.
            # For large spatial sizes, add an output-row block axis (+halo).
            grid=(2, n),
            in_specs=[
                pl.BlockSpec((1, hp, wp, c), lambda ph_, b: (b, 0, 0, 0)),
                pl.BlockSpec((kh * kw, c, ocp), lambda ph_, b: (0, 0, 0)),
                pl.BlockSpec((2, ocp), lambda ph_, b: (0, 0)),
            ],
            # Phase 0 maps every step to block 0 (never written in-kernel, so
            # nothing meaningful is flushed); phase 1 writes block b exactly
            # once -> no garbage/duplicate output traffic.
            out_specs=pl.BlockSpec((1, oc, m_img),
                                   lambda ph_, b: (ph_ * b, 0, 0)),
            scratch_shapes=[pltpu.VMEM((1, ocp), jnp.float32),    # sum
                            pltpu.VMEM((1, ocp), jnp.float32)],   # sum of squares
        ),
        compiler_params=pltpu.CompilerParams(
            dimension_semantics=("arbitrary", "arbitrary"),
            vmem_limit_bytes=32 * 1024 * 1024,   # fits v7x's 64 MiB VMEM
        ),
    )(x_pad, w_arr, gb)

    # (N, OC, OH*OW) -> (N, OC, OH, OW): metadata-only reshape, already NCHW.
    return out.reshape(n, oc, oh, ow)


def _reference(x, weight, bias, gamma, beta, *, stride, padding,
               eps=1e-5, neg_slope=0.2):
    """Direct (scatter-style) ConvTranspose2d + train-mode BN + LeakyReLU."""
    n, c, h, w = x.shape
    _, oc, kh, kw = weight.shape
    s, p = stride, padding
    oh_full = (h - 1) * s + kh
    ow_full = (w - 1) * s + kw
    y = jnp.zeros((n, oc, oh_full, ow_full), jnp.float32)
    for i in range(kh):
        for j in range(kw):
            contrib = jnp.einsum('nchw,co->nohw', x, weight[:, :, i, j])
            y = y.at[:, :, i:i + (h - 1) * s + 1:s,
                     j:j + (w - 1) * s + 1:s].add(contrib)
    y = y[:, :, p:oh_full - p, p:ow_full - p] + bias.reshape(1, -1, 1, 1)
    mean = jnp.mean(y, axis=(0, 2, 3), keepdims=True)
    var = jnp.mean((y - mean) ** 2, axis=(0, 2, 3), keepdims=True)
    xhat = (y - mean) / jnp.sqrt(var + eps)
    out = xhat * gamma.reshape(1, -1, 1, 1) + beta.reshape(1, -1, 1, 1)
    return jnp.where(out >= 0, out, neg_slope * out)


if __name__ == "__main__":
    key = jax.random.PRNGKey(0)
    k_x, k_w, k_b, k_g, k_be = jax.random.split(key, 5)

    # GAN-generator-style upconv: 4 -> 8 channels, 4x4, stride 2, pad 1
    # (8x8 spatial -> 16x16).
    N, C, H, W = 2, 4, 8, 8
    OC, KH, KW = 8, 4, 4
    STRIDE, PAD = 2, 1

    x = jax.random.normal(k_x, (N, C, H, W), jnp.float32)
    weight = 0.1 * jax.random.normal(k_w, (C, OC, KH, KW), jnp.float32)
    bias = 0.05 * jax.random.normal(k_b, (OC,), jnp.float32)
    gamma = 1.0 + 0.1 * jax.random.normal(k_g, (OC,), jnp.float32)
    beta = 0.1 * jax.random.normal(k_be, (OC,), jnp.float32)

    ref = _reference(x, weight, bias, gamma, beta, stride=STRIDE, padding=PAD)

    # f32 path (v5e-friendly): strict check.
    out_f32 = jax.block_until_ready(
        up_conv(x, weight, bias, gamma, beta, stride=STRIDE, padding=PAD,
                compute_dtype=jnp.float32))
    assert out_f32.shape == (N, OC, 2 * H, 2 * W)
    assert jnp.allclose(out_f32, ref, atol=1e-4, rtol=1e-4)

    # bf16 MXU inputs / f32 accumulation path (v6e / v7x): loose check.
    out_bf16 = jax.block_until_ready(
        up_conv(x, weight, bias, gamma, beta, stride=STRIDE, padding=PAD,
                compute_dtype=jnp.bfloat16))
    assert out_bf16.shape == (N, OC, 2 * H, 2 * W)
    assert jnp.allclose(out_bf16, ref, atol=5e-2, rtol=5e-2)

    print("KERNEL_OK")
</pallas_src>

<mosaic_0001>
module attributes {stable_mosaic.version = 11 : i64} {
  func.func @_upconv_bn_lrelu_kernel(%arg0: i32, %arg1: i32, %arg2: memref<1x19x19x4xf32, #tpu.memory_space<vmem>>, %arg3: memref<16x4x128xf32, #tpu.memory_space<vmem>>, %arg4: memref<2x128xf32, #tpu.memory_space<vmem>>, %arg5: memref<1x8x256xf32, #tpu.memory_space<vmem>>, %arg6: memref<1x128xf32, #tpu.memory_space<vmem>>, %arg7: memref<1x128xf32, #tpu.memory_space<vmem>>) attributes {dimension_semantics = [#tpu.dimension_semantics<arbitrary>, #tpu.dimension_semantics<arbitrary>], iteration_bounds = array<i64: 2, 2>, scalar_prefetch = 0 : i64, scratch_operands = 2 : i64, tpu.core_type = #tpu.core_type<tc>, window_params = [{transform_indices = @transform_0, window_bounds = array<i64: 1, 19, 19, 4>}, {pipeline_mode = #tpu.pipeline_mode<synchronous>, transform_indices = @transform_1, window_bounds = array<i64: 16, 4, 128>}, {pipeline_mode = #tpu.pipeline_mode<synchronous>, transform_indices = @transform_2, window_bounds = array<i64: 2, 128>}, {transform_indices = @transform_3, window_bounds = array<i64: 1, 8, 256>}]} {
    %c0 = arith.constant 0 : index
    %c0_0 = arith.constant 0 : index
    %c0_1 = arith.constant 0 : index
    %c0_2 = arith.constant 0 : index
    %0 = vector.load %arg2[%c0, %c0_0, %c0_1, %c0_2] : memref<1x19x19x4xf32, #tpu.memory_space<vmem>>, vector<1x19x19x4xf32>
    %1 = vector.shape_cast %0 : vector<1x19x19x4xf32> to vector<19x19x4xf32>
    %cst = arith.constant 0.000000e+00 : f32
    %2 = vector.broadcast %cst : f32 to vector<256x128xf32>
    %3 = vector.extract_strided_slice %1 {offsets = [0, 0, 0], sizes = [16, 16, 4], strides = [1, 1, 1]} : vector<19x19x4xf32> to vector<16x16x4xf32>
    %4 = vector.shape_cast %3 : vector<16x16x4xf32> to vector<256x4xf32>
    %c0_3 = arith.constant 0 : index
    %c0_4 = arith.constant 0 : index
    %c0_5 = arith.constant 0 : index
    %5 = vector.load %arg3[%c0_3, %c0_4, %c0_5] : memref<16x4x128xf32, #tpu.memory_space<vmem>>, vector<1x4x128xf32>
    %6 = vector.shape_cast %5 : vector<1x4x128xf32> to vector<4x128xf32>
    %cst_6 = arith.constant dense<0.000000e+00> : vector<256x128xf32>
    %7 = tpu.matmul %4, %6, %cst_6 {dimension_numbers = #tpu.dot_dimension_numbers<[1], [0], [0], [1], [0, 0, 1, 1], [], []>} : vector<256x4xf32>, vector<4x128xf32>, vector<256x128xf32> -> vector<256x128xf32>
    %8 = arith.addf %2, %7 : vector<256x128xf32>
    %9 = vector.extract_strided_slice %1 {offsets = [0, 1, 0], sizes = [16, 16, 4], strides = [1, 1, 1]} : vector<19x19x4xf32> to vector<16x16x4xf32>
    %10 = vector.shape_cast %9 : vector<16x16x4xf32> to vector<256x4xf32>
    %c1 = arith.constant 1 : index
    %c0_7 = arith.constant 0 : index
    %c0_8 = arith.constant 0 : index
    %11 = vector.load %arg3[%c1, %c0_7, %c0_8] : memref<16x4x128xf32, #tpu.memory_space<vmem>>, vector<1x4x128xf32>
    %12 = vector.shape_cast %11 : vector<1x4x128xf32> to vector<4x128xf32>
    %cst_9 = arith.constant dense<0.000000e+00> : vector<256x128xf32>
    %13 = tpu.matmul %10, %12, %cst_9 {dimension_numbers = #tpu.dot_dimension_numbers<[1], [0], [0], [1], [0, 0, 1, 1], [], []>} : vector<256x4xf32>, vector<4x128xf32>, vector<256x128xf32> -> vector<256x128xf32>
    %14 = arith.addf %8, %13 : vector<256x128xf32>
    %15 = vector.extract_strided_slice %1 {offsets = [0, 2, 0], sizes = [16, 16, 4], strides = [1, 1, 1]} : vector<19x19x4xf32> to vector<16x16x4xf32>
    %16 = vector.shape_cast %15 : vector<16x16x4xf32> to vector<256x4xf32>
    %c2 = arith.constant 2 : index
    %c0_10 = arith.constant 0 : index
    %c0_11 = arith.constant 0 : index
    %17 = vector.load %arg3[%c2, %c0_10, %c0_11] : memref<16x4x128xf32, #tpu.memory_space<vmem>>, vector<1x4x128xf32>
    %18 = vector.shape_cast %17 : vector<1x4x128xf32> to vector<4x128xf32>
    %cst_12 = arith.constant dense<0.000000e+00> : vector<256x128xf32>
    %19 = tpu.matmul %16, %18, %cst_12 {dimension_numbers = #tpu.dot_dimension_numbers<[1], [0], [0], [1], [0, 0, 1, 1], [], []>} : vector<256x4xf32>, vector<4x128xf32>, vector<256x128xf32> -> vector<256x128xf32>
    %20 = arith.addf %14, %19 : vector<256x128xf32>
    %21 = vector.extract_strided_slice %1 {offsets = [0, 3, 0], sizes = [16, 16, 4], strides = [1, 1, 1]} : vector<19x19x4xf32> to vector<16x16x4xf32>
    %22 = vector.shape_cast %21 : vector<16x16x4xf32> to vector<256x4xf32>
    %c3 = arith.constant 3 : index
    %c0_13 = arith.constant 0 : index
    %c0_14 = arith.constant 0 : index
    %23 = vector.load %arg3[%c3, %c0_13, %c0_14] : memref<16x4x128xf32, #tpu.memory_space<vmem>>, vector<1x4x128xf32>
    %24 = vector.shape_cast %23 : vector<1x4x128xf32> to vector<4x128xf32>
    %cst_15 = arith.constant dense<0.000000e+00> : vector<256x128xf32>
    %25 = tpu.matmul %22, %24, %cst_15 {dimension_numbers = #tpu.dot_dimension_numbers<[1], [0], [0], [1], [0, 0, 1, 1], [], []>} : vector<256x4xf32>, vector<4x128xf32>, vector<256x128xf32> -> vector<256x128xf32>
    %26 = arith.addf %20, %25 : vector<256x128xf32>
    %27 = vector.extract_strided_slice %1 {offsets = [1, 0, 0], sizes = [16, 16, 4], strides = [1, 1, 1]} : vector<19x19x4xf32> to vector<16x16x4xf32>
    %28 = vector.shape_cast %27 : vector<16x16x4xf32> to vector<256x4xf32>
    %c4 = arith.constant 4 : index
    %c0_16 = arith.constant 0 : index
    %c0_17 = arith.constant 0 : index
    %29 = vector.load %arg3[%c4, %c0_16, %c0_17] : memref<16x4x128xf32, #tpu.memory_space<vmem>>, vector<1x4x128xf32>
    %30 = vector.shape_cast %29 : vector<1x4x128xf32> to vector<4x128xf32>
    %cst_18 = arith.constant dense<0.000000e+00> : vector<256x128xf32>
    %31 = tpu.matmul %28, %30, %cst_18 {dimension_numbers = #tpu.dot_dimension_numbers<[1], [0], [0], [1], [0, 0, 1, 1], [], []>} : vector<256x4xf32>, vector<4x128xf32>, vector<256x128xf32> -> vector<256x128xf32>
    %32 = arith.addf %26, %31 : vector<256x128xf32>
    %33 = vector.extract_strided_slice %1 {offsets = [1, 1, 0], sizes = [16, 16, 4], strides = [1, 1, 1]} : vector<19x19x4xf32> to vector<16x16x4xf32>
    %34 = vector.shape_cast %33 : vector<16x16x4xf32> to vector<256x4xf32>
    %c5 = arith.constant 5 : index
    %c0_19 = arith.constant 0 : index
    %c0_20 = arith.constant 0 : index
    %35 = vector.load %arg3[%c5, %c0_19, %c0_20] : memref<16x4x128xf32, #tpu.memory_space<vmem>>, vector<1x4x128xf32>
    %36 = vector.shape_cast %35 : vector<1x4x128xf32> to vector<4x128xf32>
    %cst_21 = arith.constant dense<0.000000e+00> : vector<256x128xf32>
    %37 = tpu.matmul %34, %36, %cst_21 {dimension_numbers = #tpu.dot_dimension_numbers<[1], [0], [0], [1], [0, 0, 1, 1], [], []>} : vector<256x4xf32>, vector<4x128xf32>, vector<256x128xf32> -> vector<256x128xf32>
    %38 = arith.addf %32, %37 : vector<256x128xf32>
    %39 = vector.extract_strided_slice %1 {offsets = [1, 2, 0], sizes = [16, 16, 4], strides = [1, 1, 1]} : vector<19x19x4xf32> to vector<16x16x4xf32>
    %40 = vector.shape_cast %39 : vector<16x16x4xf32> to vector<256x4xf32>
    %c6 = arith.constant 6 : index
    %c0_22 = arith.constant 0 : index
    %c0_23 = arith.constant 0 : index
    %41 = vector.load %arg3[%c6, %c0_22, %c0_23] : memref<16x4x128xf32, #tpu.memory_space<vmem>>, vector<1x4x128xf32>
    %42 = vector.shape_cast %41 : vector<1x4x128xf32> to vector<4x128xf32>
    %cst_24 = arith.constant dense<0.000000e+00> : vector<256x128xf32>
    %43 = tpu.matmul %40, %42, %cst_24 {dimension_numbers = #tpu.dot_dimension_numbers<[1], [0], [0], [1], [0, 0, 1, 1], [], []>} : vector<256x4xf32>, vector<4x128xf32>, vector<256x128xf32> -> vector<256x128xf32>
    %44 = arith.addf %38, %43 : vector<256x128xf32>
    %45 = vector.extract_strided_slice %1 {offsets = [1, 3, 0], sizes = [16, 16, 4], strides = [1, 1, 1]} : vector<19x19x4xf32> to vector<16x16x4xf32>
    %46 = vector.shape_cast %45 : vector<16x16x4xf32> to vector<256x4xf32>
    %c7 = arith.constant 7 : index
    %c0_25 = arith.constant 0 : index
    %c0_26 = arith.constant 0 : index
    %47 = vector.load %arg3[%c7, %c0_25, %c0_26] : memref<16x4x128xf32, #tpu.memory_space<vmem>>, vector<1x4x128xf32>
    %48 = vector.shape_cast %47 : vector<1x4x128xf32> to vector<4x128xf32>
    %cst_27 = arith.constant dense<0.000000e+00> : vector<256x128xf32>
    %49 = tpu.matmul %46, %48, %cst_27 {dimension_numbers = #tpu.dot_dimension_numbers<[1], [0], [0], [1], [0, 0, 1, 1], [], []>} : vector<256x4xf32>, vector<4x128xf32>, vector<256x128xf32> -> vector<256x128xf32>
    %50 = arith.addf %44, %49 : vector<256x128xf32>
    %51 = vector.extract_strided_slice %1 {offsets = [2, 0, 0], sizes = [16, 16, 4], strides = [1, 1, 1]} : vector<19x19x4xf32> to vector<16x16x4xf32>
    %52 = vector.shape_cast %51 : vector<16x16x4xf32> to vector<256x4xf32>
    %c8 = arith.constant 8 : index
    %c0_28 = arith.constant 0 : index
    %c0_29 = arith.constant 0 : index
    %53 = vector.load %arg3[%c8, %c0_28, %c0_29] : memref<16x4x128xf32, #tpu.memory_space<vmem>>, vector<1x4x128xf32>
    %54 = vector.shape_cast %53 : vector<1x4x128xf32> to vector<4x128xf32>
    %cst_30 = arith.constant dense<0.000000e+00> : vector<256x128xf32>
    %55 = tpu.matmul %52, %54, %cst_30 {dimension_numbers = #tpu.dot_dimension_numbers<[1], [0], [0], [1], [0, 0, 1, 1], [], []>} : vector<256x4xf32>, vector<4x128xf32>, vector<256x128xf32> -> vector<256x128xf32>
    %56 = arith.addf %50, %55 : vector<256x128xf32>
    %57 = vector.extract_strided_slice %1 {offsets = [2, 1, 0], sizes = [16, 16, 4], strides = [1, 1, 1]} : vector<19x19x4xf32> to vector<16x16x4xf32>
    %58 = vector.shape_cast %57 : vector<16x16x4xf32> to vector<256x4xf32>
    %c9 = arith.constant 9 : index
    %c0_31 = arith.constant 0 : index
    %c0_32 = arith.constant 0 : index
    %59 = vector.load %arg3[%c9, %c0_31, %c0_32] : memref<16x4x128xf32, #tpu.memory_space<vmem>>, vector<1x4x128xf32>
    %60 = vector.shape_cast %59 : vector<1x4x128xf32> to vector<4x128xf32>
    %cst_33 = arith.constant dense<0.000000e+00> : vector<256x128xf32>
    %61 = tpu.matmul %58, %60, %cst_33 {dimension_numbers = #tpu.dot_dimension_numbers<[1], [0], [0], [1], [0, 0, 1, 1], [], []>} : vector<256x4xf32>, vector<4x128xf32>, vector<256x128xf32> -> vector<256x128xf32>
    %62 = arith.addf %56, %61 : vector<256x128xf32>
    %63 = vector.extract_strided_slice %1 {offsets = [2, 2, 0], sizes = [16, 16, 4], strides = [1, 1, 1]} : vector<19x19x4xf32> to vector<16x16x4xf32>
    %64 = vector.shape_cast %63 : vector<16x16x4xf32> to vector<256x4xf32>
    %c10 = arith.constant 10 : index
    %c0_34 = arith.constant 0 : index
    %c0_35 = arith.constant 0 : index
    %65 = vector.load %arg3[%c10, %c0_34, %c0_35] : memref<16x4x128xf32, #tpu.memory_space<vmem>>, vector<1x4x128xf32>
    %66 = vector.shape_cast %65 : vector<1x4x128xf32> to vector<4x128xf32>
    %cst_36 = arith.constant dense<0.000000e+00> : vector<256x128xf32>
    %67 = tpu.matmul %64, %66, %cst_36 {dimension_numbers = #tpu.dot_dimension_numbers<[1], [0], [0], [1], [0, 0, 1, 1], [], []>} : vector<256x4xf32>, vector<4x128xf32>, vector<256x128xf32> -> vector<256x128xf32>
    %68 = arith.addf %62, %67 : vector<256x128xf32>
    %69 = vector.extract_strided_slice %1 {offsets = [2, 3, 0], sizes = [16, 16, 4], strides = [1, 1, 1]} : vector<19x19x4xf32> to vector<16x16x4xf32>
    %70 = vector.shape_cast %69 : vector<16x16x4xf32> to vector<256x4xf32>
    %c11 = arith.constant 11 : index
    %c0_37 = arith.constant 0 : index
    %c0_38 = arith.constant 0 : index
    %71 = vector.load %arg3[%c11, %c0_37, %c0_38] : memref<16x4x128xf32, #tpu.memory_space<vmem>>, vector<1x4x128xf32>
    %72 = vector.shape_cast %71 : vector<1x4x128xf32> to vector<4x128xf32>
    %cst_39 = arith.constant dense<0.000000e+00> : vector<256x128xf32>
    %73 = tpu.matmul %70, %72, %cst_39 {dimension_numbers = #tpu.dot_dimension_numbers<[1], [0], [0], [1], [0, 0, 1, 1], [], []>} : vector<256x4xf32>, vector<4x128xf32>, vector<256x128xf32> -> vector<256x128xf32>
    %74 = arith.addf %68, %73 : vector<256x128xf32>
    %75 = vector.extract_strided_slice %1 {offsets = [3, 0, 0], sizes = [16, 16, 4], strides = [1, 1, 1]} : vector<19x19x4xf32> to vector<16x16x4xf32>
    %76 = vector.shape_cast %75 : vector<16x16x4xf32> to vector<256x4xf32>
    %c12 = arith.constant 12 : index
    %c0_40 = arith.constant 0 : index
    %c0_41 = arith.constant 0 : index
    %77 = vector.load %arg3[%c12, %c0_40, %c0_41] : memref<16x4x128xf32, #tpu.memory_space<vmem>>, vector<1x4x128xf32>
    %78 = vector.shape_cast %77 : vector<1x4x128xf32> to vector<4x128xf32>
    %cst_42 = arith.constant dense<0.000000e+00> : vector<256x128xf32>
    %79 = tpu.matmul %76, %78, %cst_42 {dimension_numbers = #tpu.dot_dimension_numbers<[1], [0], [0], [1], [0, 0, 1, 1], [], []>} : vector<256x4xf32>, vector<4x128xf32>, vector<256x128xf32> -> vector<256x128xf32>
    %80 = arith.addf %74, %79 : vector<256x128xf32>
    %81 = vector.extract_strided_slice %1 {offsets = [3, 1, 0], sizes = [16, 16, 4], strides = [1, 1, 1]} : vector<19x19x4xf32> to vector<16x16x4xf32>
    %82 = vector.shape_cast %81 : vector<16x16x4xf32> to vector<256x4xf32>
    %c13 = arith.constant 13 : index
    %c0_43 = arith.constant 0 : index
    %c0_44 = arith.constant 0 : index
    %83 = vector.load %arg3[%c13, %c0_43, %c0_44] : memref<16x4x128xf32, #tpu.memory_space<vmem>>, vector<1x4x128xf32>
    %84 = vector.shape_cast %83 : vector<1x4x128xf32> to vector<4x128xf32>
    %cst_45 = arith.constant dense<0.000000e+00> : vector<256x128xf32>
    %85 = tpu.matmul %82, %84, %cst_45 {dimension_numbers = #tpu.dot_dimension_numbers<[1], [0], [0], [1], [0, 0, 1, 1], [], []>} : vector<256x4xf32>, vector<4x128xf32>, vector<256x128xf32> -> vector<256x128xf32>
    %86 = arith.addf %80, %85 : vector<256x128xf32>
    %87 = vector.extract_strided_slice %1 {offsets = [3, 2, 0], sizes = [16, 16, 4], strides = [1, 1, 1]} : vector<19x19x4xf32> to vector<16x16x4xf32>
    %88 = vector.shape_cast %87 : vector<16x16x4xf32> to vector<256x4xf32>
    %c14 = arith.constant 14 : index
    %c0_46 = arith.constant 0 : index
    %c0_47 = arith.constant 0 : index
    %89 = vector.load %arg3[%c14, %c0_46, %c0_47] : memref<16x4x128xf32, #tpu.memory_space<vmem>>, vector<1x4x128xf32>
    %90 = vector.shape_cast %89 : vector<1x4x128xf32> to vector<4x128xf32>
    %cst_48 = arith.constant dense<0.000000e+00> : vector<256x128xf32>
    %91 = tpu.matmul %88, %90, %cst_48 {dimension_numbers = #tpu.dot_dimension_numbers<[1], [0], [0], [1], [0, 0, 1, 1], [], []>} : vector<256x4xf32>, vector<4x128xf32>, vector<256x128xf32> -> vector<256x128xf32>
    %92 = arith.addf %86, %91 : vector<256x128xf32>
    %93 = vector.extract_strided_slice %1 {offsets = [3, 3, 0], sizes = [16, 16, 4], strides = [1, 1, 1]} : vector<19x19x4xf32> to vector<16x16x4xf32>
    %94 = vector.shape_cast %93 : vector<16x16x4xf32> to vector<256x4xf32>
    %c15 = arith.constant 15 : index
    %c0_49 = arith.constant 0 : index
    %c0_50 = arith.constant 0 : index
    %95 = vector.load %arg3[%c15, %c0_49, %c0_50] : memref<16x4x128xf32, #tpu.memory_space<vmem>>, vector<1x4x128xf32>
    %96 = vector.shape_cast %95 : vector<1x4x128xf32> to vector<4x128xf32>
    %cst_51 = arith.constant dense<0.000000e+00> : vector<256x128xf32>
    %97 = tpu.matmul %94, %96, %cst_51 {dimension_numbers = #tpu.dot_dimension_numbers<[1], [0], [0], [1], [0, 0, 1, 1], [], []>} : vector<256x4xf32>, vector<4x128xf32>, vector<256x128xf32> -> vector<256x128xf32>
    %98 = arith.addf %92, %97 : vector<256x128xf32>
    %c0_i32 = arith.constant 0 : i32
    %99 = arith.cmpi eq, %arg0, %c0_i32 : i32
    %c0_i32_52 = arith.constant 0 : i32
    %100 = arith.cmpi eq, %arg1, %c0_i32_52 : i32
    %101 = arith.andi %99, %100 : i1
    %102 = arith.extui %101 : i1 to i32
    %c0_i32_53 = arith.constant 0 : i32
    %103 = arith.cmpi ne, %102, %c0_i32_53 : i32
    scf.if %103 {
      %cst_57 = arith.constant 0.000000e+00 : f32
      %110 = vector.broadcast %cst_57 : f32 to vector<1x128xf32>
      %c0_58 = arith.constant 0 : index
      %c0_59 = arith.constant 0 : index
      %111 = vector.load %arg6[%c0_58, %c0_59] : memref<1x128xf32, #tpu.memory_space<vmem>>, vector<1x128xf32>
      tpu.vector_store %arg6[%c0_58, %c0_59], %110 {strides = array<i32>} : memref<1x128xf32, #tpu.memory_space<vmem>>, vector<1x128xf32>,
      %cst_60 = arith.constant 0.000000e+00 : f32
      %112 = vector.broadcast %cst_60 : f32 to vector<1x128xf32>
      %c0_61 = arith.constant 0 : index
      %c0_62 = arith.constant 0 : index
      %113 = vector.load %arg7[%c0_61, %c0_62] : memref<1x128xf32, #tpu.memory_space<vmem>>, vector<1x128xf32>
      tpu.vector_store %arg7[%c0_61, %c0_62], %112 {strides = array<i32>} : memref<1x128xf32, #tpu.memory_space<vmem>>, vector<1x128xf32>,
    } else {
    }
    %c0_i32_54 = arith.constant 0 : i32
    %104 = arith.cmpi eq, %arg0, %c0_i32_54 : i32
    %105 = arith.extui %104 : i1 to i32
    %c0_i32_55 = arith.constant 0 : i32
    %106 = arith.cmpi ne, %105, %c0_i32_55 : i32
    scf.if %106 {
      %c0_57 = arith.constant 0 : index
      %c0_58 = arith.constant 0 : index
      %110 = vector.load %arg6[%c0_57, %c0_58] : memref<1x128xf32, #tpu.memory_space<vmem>>, vector<1x128xf32>
      %cst_59 = arith.constant dense<0.000000e+00> : vector<128xf32>
      %111 = vector.multi_reduction <add>, %98, %cst_59 [0] : vector<256x128xf32> to vector<128xf32>
      %112 = vector.shape_cast %111 : vector<128xf32> to vector<1x128xf32>
      %113 = arith.addf %110, %112 : vector<1x128xf32>
      %c0_60 = arith.constant 0 : index
      %c0_61 = arith.constant 0 : index
      %114 = vector.load %arg6[%c0_60, %c0_61] : memref<1x128xf32, #tpu.memory_space<vmem>>, vector<1x128xf32>
      tpu.vector_store %arg6[%c0_60, %c0_61], %113 {strides = array<i32>} : memref<1x128xf32, #tpu.memory_space<vmem>>, vector<1x128xf32>,
      %c0_62 = arith.constant 0 : index
      %c0_63 = arith.constant 0 : index
      %115 = vector.load %arg7[%c0_62, %c0_63] : memref<1x128xf32, #tpu.memory_space<vmem>>, vector<1x128xf32>
      %116 = arith.mulf %98, %98 : vector<256x128xf32>
      %cst_64 = arith.constant dense<0.000000e+00> : vector<128xf32>
      %117 = vector.multi_reduction <add>, %116, %cst_64 [0] : vector<256x128xf32> to vector<128xf32>
      %118 = vector.shape_cast %117 : vector<128xf32> to vector<1x128xf32>
      %119 = arith.addf %115, %118 : vector<1x128xf32>
      %c0_65 = arith.constant 0 : index
      %c0_66 = arith.constant 0 : index
      %120 = vector.load %arg7[%c0_65, %c0_66] : memref<1x128xf32, #tpu.memory_space<vmem>>, vector<1x128xf32>
      tpu.vector_store %arg7[%c0_65, %c0_66], %119 {strides = array<i32>} : memref<1x128xf32, #tpu.memory_space<vmem>>, vector<1x128xf32>,
    } else {
    }
    %c1_i32 = arith.constant 1 : i32
    %107 = arith.cmpi eq, %arg0, %c1_i32 : i32
    %108 = arith.extui %107 : i1 to i32
    %c0_i32_56 = arith.constant 0 : i32
    %109 = arith.cmpi ne, %108, %c0_i32_56 : i32
    scf.if %109 {
      %c0_57 = arith.constant 0 : index
      %c0_58 = arith.constant 0 : index
      %110 = vector.load %arg6[%c0_57, %c0_58] : memref<1x128xf32, #tpu.memory_space<vmem>>, vector<1x128xf32>
      %cst_59 = arith.constant 0.001953125 : f32
      %111 = vector.broadcast %cst_59 : f32 to vector<1x128xf32>
      %112 = arith.mulf %110, %111 : vector<1x128xf32>
      %c0_60 = arith.constant 0 : index
      %c0_61 = arith.constant 0 : index
      %113 = vector.load %arg7[%c0_60, %c0_61] : memref<1x128xf32, #tpu.memory_space<vmem>>, vector<1x128xf32>
      %cst_62 = arith.constant 0.001953125 : f32
      %114 = vector.broadcast %cst_62 : f32 to vector<1x128xf32>
      %115 = arith.mulf %113, %114 : vector<1x128xf32>
      %116 = arith.mulf %112, %112 : vector<1x128xf32>
      %117 = arith.subf %115, %116 : vector<1x128xf32>
      %cst_63 = arith.constant 0.000000e+00 : f32
      %118 = vector.broadcast %cst_63 : f32 to vector<1x128xf32>
      %119 = arith.maximumf %117, %118 : vector<1x128xf32>
      %c0_64 = arith.constant 0 : index
      %c0_65 = arith.constant 0 : index
      %120 = vector.load %arg4[%c0_64, %c0_65] : memref<2x128xf32, #tpu.memory_space<vmem>>, vector<1x128xf32>
      %cst_66 = arith.constant 9.99999974E-6 : f32
      %121 = vector.broadcast %cst_66 : f32 to vector<1x128xf32>
      %122 = arith.addf %119, %121 : vector<1x128xf32>
      %123 = math.rsqrt %122 : vector<1x128xf32>
      %124 = arith.mulf %120, %123 : vector<1x128xf32>
      %c1_67 = arith.constant 1 : index
      %c0_68 = arith.constant 0 : index
      %125 = vector.load %arg4[%c1_67, %c0_68] : memref<2x128xf32, #tpu.memory_space<vmem>>, vector<1x128xf32>
      %126 = arith.mulf %112, %124 : vector<1x128xf32>
      %127 = arith.subf %125, %126 : vector<1x128xf32>
      %128 = vector.broadcast %124 : vector<1x128xf32> to vector<256x128xf32>
      %129 = arith.mulf %98, %128 : vector<256x128xf32>
      %130 = vector.broadcast %127 : vector<1x128xf32> to vector<256x128xf32>
      %131 = arith.addf %129, %130 : vector<256x128xf32>
      %cst_69 = arith.constant 0.000000e+00 : f32
      %132 = vector.broadcast %cst_69 : f32 to vector<256x128xf32>
      %133 = arith.cmpf oge, %131, %132 : vector<256x128xf32>
      %cst_70 = arith.constant 2.000000e-01 : f32
      %134 = vector.broadcast %cst_70 : f32 to vector<256x128xf32>
      %135 = arith.mulf %134, %131 : vector<256x128xf32>
      %136 = arith.select %133, %131, %135 : vector<256x128xi1>, vector<256x128xf32>
      %137 = tpu.transpose %136, [1, 0] : vector<256x128xf32> -> vector<128x256xf32>
      %138 = vector.extract_strided_slice %137 {offsets = [0, 0], sizes = [8, 256], strides = [1, 1]} : vector<128x256xf32> to vector<8x256xf32>
      %c0_71 = arith.constant 0 : index
      %c0_72 = arith.constant 0 : index
      %c0_73 = arith.constant 0 : index
      %139 = vector.load %arg5[%c0_71, %c0_72, %c0_73] : memref<1x8x256xf32, #tpu.memory_space<vmem>>, vector<1x8x256xf32>
      %140 = vector.shape_cast %139 : vector<1x8x256xf32> to vector<8x256xf32>
      %141 = vector.shape_cast %138 : vector<8x256xf32> to vector<1x8x256xf32>
      tpu.vector_store %arg5[%c0_71, %c0_72, %c0_73], %141 {strides = array<i32>} : memref<1x8x256xf32, #tpu.memory_space<vmem>>, vector<1x8x256xf32>,
    } else {
    }
    return
  }
  func.func @transform_0(%arg0: i32, %arg1: i32) -> (i32, i32, i32, i32) {
    %c0_i32 = arith.constant 0 : i32
    %c0_i32_0 = arith.constant 0 : i32
    %c0_i32_1 = arith.constant 0 : i32
    %c0_i32_2 = arith.constant 0 : i32
    return %arg1, %c0_i32, %c0_i32_0, %c0_i32_1 : i32, i32, i32, i32
  }
  func.func @transform_1(%arg0: i32, %arg1: i32) -> (i32, i32, i32) {
    %c0_i32 = arith.constant 0 : i32
    %c0_i32_0 = arith.constant 0 : i32
    %c0_i32_1 = arith.constant 0 : i32
    %c0_i32_2 = arith.constant 0 : i32
    return %c0_i32, %c0_i32_0, %c0_i32_1 : i32, i32, i32
  }
  func.func @transform_2(%arg0: i32, %arg1: i32) -> (i32, i32) {
    %c0_i32 = arith.constant 0 : i32
    %c0_i32_0 = arith.constant 0 : i32
    %c0_i32_1 = arith.constant 0 : i32
    return %c0_i32, %c0_i32_0 : i32, i32
  }
  func.func @transform_3(%arg0: i32, %arg1: i32) -> (i32, i32, i32) {
    %0 = arith.muli %arg0, %arg1 : i32
    %c0_i32 = arith.constant 0 : i32
    %c0_i32_0 = arith.constant 0 : i32
    %c0_i32_1 = arith.constant 0 : i32
    return %0, %c0_i32, %c0_i32_0 : i32, i32, i32
  }
}

</mosaic_0001>

<llo_original>
// kernel: tpu_custom_call.1
$region0: #{tpu_custom_call.1}
  #allocation0 [shape = 'u32[]', space=smem, size = 0x4, offset = 0x4, fixed_abs, tag = 'smem constant byte address 0x4 - core index']
  #allocation1 [shape = 'u32[144,128]{1,0:T(1,128)}', space=vmem, size = 0x12000, scoped, tag = 'internal scratch']
  #allocation2 [shape = 'f32[1,128]{1,0:T(1,128)}', space=vmem, size = 0x200, scoped, tag = 'scratch operand']
  #allocation3 [shape = 'f32[1,128]{1,0:T(1,128)}', space=vmem, size = 0x200, scoped, tag = 'scratch operand']
  %s0 = inlined_call_operand.vmem [shape: f32[2,19,19,4], index: 0, kind: input, shape index: {}]
  %s1 = inlined_call_operand.vmem [shape: f32[16,4,128], index: 1, kind: input, shape index: {}]
  %s2 = inlined_call_operand.vmem [shape: f32[2,128], index: 2, kind: input, shape index: {}]
  %s3 = inlined_call_operand.hbm [shape: f32[2,8,256], index: 3, kind: output, shape index: {}]
  %s4 = sld [smem:[#allocation0]]
  $region57: #{tpu_custom_call.1} parent=0
    _
  %s6 = ssub.s32 1, %s4
  %s7 = scalar_select 0, %s6, %s4
  $region1: #{tpu_custom_call.1} parent=0
    #allocation4 [shape = 'u8[16384]{0}', space=vmem, size = 0x4000, scoped, tag = 'output window, operand 0']
    #allocation5 [shape = 's32[2]{0}', space=sflag, size = 0x8, scoped, tag = 'scoped memory for tpu_custom_call.1']
    %8 = vsyncpa [#allocation5], 0
    %s9 = scalar_lea.sflag [#allocation5], 1
    %10 = vsyncpa %s9, 0
    loop: start=0, step=1, limit=6
    $region2: #{tpu_custom_call.1} parent=1 // loop_pre_header
      _
    $region3: #{tpu_custom_call.1} parent=1 // loop_header
      %s12 = sphi 0, %s16
      %p13 = scmp.ge.s32.totalorder %s12, 6
      %s19 = sphi 0, %s31
      %s20 = sphi 0, %s27
      %s21 = sphi 0, %s19
      %s22 = sphi 0, %s20
      %s23 = sphi 0, %s21
      %s24 = sphi 0, %s22
      %s34 = sphi 0, %s36
      %s37 = sphi 0, %s34
      %s38 = sphi 0, %s37
      %s54 = sphi 0, %s38
      %s58 = sphi 0, %s58
      %s60 = sphi 0, %s58
      %s61 = sphi 0, %s60
      %s75 = sphi 0, %s61
      %s79 = sphi 0, %s79
      %s81 = sphi 0, %s79
      %s82 = sphi 0, %s81
      %s96 = sphi 0, %s82
      %s104 = sphi 0, %s106
      %s107 = sphi 0, %s104
      %s108 = sphi 0, %s107
      %s124 = sphi 0, %s108
    $region4: #{tpu_custom_call.1} parent=1 // loop_header_branch
      %15 = sbr.rel (%p13) target = $region8
    $region5: #{tpu_custom_call.1} parent=1 // loop_body
      %s17 = ssub.s32 %s12, 1
      %s18 = ssub.s32 %s12, 2
      %s25 = sadd.s32 1, %s20
      %p26 = scmp.ge.s32.totalorder %s25, 2
      %s27 = scalar_select %p26, 0, %s25
      %s28 = sadd.s32 1, %s19
      %s29 = scalar_select %p26, %s28, %s19
      %p30 = scmp.ge.s32.totalorder %s29, 2
      %s31 = scalar_select %p30, 0, %s29
      %s32 = ssub.s32 %s20, %s27
      %p33 = scmp.eq.s32.totalorder %s32, 0
      %s35 = sadd.s32 %s34, 1
      %s36 = scalar_select %p33, %s34, %s35
      %p39 = pneg %p33
      %p40 = scmp.eq.s32.totalorder %s12, 3
      %p41 = por %p39, %p40
      %p42 = scmp.ne.s32.totalorder %s34, %s37
      %p43 = scmp.eq.s32.totalorder %s12, 0
      %p44 = por %p42, %p43
      %p45 = scmp.ne.s32.totalorder %s34, %s37
      %p46 = scmp.eq.s32.totalorder %s17, 3
      %p47 = por %p45, %p46
      %p48 = scmp.ne.s32.totalorder %s37, %s38
      %p49 = scmp.eq.s32.totalorder %s17, 0
      %p50 = por %p48, %p49
      %p51 = scmp.ne.s32.totalorder %s37, %s38
      %p52 = scmp.eq.s32.totalorder %s18, 3
      %p53 = por %p51, %p52
      %p55 = scmp.ne.s32.totalorder %s38, %s54
      %p56 = scmp.eq.s32.totalorder %s18, 0
      %p57 = por %p55, %p56
      %s59 = sadd.s32 %s58, 1
      %p62 = scmp.eq.s32.totalorder %s12, 3
      %p63 = scmp.ne.s32.totalorder %s58, %s60
      %p64 = scmp.eq.s32.totalorder %s12, 0
      %p65 = por %p63, %p64
      %p66 = scmp.ne.s32.totalorder %s58, %s60
      %p67 = scmp.eq.s32.totalorder %s17, 3
      %p68 = por %p66, %p67
      %p69 = scmp.ne.s32.totalorder %s60, %s61
      %p70 = scmp.eq.s32.totalorder %s17, 0
      %p71 = por %p69, %p70
      %p72 = scmp.ne.s32.totalorder %s60, %s61
      %p73 = scmp.eq.s32.totalorder %s18, 3
      %p74 = por %p72, %p73
      %p76 = scmp.ne.s32.totalorder %s61, %s75
      %p77 = scmp.eq.s32.totalorder %s18, 0
      %p78 = por %p76, %p77
      %s80 = sadd.s32 %s79, 1
      %p83 = scmp.eq.s32.totalorder %s12, 3
      %p84 = scmp.ne.s32.totalorder %s79, %s81
      %p85 = scmp.eq.s32.totalorder %s12, 0
      %p86 = por %p84, %p85
      %p87 = scmp.ne.s32.totalorder %s79, %s81
      %p88 = scmp.eq.s32.totalorder %s17, 3
      %p89 = por %p87, %p88
      %p90 = scmp.ne.s32.totalorder %s81, %s82
      %p91 = scmp.eq.s32.totalorder %s17, 0
      %p92 = por %p90, %p91
      %p93 = scmp.ne.s32.totalorder %s81, %s82
      %p94 = scmp.eq.s32.totalorder %s18, 3
      %p95 = por %p93, %p94
      %p97 = scmp.ne.s32.totalorder %s82, %s96
      %p98 = scmp.eq.s32.totalorder %s18, 0
      %p99 = por %p97, %p98
      %s100 = smul.u32 %s19, %s20
      %s101 = smul.u32 %s31, %s27
      %s102 = ssub.s32 %s100, %s101
      %p103 = scmp.eq.s32.totalorder %s102, 0
      %s105 = sadd.s32 %s104, 1
      %s106 = scalar_select %p103, %s104, %s105
      %p109 = pneg %p103
      %p110 = scmp.eq.s32.totalorder %s12, 3
      %p111 = por %p109, %p110
      %p112 = scmp.ne.s32.totalorder %s104, %s107
      %p113 = scmp.eq.s32.totalorder %s12, 0
      %p114 = por %p112, %p113
      %p115 = scmp.ne.s32.totalorder %s104, %s107
      %p116 = scmp.eq.s32.totalorder %s17, 3
      %p117 = por %p115, %p116
      %p118 = scmp.ne.s32.totalorder %s107, %s108
      %p119 = scmp.eq.s32.totalorder %s17, 0
      %p120 = por %p118, %p119
      %p121 = scmp.ne.s32.totalorder %s107, %s108
      %p122 = scmp.eq.s32.totalorder %s18, 3
      %p123 = por %p121, %p122
      %p125 = scmp.ne.s32.totalorder %s108, %s124
      %p126 = scmp.eq.s32.totalorder %s18, 0
      %p127 = por %p125, %p126
      %p128 = scmp.le.s32.totalorder 1, %s12
      %p129 = scmp.lt.s32.totalorder %s12, 5
      %p130 = pnand %p128, %p129
      %p131 = pneg %p130
      // Predicated region
      $region9: #{tpu_custom_call.1} parent=5 // pred_check
        _
      $region10: #{tpu_custom_call.1} parent=5 // pred_check_branch
        %133 = sbr.rel (%p130) target = $region12
      $region11: #{tpu_custom_call.1} parent=5 // pred_region
        %s134 = ssub.s32 %s12, 1
        // Predicated region
        $region13: #{tpu_custom_call.1} parent=11 // pred_check
          %p135 = pneg %p71
        $region14: #{tpu_custom_call.1} parent=11 // pred_check_branch
          %137 = sbr.rel (%p135) target = $region16
        $region15: #{tpu_custom_call.1} parent=11 // pred_region
          _
        $region16: #{tpu_custom_call.1} parent=11 // pred_fallthru
          _
        // Predicated region
        $region17: #{tpu_custom_call.1} parent=11 // pred_check
          %p138 = pneg %p92
        $region18: #{tpu_custom_call.1} parent=11 // pred_check_branch
          %140 = sbr.rel (%p138) target = $region20
        $region19: #{tpu_custom_call.1} parent=11 // pred_region
          _
        $region20: #{tpu_custom_call.1} parent=11 // pred_fallthru
          _
      $region12: #{tpu_custom_call.1} parent=5 // pred_fallthru
        _
      %p141 = scmp.lt.s32.totalorder %s12, 4
      // Predicated region
      $region21: #{tpu_custom_call.1} parent=5 // pred_check
        %p142 = pneg %p141
      $region22: #{tpu_custom_call.1} parent=5 // pred_check_branch
        %144 = sbr.rel (%p142) target = $region24
      $region23: #{tpu_custom_call.1} parent=5 // pred_region
        // Predicated region
        $region25: #{tpu_custom_call.1} parent=23 // pred_check
          %p145 = pneg %p44
        $region26: #{tpu_custom_call.1} parent=23 // pred_check_branch
          %147 = sbr.rel (%p145) target = $region28
        $region27: #{tpu_custom_call.1} parent=23 // pred_region
          %p148 = scmp.lt.s32.totalorder %s20, 1
          %s149 = scalar_select %p148, %s20, 1
          %s150 = smul.addr %s149, 57
          %s151 = smul.addr %s150, 8
          %s152 = scalar_lea.vmem %s0, %s151
        $region28: #{tpu_custom_call.1} parent=23 // pred_fallthru
          _
      $region24: #{tpu_custom_call.1} parent=5 // pred_fallthru
        _
      %p153 = scmp.le.s32.totalorder 1, %s12
      %p154 = scmp.lt.s32.totalorder %s12, 5
      %p155 = pnand %p153, %p154
      %p156 = pneg %p155
      // Predicated region
      $region29: #{tpu_custom_call.1} parent=5 // pred_check
        _
      $region30: #{tpu_custom_call.1} parent=5 // pred_check_branch
        %158 = sbr.rel (%p155) target = $region32
      $region31: #{tpu_custom_call.1} parent=5 // pred_region
        %s159 = ssub.s32 %s12, 1
        %p160 = scmp.lt.s32.totalorder %s22, 1
        %s161 = scalar_select %p160, %s22, 1
        %s162 = smul.addr %s161, 57
        %s163 = smul.addr %s162, 8
        %s164 = scalar_lea.vmem %s0, %s163
        %p165 = pneg %p50
        %p166 = pneg %p47
        %p167 = pneg %p71
        %p168 = pneg %p68
        %p169 = pneg %p92
        %p170 = pneg %p89
        %p171 = pneg %p120
        %p172 = pneg %p117
        %s173 = sand.u32 %s107, 1
        %s174 = scalar_lea.sflag [#allocation5], %s173
        %s175 = sand.u32 %s107, 1
        %s176 = smul.addr %s175, 16
        %s177 = scalar_lea.vmem [#allocation4], %s176
        %p178 = scmp.lt.s32.totalorder %s22, 1
        %s179 = scalar_select %p178, %s22, 1
        %s180 = smul.addr %s179, 57
        %s181 = smul.addr %s180, 8
        %s182 = scalar_lea.vmem %s0, %s181
        %s183 = smul.u32 %s21, %s22
        %v184 = vld [vmem:[%s182] sm:$0xff]
        %v185 = vld [vmem:[%s182 + $0x8] sm:$0xff]
        %v186 = vld [vmem:[%s182 + $0x10] sm:$0x7]
        %v187 = vld [vmem:[%s182 + $0x18] sm:$0xff]
        %v188 = vld [vmem:[%s182 + $0x20] sm:$0xff]
        %v189 = vld [vmem:[%s182 + $0x28] sm:$0x7]
        %v190 = vld [vmem:[%s182 + $0x30] sm:$0xff]
        %v191 = vld [vmem:[%s182 + $0x38] sm:$0xff]
        %v192 = vld [vmem:[%s182 + $0x40] sm:$0x7]
        %v193 = vld [vmem:[%s182 + $0x48] sm:$0xff]
        %v194 = vld [vmem:[%s182 + $0x50] sm:$0xff]
        %v195 = vld [vmem:[%s182 + $0x58] sm:$0x7]
        %v196 = vld [vmem:[%s182 + $0x60] sm:$0xff]
        %v197 = vld [vmem:[%s182 + $0x68] sm:$0xff]
        %v198 = vld [vmem:[%s182 + $0x70] sm:$0x7]
        %v199 = vld [vmem:[%s182 + $0x78] sm:$0xff]
        %v200 = vld [vmem:[%s182 + $0x80] sm:$0xff]
        %v201 = vld [vmem:[%s182 + $0x88] sm:$0x7]
        %v202 = vld [vmem:[%s182 + $0x90] sm:$0xff]
        %v203 = vld [vmem:[%s182 + $0x98] sm:$0xff]
        %v204 = vld [vmem:[%s182 + $0xa0] sm:$0x7]
        %v205 = vld [vmem:[%s182 + $0xa8] sm:$0xff]
        %v206 = vld [vmem:[%s182 + $0xb0] sm:$0xff]
        %v207 = vld [vmem:[%s182 + $0xb8] sm:$0x7]
        %v208 = vld [vmem:[%s182 + $0xc0] sm:$0xff]
        %v209 = vld [vmem:[%s182 + $0xc8] sm:$0xff]
        %v210 = vld [vmem:[%s182 + $0xd0] sm:$0x7]
        %v211 = vld [vmem:[%s182 + $0xd8] sm:$0xff]
        %v212 = vld [vmem:[%s182 + $0xe0] sm:$0xff]
        %v213 = vld [vmem:[%s182 + $0xe8] sm:$0x7]
        %v214 = vld [vmem:[%s182 + $0xf0] sm:$0xff]
        %v215 = vld [vmem:[%s182 + $0xf8] sm:$0xff]
        %v216 = vld [vmem:[%s182 + $0x100] sm:$0x7]
        %v217 = vld [vmem:[%s182 + $0x108] sm:$0xff]
        %v218 = vld [vmem:[%s182 + $0x110] sm:$0xff]
        %v219 = vld [vmem:[%s182 + $0x118] sm:$0x7]
        %v220 = vld [vmem:[%s182 + $0x120] sm:$0xff]
        %v221 = vld [vmem:[%s182 + $0x128] sm:$0xff]
        %v222 = vld [vmem:[%s182 + $0x130] sm:$0x7]
        %v223 = vld [vmem:[%s182 + $0x138] sm:$0xff]
        %v224 = vld [vmem:[%s182 + $0x140] sm:$0xff]
        %v225 = vld [vmem:[%s182 + $0x148] sm:$0x7]
        %v226 = vld [vmem:[%s182 + $0x150] sm:$0xff]
        %v227 = vld [vmem:[%s182 + $0x158] sm:$0xff]
        %v228 = vld [vmem:[%s182 + $0x160] sm:$0x7]
        %v229 = vld [vmem:[%s182 + $0x168] sm:$0xff]
        %v230 = vld [vmem:[%s182 + $0x170] sm:$0xff]
        %v231 = vld [vmem:[%s182 + $0x178] sm:$0x7]
        %v232 = vld [vmem:[%s182 + $0x180] sm:$0xff]
        %v233 = vld [vmem:[%s182 + $0x188] sm:$0xff]
        %v234 = vld [vmem:[%s182 + $0x190] sm:$0x7]
        %v235 = vld [vmem:[%s182 + $0x198] sm:$0xff]
        %v236 = vld [vmem:[%s182 + $0x1a0] sm:$0xff]
        %v237 = vld [vmem:[%s182 + $0x1a8] sm:$0x7]
        %v238 = vld [vmem:[%s182 + $0x1b0] sm:$0xff]
        %v239 = vld [vmem:[%s182 + $0x1b8] sm:$0xff]
        %v240 = vld [vmem:[%s182 + $0x1c0] sm:$0x7]
        %v241 = vld [vmem:[%s1] sm:$0xf]
        %vm290 = vcmask 1046528
        %v291 = vrot.slane %v184, 1
        %v292 = vrot.slane %v185, 1
        %v293 = vsel %vm290, %v291, %v292
        %v294 = vrot.slane %v186, 1
        %v295 = vsel %vm290, %v292, %v294
        %v296 = vrot.slane %v187, 1
        %v297 = vrot.slane %v188, 1
        %v298 = vsel %vm290, %v296, %v297
        %v299 = vrot.slane %v189, 1
        %v300 = vsel %vm290, %v297, %v299
        %v301 = vrot.slane %v190, 1
        %v302 = vrot.slane %v191, 1
        %v303 = vsel %vm290, %v301, %v302
        %v304 = vrot.slane %v192, 1
        %v305 = vsel %vm290, %v302, %v304
        %v306 = vrot.slane %v193, 1
        %v307 = vrot.slane %v194, 1
        %v308 = vsel %vm290, %v306, %v307
        %v309 = vrot.slane %v195, 1
        %v310 = vsel %vm290, %v307, %v309
        %v311 = vrot.slane %v196, 1
        %v312 = vrot.slane %v197, 1
        %v313 = vsel %vm290, %v311, %v312
        %v314 = vrot.slane %v198, 1
        %v315 = vsel %vm290, %v312, %v314
        %v316 = vrot.slane %v199, 1
        %v317 = vrot.slane %v200, 1
        %v318 = vsel %vm290, %v316, %v317
        %v319 = vrot.slane %v201, 1
        %v320 = vsel %vm290, %v317, %v319
        %v321 = vrot.slane %v202, 1
        %v322 = vrot.slane %v203, 1
        %v323 = vsel %vm290, %v321, %v322
        %v324 = vrot.slane %v204, 1
        %v325 = vsel %vm290, %v322, %v324
        %v326 = vrot.slane %v205, 1
        %v327 = vrot.slane %v206, 1
        %v328 = vsel %vm290, %v326, %v327
        %v329 = vrot.slane %v207, 1
        %v330 = vsel %vm290, %v327, %v329
        %v331 = vrot.slane %v208, 1
        %v332 = vrot.slane %v209, 1
        %v333 = vsel %vm290, %v331, %v332
        %v334 = vrot.slane %v210, 1
        %v335 = vsel %vm290, %v332, %v334
        %v336 = vrot.slane %v211, 1
        %v337 = vrot.slane %v212, 1
        %v338 = vsel %vm290, %v336, %v337
        %v339 = vrot.slane %v213, 1
        %v340 = vsel %vm290, %v337, %v339
        %v341 = vrot.slane %v214, 1
        %v342 = vrot.slane %v215, 1
        %v343 = vsel %vm290, %v341, %v342
        %v344 = vrot.slane %v216, 1
        %v345 = vsel %vm290, %v342, %v344
        %v346 = vrot.slane %v217, 1
        %v347 = vrot.slane %v218, 1
        %v348 = vsel %vm290, %v346, %v347
        %v349 = vrot.slane %v219, 1
        %v350 = vsel %vm290, %v347, %v349
        %v351 = vrot.slane %v220, 1
        %v352 = vrot.slane %v221, 1
        %v353 = vsel %vm290, %v351, %v352
        %v354 = vrot.slane %v222, 1
        %v355 = vsel %vm290, %v352, %v354
        %v356 = vrot.slane %v223, 1
        %v357 = vrot.slane %v224, 1
        %v358 = vsel %vm290, %v356, %v357
        %v359 = vrot.slane %v225, 1
        %v360 = vsel %vm290, %v357, %v359
        %v361 = vrot.slane %v226, 1
        %v362 = vrot.slane %v227, 1
        %v363 = vsel %vm290, %v361, %v362
        %v364 = vrot.slane %v228, 1
        %v365 = vsel %vm290, %v362, %v364
        %v366 = vrot.slane %v229, 1
        %v367 = vrot.slane %v230, 1
        %v368 = vsel %vm290, %v366, %v367
        %v369 = vrot.slane %v231, 1
        %v370 = vsel %vm290, %v367, %v369
        %s371 = scalar_lea.vmem %s1, 4
        %v372 = vld [vmem:[%s371] sm:$0xf]
        %vm373 = vcmask 31744
        %v374 = vsel %vm373, %v293, 0
        %v376 = vsel %vm373, %v295, 0
        %v378 = vsel %vm373, %v298, 0
        %v380 = vsel %vm373, %v300, 0
        %v382 = vsel %vm373, %v303, 0
        %v384 = vsel %vm373, %v305, 0
        %v386 = vsel %vm373, %v308, 0
        %v388 = vsel %vm373, %v310, 0
        %v390 = vsel %vm373, %v313, 0
        %v392 = vsel %vm373, %v315, 0
        %v394 = vsel %vm373, %v318, 0
        %v396 = vsel %vm373, %v320, 0
        %v398 = vsel %vm373, %v323, 0
        %v400 = vsel %vm373, %v325, 0
        %v402 = vsel %vm373, %v328, 0
        %v404 = vsel %vm373, %v330, 0
        %v406 = vsel %vm373, %v333, 0
        %v408 = vsel %vm373, %v335, 0
        %v410 = vsel %vm373, %v338, 0
        %v412 = vsel %vm373, %v340, 0
        %v414 = vsel %vm373, %v343, 0
        %v416 = vsel %vm373, %v345, 0
        %v418 = vsel %vm373, %v348, 0
        %v420 = vsel %vm373, %v350, 0
        %v422 = vsel %vm373, %v353, 0
        %v424 = vsel %vm373, %v355, 0
        %v426 = vsel %vm373, %v358, 0
        %v428 = vsel %vm373, %v360, 0
        %v430 = vsel %vm373, %v363, 0
        %v432 = vsel %vm373, %v365, 0
        %v434 = vsel %vm373, %v368, 0
        %v436 = vsel %vm373, %v370, 0
        %vm438 = vcmask 1043456
        %v440 = vsel %vm438, %v372, 0
        %442 = vmatprep.subr.mxu0 0.0
        %443 = vmatpush1.msra.mxu0 %v440
        %444 = vmatprep.subr.mxu0 0.0
        %445 = vmatpush1.msra.mxu0 0.0
        %446 = vmatprep.subr.mxu0 0.0
        %447 = vmatpush1.msra.mxu0 0.0
        %448 = vmatprep.subr.mxu0 0.0
        %449 = vmatpush1.msra.mxu0 0.0
        %450 = vmatprep.subr.mxu0 0.0
        %451 = vmatpush1.msra.mxu0 0.0
        %452 = vmatprep.subr.mxu0 0.0
        %453 = vmatpush1.msra.mxu0 0.0
        %454 = vmatprep.subr.mxu0 0.0
        %455 = vmatpush1.msra.mxu0 0.0
        %456 = vmatprep.subr.mxu0 0.0
        %457 = vmatpush1.msra.mxu0 0.0
        %458 = vmatprep.subr.mxu0 0.0
        %459 = vmatpush1.msra.mxu0 0.0
        %460 = vmatprep.subr.mxu0 0.0
        %461 = vmatpush1.msra.mxu0 0.0
        %462 = vmatprep.subr.mxu0 0.0
        %463 = vmatpush1.msra.mxu0 0.0
        %464 = vmatprep.subr.mxu0 0.0
        %465 = vmatpush1.msra.mxu0 0.0
        %466 = vmatprep.subr.mxu0 0.0
        %467 = vmatpush1.msra.mxu0 0.0
        %468 = vmatprep.subr.mxu0 0.0
        %469 = vmatpush1.msra.mxu0 0.0
        %470 = vmatprep.subr.mxu0 0.0
        %471 = vmatpush1.msra.mxu0 0.0
        %472 = vmatprep.subr.mxu0 0.0
        %473 = vmatpush1.msra.mxu0 0.0
        %474 = vmatprep.subr.mxu0 0.0
        %475 = vmatpush1.msra.mxu0 0.0
        %476 = vmatprep.subr.mxu0 0.0
        %477 = vmatpush1.msra.mxu0 0.0
        %478 = vmatprep.subr.mxu0 0.0
        %479 = vmatpush1.msra.mxu0 0.0
        %480 = vmatprep.subr.mxu0 0.0
        %481 = vmatpush1.msra.mxu0 0.0
        %482 = vmatprep.subr.mxu0 0.0
        %483 = vmatpush1.msra.mxu0 0.0
        %484 = vmatprep.subr.mxu0 0.0
        %485 = vmatpush1.msra.mxu0 0.0
        %486 = vmatprep.subr.mxu0 0.0
        %487 = vmatpush1.msra.mxu0 0.0
        %488 = vmatprep.subr.mxu0 0.0
        %489 = vmatpush1.msra.mxu0 0.0
        %490 = vmatprep.subr.mxu0 0.0
        %491 = vmatpush1.msra.mxu0 0.0
        %492 = vmatprep.subr.mxu0 0.0
        %493 = vmatpush1.msra.mxu0 0.0
        %494 = vmatprep.subr.mxu0 0.0
        %495 = vmatpush1.msra.mxu0 0.0
        %496 = vmatprep.subr.mxu0 0.0
        %497 = vmatpush1.msra.mxu0 0.0
        %498 = vmatprep.subr.mxu0 0.0
        %499 = vmatpush1.msra.mxu0 0.0
        %500 = vmatprep.subr.mxu0 0.0
        %501 = vmatpush1.msra.mxu0 0.0
        %502 = vmatprep.subr.mxu0 0.0
        %503 = vmatpush1.msra.mxu0 0.0
        %504 = vmatprep.subr.mxu0 0.0
        %505 = vmatpush1.msra.mxu0 0.0
        %506 = vmatprep.mubr.f32.mxu0 0.0
        %507 = vmatmul.mubr.f32.gmra.mrb[0].mxu0 %v374
        %v508 = vpop.f32.mrb[0].mxu0
        %v509 = vadd.f32 0.0, %v508
        %v510 = vpop.f32.mrb[0].mxu0
        %511 = vmatprep.mubr.f32.mxu0 0.0
        %512 = vmatmul.mubr.f32.gmra.mrb[0].mxu0 %v376
        %v513 = vpop.f32.mrb[0].mxu0
        %v514 = vadd.f32 0.0, %v513
        %v515 = vpop.f32.mrb[0].mxu0
        %516 = vmatprep.mubr.f32.mxu0 0.0
        %517 = vmatmul.mubr.f32.gmra.mrb[0].mxu0 %v378
        %v518 = vpop.f32.mrb[0].mxu0
        %v519 = vadd.f32 0.0, %v518
        %v520 = vpop.f32.mrb[0].mxu0
        %521 = vmatprep.mubr.f32.mxu0 0.0
        %522 = vmatmul.mubr.f32.gmra.mrb[0].mxu0 %v380
        %v523 = vpop.f32.mrb[0].mxu0
        %v524 = vadd.f32 0.0, %v523
        %v525 = vpop.f32.mrb[0].mxu0
        %526 = vmatprep.mubr.f32.mxu0 0.0
        %527 = vmatmul.mubr.f32.gmra.mrb[0].mxu0 %v382
        %v528 = vpop.f32.mrb[0].mxu0
        %v529 = vadd.f32 0.0, %v528
        %v530 = vpop.f32.mrb[0].mxu0
        %531 = vmatprep.mubr.f32.mxu0 0.0
        %532 = vmatmul.mubr.f32.gmra.mrb[0].mxu0 %v384
        %v533 = vpop.f32.mrb[0].mxu0
        %v534 = vadd.f32 0.0, %v533
        %v535 = vpop.f32.mrb[0].mxu0
        %536 = vmatprep.mubr.f32.mxu0 0.0
        %537 = vmatmul.mubr.f32.gmra.mrb[0].mxu0 %v386
        %v538 = vpop.f32.mrb[0].mxu0
        %v539 = vadd.f32 0.0, %v538
        %v540 = vpop.f32.mrb[0].mxu0
        %541 = vmatprep.mubr.f32.mxu0 0.0
        %542 = vmatmul.mubr.f32.gmra.mrb[0].mxu0 %v388
        %v543 = vpop.f32.mrb[0].mxu0
        %v544 = vadd.f32 0.0, %v543
        %v545 = vpop.f32.mrb[0].mxu0
        %546 = vmatprep.mubr.f32.mxu0 0.0
        %547 = vmatmul.mubr.f32.gmra.mrb[0].mxu0 %v390
        %v548 = vpop.f32.mrb[0].mxu0
        %v549 = vadd.f32 0.0, %v548
        %v550 = vpop.f32.mrb[0].mxu0
        %551 = vmatprep.mubr.f32.mxu0 0.0
        %552 = vmatmul.mubr.f32.gmra.mrb[0].mxu0 %v392
        %v553 = vpop.f32.mrb[0].mxu0
        %v554 = vadd.f32 0.0, %v553
        %v555 = vpop.f32.mrb[0].mxu0
        %556 = vmatprep.mubr.f32.mxu0 0.0
        %557 = vmatmul.mubr.f32.gmra.mrb[0].mxu0 %v394
        %v558 = vpop.f32.mrb[0].mxu0
        %v559 = vadd.f32 0.0, %v558
        %v560 = vpop.f32.mrb[0].mxu0
        %561 = vmatprep.mubr.f32.mxu0 0.0
        %562 = vmatmul.mubr.f32.gmra.mrb[0].mxu0 %v396
        %v563 = vpop.f32.mrb[0].mxu0
        %v564 = vadd.f32 0.0, %v563
        %v565 = vpop.f32.mrb[0].mxu0
        %566 = vmatprep.mubr.f32.mxu0 0.0
        %567 = vmatmul.mubr.f32.gmra.mrb[0].mxu0 %v398
        %v568 = vpop.f32.mrb[0].mxu0
        %v569 = vadd.f32 0.0, %v568
        %v570 = vpop.f32.mrb[0].mxu0
        %571 = vmatprep.mubr.f32.mxu0 0.0
        %572 = vmatmul.mubr.f32.gmra.mrb[0].mxu0 %v400
        %v573 = vpop.f32.mrb[0].mxu0
        %v574 = vadd.f32 0.0, %v573
        %v575 = vpop.f32.mrb[0].mxu0
        %576 = vmatprep.mubr.f32.mxu0 0.0
        %577 = vmatmul.mubr.f32.gmra.mrb[0].mxu0 %v402
        %v578 = vpop.f32.mrb[0].mxu0
        %v579 = vadd.f32 0.0, %v578
        %v580 = vpop.f32.mrb[0].mxu0
        %581 = vmatprep.mubr.f32.mxu0 0.0
        %582 = vmatmul.mubr.f32.gmra.mrb[0].mxu0 %v404
        %v583 = vpop.f32.mrb[0].mxu0
        %v584 = vadd.f32 0.0, %v583
        %v585 = vpop.f32.mrb[0].mxu0
        %586 = vmatprep.mubr.f32.mxu0 0.0
        %587 = vmatmul.mubr.f32.gmra.mrb[0].mxu0 %v406
        %v588 = vpop.f32.mrb[0].mxu0
        %v589 = vadd.f32 0.0, %v588
        %v590 = vpop.f32.mrb[0].mxu0
        %591 = vmatprep.mubr.f32.mxu0 0.0
        %592 = vmatmul.mubr.f32.gmra.mrb[0].mxu0 %v408
        %v593 = vpop.f32.mrb[0].mxu0
        %v594 = vadd.f32 0.0, %v593
        %v595 = vpop.f32.mrb[0].mxu0
        %596 = vmatprep.mubr.f32.mxu0 0.0
        %597 = vmatmul.mubr.f32.gmra.mrb[0].mxu0 %v410
        %v598 = vpop.f32.mrb[0].mxu0
        %v599 = vadd.f32 0.0, %v598
        %v600 = vpop.f32.mrb[0].mxu0
        %601 = vmatprep.mubr.f32.mxu0 0.0
        %602 = vmatmul.mubr.f32.gmra.mrb[0].mxu0 %v412
        %v603 = vpop.f32.mrb[0].mxu0
        %v604 = vadd.f32 0.0, %v603
        %v605 = vpop.f32.mrb[0].mxu0
        %606 = vmatprep.mubr.f32.mxu0 0.0
        %607 = vmatmul.mubr.f32.gmra.mrb[0].mxu0 %v414
        %v608 = vpop.f32.mrb[0].mxu0
        %v609 = vadd.f32 0.0, %v608
        %v610 = vpop.f32.mrb[0].mxu0
        %611 = vmatprep.mubr.f32.mxu0 0.0
        %612 = vmatmul.mubr.f32.gmra.mrb[0].mxu0 %v416
        %v613 = vpop.f32.mrb[0].mxu0
        %v614 = vadd.f32 0.0, %v613
        %v615 = vpop.f32.mrb[0].mxu0
        %616 = vmatprep.mubr.f32.mxu0 0.0
        %617 = vmatmul.mubr.f32.gmra.mrb[0].mxu0 %v418
        %v618 = vpop.f32.mrb[0].mxu0
        %v619 = vadd.f32 0.0, %v618
        %v620 = vpop.f32.mrb[0].mxu0
        %621 = vmatprep.mubr.f32.mxu0 0.0
        %622 = vmatmul.mubr.f32.gmra.mrb[0].mxu0 %v420
        %v623 = vpop.f32.mrb[0].mxu0
        %v624 = vadd.f32 0.0, %v623
        %v625 = vpop.f32.mrb[0].mxu0
        %626 = vmatprep.mubr.f32.mxu0 0.0
        %627 = vmatmul.mubr.f32.gmra.mrb[0].mxu0 %v422
        %v628 = vpop.f32.mrb[0].mxu0
        %v629 = vadd.f32 0.0, %v628
        %v630 = vpop.f32.mrb[0].mxu0
        %631 = vmatprep.mubr.f32.mxu0 0.0
        %632 = vmatmul.mubr.f32.gmra.mrb[0].mxu0 %v424
        %v633 = vpop.f32.mrb[0].mxu0
        %v634 = vadd.f32 0.0, %v633
        %v635 = vpop.f32.mrb[0].mxu0
        %636 = vmatprep.mubr.f32.mxu0 0.0
        %637 = vmatmul.mubr.f32.gmra.mrb[0].mxu0 %v426
        %v638 = vpop.f32.mrb[0].mxu0
        %v639 = vadd.f32 0.0, %v638
        %v640 = vpop.f32.mrb[0].mxu0
        %641 = vmatprep.mubr.f32.mxu0 0.0
        %642 = vmatmul.mubr.f32.gmra.mrb[0].mxu0 %v428
        %v643 = vpop.f32.mrb[0].mxu0
        %v644 = vadd.f32 0.0, %v643
        %v645 = vpop.f32.mrb[0].mxu0
        %646 = vmatprep.mubr.f32.mxu0 0.0
        %647 = vmatmul.mubr.f32.gmra.mrb[0].mxu0 %v430
        %v648 = vpop.f32.mrb[0].mxu0
        %v649 = vadd.f32 0.0, %v648
        %v650 = vpop.f32.mrb[0].mxu0
        %651 = vmatprep.mubr.f32.mxu0 0.0
        %652 = vmatmul.mubr.f32.gmra.mrb[0].mxu0 %v432
        %v653 = vpop.f32.mrb[0].mxu0
        %v654 = vadd.f32 0.0, %v653
        %v655 = vpop.f32.mrb[0].mxu0
        %656 = vmatprep.mubr.f32.mxu0 0.0
        %657 = vmatmul.mubr.f32.gmra.mrb[0].mxu0 %v434
        %v658 = vpop.f32.mrb[0].mxu0
        %v659 = vadd.f32 0.0, %v658
        %v660 = vpop.f32.mrb[0].mxu0
        %661 = vmatprep.mubr.f32.mxu0 0.0
        %662 = vmatmul.mubr.f32.gmra.mrb[0].mxu0 %v436
        %v663 = vpop.f32.mrb[0].mxu0
        %v664 = vadd.f32 0.0, %v663
        %v665 = vpop.f32.mrb[0].mxu0
        %666 = vdwg.mxu0
        %v667 = vsel %vm373, %v184, 0
        %v669 = vsel %vm373, %v185, 0
        %v671 = vsel %vm373, %v187, 0
        %v673 = vsel %vm373, %v188, 0
        %v675 = vsel %vm373, %v190, 0
        %v677 = vsel %vm373, %v191, 0
        %v679 = vsel %vm373, %v193, 0
        %v681 = vsel %vm373, %v194, 0
        %v683 = vsel %vm373, %v196, 0
        %v685 = vsel %vm373, %v197, 0
        %v687 = vsel %vm373, %v199, 0
        %v689 = vsel %vm373, %v200, 0
        %v691 = vsel %vm373, %v202, 0
        %v693 = vsel %vm373, %v203, 0
        %v695 = vsel %vm373, %v205, 0
        %v697 = vsel %vm373, %v206, 0
        %v699 = vsel %vm373, %v208, 0
        %v701 = vsel %vm373, %v209, 0
        %v703 = vsel %vm373, %v211, 0
        %v705 = vsel %vm373, %v212, 0
        %v707 = vsel %vm373, %v214, 0
        %v709 = vsel %vm373, %v215, 0
        %v711 = vsel %vm373, %v217, 0
        %v713 = vsel %vm373, %v218, 0
        %v715 = vsel %vm373, %v220, 0
        %v717 = vsel %vm373, %v221, 0
        %v719 = vsel %vm373, %v223, 0
        %v721 = vsel %vm373, %v224, 0
        %v723 = vsel %vm373, %v226, 0
        %v725 = vsel %vm373, %v227, 0
        %v727 = vsel %vm373, %v229, 0
        %v729 = vsel %vm373, %v230, 0
        %v732 = vsel %vm438, %v241, 0
        %734 = vmatprep.subr.mxu0 0.0
        %735 = vmatpush1.msra.mxu0 %v732
        %736 = vmatprep.subr.mxu0 0.0
        %737 = vmatpush1.msra.mxu0 0.0
        %738 = vmatprep.subr.mxu0 0.0
        %739 = vmatpush1.msra.mxu0 0.0
        %740 = vmatprep.subr.mxu0 0.0
        %741 = vmatpush1.msra.mxu0 0.0
        %742 = vmatprep.subr.mxu0 0.0
        %743 = vmatpush1.msra.mxu0 0.0
        %744 = vmatprep.subr.mxu0 0.0
        %745 = vmatpush1.msra.mxu0 0.0
        %746 = vmatprep.subr.mxu0 0.0
        %747 = vmatpush1.msra.mxu0 0.0
        %748 = vmatprep.subr.mxu0 0.0
        %749 = vmatpush1.msra.mxu0 0.0
        %750 = vmatprep.subr.mxu0 0.0
        %751 = vmatpush1.msra.mxu0 0.0
        %752 = vmatprep.subr.mxu0 0.0
        %753 = vmatpush1.msra.mxu0 0.0
        %754 = vmatprep.subr.mxu0 0.0
        %755 = vmatpush1.msra.mxu0 0.0
        %756 = vmatprep.subr.mxu0 0.0
        %757 = vmatpush1.msra.mxu0 0.0
        %758 = vmatprep.subr.mxu0 0.0
        %759 = vmatpush1.msra.mxu0 0.0
        %760 = vmatprep.subr.mxu0 0.0
        %761 = vmatpush1.msra.mxu0 0.0
        %762 = vmatprep.subr.mxu0 0.0
        %763 = vmatpush1.msra.mxu0 0.0
        %764 = vmatprep.subr.mxu0 0.0
        %765 = vmatpush1.msra.mxu0 0.0
        %766 = vmatprep.subr.mxu0 0.0
        %767 = vmatpush1.msra.mxu0 0.0
        %768 = vmatprep.subr.mxu0 0.0
        %769 = vmatpush1.msra.mxu0 0.0
        %770 = vmatprep.subr.mxu0 0.0
        %771 = vmatpush1.msra.mxu0 0.0
        %772 = vmatprep.subr.mxu0 0.0
        %773 = vmatpush1.msra.mxu0 0.0
        %774 = vmatprep.subr.mxu0 0.0
        %775 = vmatpush1.msra.mxu0 0.0
        %776 = vmatprep.subr.mxu0 0.0
        %777 = vmatpush1.msra.mxu0 0.0
        %778 = vmatprep.subr.mxu0 0.0
        %779 = vmatpush1.msra.mxu0 0.0
        %780 = vmatprep.subr.mxu0 0.0
        %781 = vmatpush1.msra.mxu0 0.0
        %782 = vmatprep.subr.mxu0 0.0
        %783 = vmatpush1.msra.mxu0 0.0
        %784 = vmatprep.subr.mxu0 0.0
        %785 = vmatpush1.msra.mxu0 0.0
        %786 = vmatprep.subr.mxu0 0.0
        %787 = vmatpush1.msra.mxu0 0.0
        %788 = vmatprep.subr.mxu0 0.0
        %789 = vmatpush1.msra.mxu0 0.0
        %790 = vmatprep.subr.mxu0 0.0
        %791 = vmatpush1.msra.mxu0 0.0
        %792 = vmatprep.subr.mxu0 0.0
        %793 = vmatpush1.msra.mxu0 0.0
        %794 = vmatprep.subr.mxu0 0.0
        %795 = vmatpush1.msra.mxu0 0.0
        %796 = vmatprep.subr.mxu0 0.0
        %797 = vmatpush1.msra.mxu0 0.0
        %798 = vmatprep.mubr.f32.mxu0 0.0
        %799 = vmatmul.mubr.f32.gmra.mrb[0].mxu0 %v667
        %v800 = vpop.f32.mrb[0].mxu0
        %v801 = vadd.f32 %v509, %v800
        %v802 = vpop.f32.mrb[0].mxu0
        %803 = vmatprep.mubr.f32.mxu0 0.0
        %804 = vmatmul.mubr.f32.gmra.mrb[0].mxu0 %v669
        %v805 = vpop.f32.mrb[0].mxu0
        %v806 = vadd.f32 %v514, %v805
        %v807 = vpop.f32.mrb[0].mxu0
        %808 = vmatprep.mubr.f32.mxu0 0.0
        %809 = vmatmul.mubr.f32.gmra.mrb[0].mxu0 %v671
        %v810 = vpop.f32.mrb[0].mxu0
        %v811 = vadd.f32 %v519, %v810
        %v812 = vpop.f32.mrb[0].mxu0
        %813 = vmatprep.mubr.f32.mxu0 0.0
        %814 = vmatmul.mubr.f32.gmra.mrb[0].mxu0 %v673
        %v815 = vpop.f32.mrb[0].mxu0
        %v816 = vadd.f32 %v524, %v815
        %v817 = vpop.f32.mrb[0].mxu0
        %818 = vmatprep.mubr.f32.mxu0 0.0
        %819 = vmatmul.mubr.f32.gmra.mrb[0].mxu0 %v675
        %v820 = vpop.f32.mrb[0].mxu0
        %v821 = vadd.f32 %v529, %v820
        %v822 = vpop.f32.mrb[0].mxu0
        %823 = vmatprep.mubr.f32.mxu0 0.0
        %824 = vmatmul.mubr.f32.gmra.mrb[0].mxu0 %v677
        %v825 = vpop.f32.mrb[0].mxu0
        %v826 = vadd.f32 %v534, %v825
        %v827 = vpop.f32.mrb[0].mxu0
        %828 = vmatprep.mubr.f32.mxu0 0.0
        %829 = vmatmul.mubr.f32.gmra.mrb[0].mxu0 %v679
        %v830 = vpop.f32.mrb[0].mxu0
        %v831 = vadd.f32 %v539, %v830
        %v832 = vpop.f32.mrb[0].mxu0
        %833 = vmatprep.mubr.f32.mxu0 0.0
        %834 = vmatmul.mubr.f32.gmra.mrb[0].mxu0 %v681
        %v835 = vpop.f32.mrb[0].mxu0
        %v836 = vadd.f32 %v544, %v835
        %v837 = vpop.f32.mrb[0].mxu0
        %838 = vmatprep.mubr.f32.mxu0 0.0
        %839 = vmatmul.mubr.f32.gmra.mrb[0].mxu0 %v683
        %v840 = vpop.f32.mrb[0].mxu0
        %v841 = vadd.f32 %v549, %v840
        %v842 = vpop.f32.mrb[0].mxu0
        %843 = vmatprep.mubr.f32.mxu0 0.0
        %844 = vmatmul.mubr.f32.gmra.mrb[0].mxu0 %v685
        %v845 = vpop.f32.mrb[0].mxu0
        %v846 = vadd.f32 %v554, %v845
        %v847 = vpop.f32.mrb[0].mxu0
        %848 = vmatprep.mubr.f32.mxu0 0.0
        %849 = vmatmul.mubr.f32.gmra.mrb[0].mxu0 %v687
        %v850 = vpop.f32.mrb[0].mxu0
        %v851 = vadd.f32 %v559, %v850
        %v852 = vpop.f32.mrb[0].mxu0
        %853 = vmatprep.mubr.f32.mxu0 0.0
        %854 = vmatmul.mubr.f32.gmra.mrb[0].mxu0 %v689
        %v855 = vpop.f32.mrb[0].mxu0
        %v856 = vadd.f32 %v564, %v855
        %v857 = vpop.f32.mrb[0].mxu0
        %858 = vmatprep.mubr.f32.mxu0 0.0
        %859 = vmatmul.mubr.f32.gmra.mrb[0].mxu0 %v691
        %v860 = vpop.f32.mrb[0].mxu0
        %v861 = vadd.f32 %v569, %v860
        %v862 = vpop.f32.mrb[0].mxu0
        %863 = vmatprep.mubr.f32.mxu0 0.0
        %864 = vmatmul.mubr.f32.gmra.mrb[0].mxu0 %v693
        %v865 = vpop.f32.mrb[0].mxu0
        %v866 = vadd.f32 %v574, %v865
        %v867 = vpop.f32.mrb[0].mxu0
        %868 = vmatprep.mubr.f32.mxu0 0.0
        %869 = vmatmul.mubr.f32.gmra.mrb[0].mxu0 %v695
        %v870 = vpop.f32.mrb[0].mxu0
        %v871 = vadd.f32 %v579, %v870
        %v872 = vpop.f32.mrb[0].mxu0
        %873 = vmatprep.mubr.f32.mxu0 0.0
        %874 = vmatmul.mubr.f32.gmra.mrb[0].mxu0 %v697
        %v875 = vpop.f32.mrb[0].mxu0
        %v876 = vadd.f32 %v584, %v875
        %v877 = vpop.f32.mrb[0].mxu0
        %878 = vmatprep.mubr.f32.mxu0 0.0
        %879 = vmatmul.mubr.f32.gmra.mrb[0].mxu0 %v699
        %v880 = vpop.f32.mrb[0].mxu0
        %v881 = vadd.f32 %v589, %v880
        %v882 = vpop.f32.mrb[0].mxu0
        %883 = vmatprep.mubr.f32.mxu0 0.0
        %884 = vmatmul.mubr.f32.gmra.mrb[0].mxu0 %v701
        %v885 = vpop.f32.mrb[0].mxu0
        %v886 = vadd.f32 %v594, %v885
        %v887 = vpop.f32.mrb[0].mxu0
        %888 = vmatprep.mubr.f32.mxu0 0.0
        %889 = vmatmul.mubr.f32.gmra.mrb[0].mxu0 %v703
        %v890 = vpop.f32.mrb[0].mxu0
        %v891 = vadd.f32 %v599, %v890
        %v892 = vpop.f32.mrb[0].mxu0
        %893 = vmatprep.mubr.f32.mxu0 0.0
        %894 = vmatmul.mubr.f32.gmra.mrb[0].mxu0 %v705
        %v895 = vpop.f32.mrb[0].mxu0
        %v896 = vadd.f32 %v604, %v895
        %v897 = vpop.f32.mrb[0].mxu0
        %898 = vmatprep.mubr.f32.mxu0 0.0
        %899 = vmatmul.mubr.f32.gmra.mrb[0].mxu0 %v707
        %v900 = vpop.f32.mrb[0].mxu0
        %v901 = vadd.f32 %v609, %v900
        %v902 = vpop.f32.mrb[0].mxu0
        %903 = vmatprep.mubr.f32.mxu0 0.0
        %904 = vmatmul.mubr.f32.gmra.mrb[0].mxu0 %v709
        %v905 = vpop.f32.mrb[0].mxu0
        %v906 = vadd.f32 %v614, %v905
        %v907 = vpop.f32.mrb[0].mxu0
        %908 = vmatprep.mubr.f32.mxu0 0.0
        %909 = vmatmul.mubr.f32.gmra.mrb[0].mxu0 %v711
        %v910 = vpop.f32.mrb[0].mxu0
        %v911 = vadd.f32 %v619, %v910
        %v912 = vpop.f32.mrb[0].mxu0
        %913 = vmatprep.mubr.f32.mxu0 0.0
        %914 = vmatmul.mubr.f32.gmra.mrb[0].mxu0 %v713
        %v915 = vpop.f32.mrb[0].mxu0
        %v916 = vadd.f32 %v624, %v915
        %v917 = vpop.f32.mrb[0].mxu0
        %918 = vmatprep.mubr.f32.mxu0 0.0
        %919 = vmatmul.mubr.f32.gmra.mrb[0].mxu0 %v715
        %v920 = vpop.f32.mrb[0].mxu0
        %v921 = vadd.f32 %v629, %v920
        %v922 = vpop.f32.mrb[0].mxu0
        %923 = vmatprep.mubr.f32.mxu0 0.0
        %924 = vmatmul.mubr.f32.gmra.mrb[0].mxu0 %v717
        %v925 = vpop.f32.mrb[0].mxu0
        %v926 = vadd.f32 %v634, %v925
        %v927 = vpop.f32.mrb[0].mxu0
        %928 = vmatprep.mubr.f32.mxu0 0.0
        %929 = vmatmul.mubr.f32.gmra.mrb[0].mxu0 %v719
        %v930 = vpop.f32.mrb[0].mxu0
        %v931 = vadd.f32 %v639, %v930
        %v932 = vpop.f32.mrb[0].mxu0
        %933 = vmatprep.mubr.f32.mxu0 0.0
        %934 = vmatmul.mubr.f32.gmra.mrb[0].mxu0 %v721
        %v935 = vpop.f32.mrb[0].mxu0
        %v936 = vadd.f32 %v644, %v935
        %v937 = vpop.f32.mrb[0].mxu0
        %938 = vmatprep.mubr.f32.mxu0 0.0
        %939 = vmatmul.mubr.f32.gmra.mrb[0].mxu0 %v723
        %v940 = vpop.f32.mrb[0].mxu0
        %v941 = vadd.f32 %v649, %v940
        %v942 = vpop.f32.mrb[0].mxu0
        %943 = vmatprep.mubr.f32.mxu0 0.0
        %944 = vmatmul.mubr.f32.gmra.mrb[0].mxu0 %v725
        %v945 = vpop.f32.mrb[0].mxu0
        %v946 = vadd.f32 %v654, %v945
        %v947 = vpop.f32.mrb[0].mxu0
        %948 = vmatprep.mubr.f32.mxu0 0.0
        %949 = vmatmul.mubr.f32.gmra.mrb[0].mxu0 %v727
        %v950 = vpop.f32.mrb[0].mxu0
        %v951 = vadd.f32 %v659, %v950
        %v952 = vpop.f32.mrb[0].mxu0
        %953 = vmatprep.mubr.f32.mxu0 0.0
        %954 = vmatmul.mubr.f32.gmra.mrb[0].mxu0 %v729
        %v955 = vpop.f32.mrb[0].mxu0
        %v956 = vadd.f32 %v664, %v955
        %v957 = vpop.f32.mrb[0].mxu0
        %958 = vdwg.mxu0
        %vm959 = vcmask 1045504
        %v960 = vrot.slane %v184, 2
        %v961 = vrot.slane %v185, 2
        %v962 = vsel %vm959, %v960, %v961
        %v963 = vrot.slane %v186, 2
        %v964 = vsel %vm959, %v961, %v963
        %v965 = vrot.slane %v187, 2
        %v966 = vrot.slane %v188, 2
        %v967 = vsel %vm959, %v965, %v966
        %v968 = vrot.slane %v189, 2
        %v969 = vsel %vm959, %v966, %v968
        %v970 = vrot.slane %v190, 2
        %v971 = vrot.slane %v191, 2
        %v972 = vsel %vm959, %v970, %v971
        %v973 = vrot.slane %v192, 2
        %v974 = vsel %vm959, %v971, %v973
        %v975 = vrot.slane %v193, 2
        %v976 = vrot.slane %v194, 2
        %v977 = vsel %vm959, %v975, %v976
        %v978 = vrot.slane %v195, 2
        %v979 = vsel %vm959, %v976, %v978
        %v980 = vrot.slane %v196, 2
        %v981 = vrot.slane %v197, 2
        %v982 = vsel %vm959, %v980, %v981
        %v983 = vrot.slane %v198, 2
        %v984 = vsel %vm959, %v981, %v983
        %v985 = vrot.slane %v199, 2
        %v986 = vrot.slane %v200, 2
        %v987 = vsel %vm959, %v985, %v986
        %v988 = vrot.slane %v201, 2
        %v989 = vsel %vm959, %v986, %v988
        %v990 = vrot.slane %v202, 2
        %v991 = vrot.slane %v203, 2
        %v992 = vsel %vm959, %v990, %v991
        %v993 = vrot.slane %v204, 2
        %v994 = vsel %vm959, %v991, %v993
        %v995 = vrot.slane %v205, 2
        %v996 = vrot.slane %v206, 2
        %v997 = vsel %vm959, %v995, %v996
        %v998 = vrot.slane %v207, 2
        %v999 = vsel %vm959, %v996, %v998
        %v1000 = vrot.slane %v208, 2
        %v1001 = vrot.slane %v209, 2
        %v1002 = vsel %vm959, %v1000, %v1001
        %v1003 = vrot.slane %v210, 2
        %v1004 = vsel %vm959, %v1001, %v1003
        %v1005 = vrot.slane %v211, 2
        %v1006 = vrot.slane %v212, 2
        %v1007 = vsel %vm959, %v1005, %v1006
        %v1008 = vrot.slane %v213, 2
        %v1009 = vsel %vm959, %v1006, %v1008
        %v1010 = vrot.slane %v214, 2
        %v1011 = vrot.slane %v215, 2
        %v1012 = vsel %vm959, %v1010, %v1011
        %v1013 = vrot.slane %v216, 2
        %v1014 = vsel %vm959, %v1011, %v1013
        %v1015 = vrot.slane %v217, 2
        %v1016 = vrot.slane %v218, 2
        %v1017 = vsel %vm959, %v1015, %v1016
        %v1018 = vrot.slane %v219, 2
        %v1019 = vsel %vm959, %v1016, %v1018
        %v1020 = vrot.slane %v220, 2
        %v1021 = vrot.slane %v221, 2
        %v1022 = vsel %vm959, %v1020, %v1021
        %v1023 = vrot.slane %v222, 2
        %v1024 = vsel %vm959, %v1021, %v1023
        %v1025 = vrot.slane %v223, 2
        %v1026 = vrot.slane %v224, 2
        %v1027 = vsel %vm959, %v1025, %v1026
        %v1028 = vrot.slane %v225, 2
        %v1029 = vsel %vm959, %v1026, %v1028
        %v1030 = vrot.slane %v226, 2
        %v1031 = vrot.slane %v227, 2
        %v1032 = vsel %vm959, %v1030, %v1031
        %v1033 = vrot.slane %v228, 2
        %v1034 = vsel %vm959, %v1031, %v1033
        %v1035 = vrot.slane %v229, 2
        %v1036 = vrot.slane %v230, 2
        %v1037 = vsel %vm959, %v1035, %v1036
        %v1038 = vrot.slane %v231, 2
        %v1039 = vsel %vm959, %v1036, %v1038
        %s1040 = scalar_lea.vmem %s1, 8
        %v1041 = vld [vmem:[%s1040] sm:$0xf]
        %v1042 = vsel %vm373, %v962, 0
        %v1044 = vsel %vm373, %v964, 0
        %v1046 = vsel %vm373, %v967, 0
        %v1048 = vsel %vm373, %v969, 0
        %v1050 = vsel %vm373, %v972, 0
        %v1052 = vsel %vm373, %v974, 0
        %v1054 = vsel %vm373, %v977, 0
        %v1056 = vsel %vm373, %v979, 0
        %v1058 = vsel %vm373, %v982, 0
        %v1060 = vsel %vm373, %v984, 0
        %v1062 = vsel %vm373, %v987, 0
        %v1064 = vsel %vm373, %v989, 0
        %v1066 = vsel %vm373, %v992, 0
        %v1068 = vsel %vm373, %v994, 0
        %v1070 = vsel %vm373, %v997, 0
        %v1072 = vsel %vm373, %v999, 0
        %v1074 = vsel %vm373, %v1002, 0
        %v1076 = vsel %vm373, %v1004, 0
        %v1078 = vsel %vm373, %v1007, 0
        %v1080 = vsel %vm373, %v1009, 0
        %v1082 = vsel %vm373, %v1012, 0
        %v1084 = vsel %vm373, %v1014, 0
        %v1086 = vsel %vm373, %v1017, 0
        %v1088 = vsel %vm373, %v1019, 0
        %v1090 = vsel %vm373, %v1022, 0
        %v1092 = vsel %vm373, %v1024, 0
        %v1094 = vsel %vm373, %v1027, 0
        %v1096 = vsel %vm373, %v1029, 0
        %v1098 = vsel %vm373, %v1032, 0
        %v1100 = vsel %vm373, %v1034, 0
        %v1102 = vsel %vm373, %v1037, 0
        %v1104 = vsel %vm373, %v1039, 0
        %v1107 = vsel %vm438, %v1041, 0
        %1109 = vmatprep.subr.mxu0 0.0
        %1110 = vmatpush1.msra.mxu0 %v1107
        %1111 = vmatprep.subr.mxu0 0.0
        %1112 = vmatpush1.msra.mxu0 0.0
        %1113 = vmatprep.subr.mxu0 0.0
        %1114 = vmatpush1.msra.mxu0 0.0
        %1115 = vmatprep.subr.mxu0 0.0
        %1116 = vmatpush1.msra.mxu0 0.0
        %1117 = vmatprep.subr.mxu0 0.0
        %1118 = vmatpush1.msra.mxu0 0.0
        %1119 = vmatprep.subr.mxu0 0.0
        %1120 = vmatpush1.msra.mxu0 0.0
        %1121 = vmatprep.subr.mxu0 0.0
        %1122 = vmatpush1.msra.mxu0 0.0
        %1123 = vmatprep.subr.mxu0 0.0
        %1124 = vmatpush1.msra.mxu0 0.0
        %1125 = vmatprep.subr.mxu0 0.0
        %1126 = vmatpush1.msra.mxu0 0.0
        %1127 = vmatprep.subr.mxu0 0.0
        %1128 = vmatpush1.msra.mxu0 0.0
        %1129 = vmatprep.subr.mxu0 0.0
        %1130 = vmatpush1.msra.mxu0 0.0
        %1131 = vmatprep.subr.mxu0 0.0
        %1132 = vmatpush1.msra.mxu0 0.0
        %1133 = vmatprep.subr.mxu0 0.0
        %1134 = vmatpush1.msra.mxu0 0.0
        %1135 = vmatprep.subr.mxu0 0.0
        %1136 = vmatpush1.msra.mxu0 0.0
        %1137 = vmatprep.subr.mxu0 0.0
        %1138 = vmatpush1.msra.mxu0 0.0
        %1139 = vmatprep.subr.mxu0 0.0
        %1140 = vmatpush1.msra.mxu0 0.0
        %1141 = vmatprep.subr.mxu0 0.0
        %1142 = vmatpush1.msra.mxu0 0.0
        %1143 = vmatprep.subr.mxu0 0.0
        %1144 = vmatpush1.msra.mxu0 0.0
        %1145 = vmatprep.subr.mxu0 0.0
        %1146 = vmatpush1.msra.mxu0 0.0
        %1147 = vmatprep.subr.mxu0 0.0
        %1148 = vmatpush1.msra.mxu0 0.0
        %1149 = vmatprep.subr.mxu0 0.0
        %1150 = vmatpush1.msra.mxu0 0.0
        %1151 = vmatprep.subr.mxu0 0.0
        %1152 = vmatpush1.msra.mxu0 0.0
        %1153 = vmatprep.subr.mxu0 0.0
        %1154 = vmatpush1.msra.mxu0 0.0
        %1155 = vmatprep.subr.mxu0 0.0
        %1156 = vmatpush1.msra.mxu0 0.0
        %1157 = vmatprep.subr.mxu0 0.0
        %1158 = vmatpush1.msra.mxu0 0.0
        %1159 = vmatprep.subr.mxu0 0.0
        %1160 = vmatpush1.msra.mxu0 0.0
        %1161 = vmatprep.subr.mxu0 0.0
        %1162 = vmatpush1.msra.mxu0 0.0
        %1163 = vmatprep.subr.mxu0 0.0
        %1164 = vmatpush1.msra.mxu0 0.0
        %1165 = vmatprep.subr.mxu0 0.0
        %1166 = vmatpush1.msra.mxu0 0.0
        %1167 = vmatprep.subr.mxu0 0.0
        %1168 = vmatpush1.msra.mxu0 0.0
        %1169 = vmatprep.subr.mxu0 0.0
        %1170 = vmatpush1.msra.mxu0 0.0
        %1171 = vmatprep.subr.mxu0 0.0
        %1172 = vmatpush1.msra.mxu0 0.0
        %1173 = vmatprep.mubr.f32.mxu0 0.0
        %1174 = vmatmul.mubr.f32.gmra.mrb[0].mxu0 %v1042
        %v1175 = vpop.f32.mrb[0].mxu0
        %v1176 = vadd.f32 0.0, %v1175
        %v1177 = vpop.f32.mrb[0].mxu0
        %1178 = vmatprep.mubr.f32.mxu0 0.0
        %1179 = vmatmul.mubr.f32.gmra.mrb[0].mxu0 %v1044
        %v1180 = vpop.f32.mrb[0].mxu0
        %v1181 = vadd.f32 0.0, %v1180
        %v1182 = vpop.f32.mrb[0].mxu0
        %1183 = vmatprep.mubr.f32.mxu0 0.0
        %1184 = vmatmul.mubr.f32.gmra.mrb[0].mxu0 %v1046
        %v1185 = vpop.f32.mrb[0].mxu0
        %v1186 = vadd.f32 0.0, %v1185
        %v1187 = vpop.f32.mrb[0].mxu0
        %1188 = vmatprep.mubr.f32.mxu0 0.0
        %1189 = vmatmul.mubr.f32.gmra.mrb[0].mxu0 %v1048
        %v1190 = vpop.f32.mrb[0].mxu0
        %v1191 = vadd.f32 0.0, %v1190
        %v1192 = vpop.f32.mrb[0].mxu0
        %1193 = vmatprep.mubr.f32.mxu0 0.0
        %1194 = vmatmul.mubr.f32.gmra.mrb[0].mxu0 %v1050
        %v1195 = vpop.f32.mrb[0].mxu0
        %v1196 = vadd.f32 0.0, %v1195
        %v1197 = vpop.f32.mrb[0].mxu0
        %1198 = vmatprep.mubr.f32.mxu0 0.0
        %1199 = vmatmul.mubr.f32.gmra.mrb[0].mxu0 %v1052
        %v1200 = vpop.f32.mrb[0].mxu0
        %v1201 = vadd.f32 0.0, %v1200
        %v1202 = vpop.f32.mrb[0].mxu0
        %1203 = vmatprep.mubr.f32.mxu0 0.0
        %1204 = vmatmul.mubr.f32.gmra.mrb[0].mxu0 %v1054
        %v1205 = vpop.f32.mrb[0].mxu0
        %v1206 = vadd.f32 0.0, %v1205
        %v1207 = vpop.f32.mrb[0].mxu0
        %1208 = vmatprep.mubr.f32.mxu0 0.0
        %1209 = vmatmul.mubr.f32.gmra.mrb[0].mxu0 %v1056
        %v1210 = vpop.f32.mrb[0].mxu0
        %v1211 = vadd.f32 0.0, %v1210
        %v1212 = vpop.f32.mrb[0].mxu0
        %1213 = vmatprep.mubr.f32.mxu0 0.0
        %1214 = vmatmul.mubr.f32.gmra.mrb[0].mxu0 %v1058
        %v1215 = vpop.f32.mrb[0].mxu0
        %v1216 = vadd.f32 0.0, %v1215
        %v1217 = vpop.f32.mrb[0].mxu0
        %1218 = vmatprep.mubr.f32.mxu0 0.0
        %1219 = vmatmul.mubr.f32.gmra.mrb[0].mxu0 %v1060
        %v1220 = vpop.f32.mrb[0].mxu0
        %v1221 = vadd.f32 0.0, %v1220
        %v1222 = vpop.f32.mrb[0].mxu0
        %1223 = vmatprep.mubr.f32.mxu0 0.0
        %1224 = vmatmul.mubr.f32.gmra.mrb[0].mxu0 %v1062
        %v1225 = vpop.f32.mrb[0].mxu0
        %v1226 = vadd.f32 0.0, %v1225
        %v1227 = vpop.f32.mrb[0].mxu0
        %1228 = vmatprep.mubr.f32.mxu0 0.0
        %1229 = vmatmul.mubr.f32.gmra.mrb[0].mxu0 %v1064
        %v1230 = vpop.f32.mrb[0].mxu0
        %v1231 = vadd.f32 0.0, %v1230
        %v1232 = vpop.f32.mrb[0].mxu0
        %1233 = vmatprep.mubr.f32.mxu0 0.0
        %1234 = vmatmul.mubr.f32.gmra.mrb[0].mxu0 %v1066
        %v1235 = vpop.f32.mrb[0].mxu0
        %v1236 = vadd.f32 0.0, %v1235
        %v1237 = vpop.f32.mrb[0].mxu0
        %1238 = vmatprep.mubr.f32.mxu0 0.0
        %1239 = vmatmul.mubr.f32.gmra.mrb[0].mxu0 %v1068
        %v1240 = vpop.f32.mrb[0].mxu0
        %v1241 = vadd.f32 0.0, %v1240
        %v1242 = vpop.f32.mrb[0].mxu0
        %1243 = vmatprep.mubr.f32.mxu0 0.0
        %1244 = vmatmul.mubr.f32.gmra.mrb[0].mxu0 %v1070
        %v1245 = vpop.f32.mrb[0].mxu0
        %v1246 = vadd.f32 0.0, %v1245
        %v1247 = vpop.f32.mrb[0].mxu0
        %1248 = vmatprep.mubr.f32.mxu0 0.0
        %1249 = vmatmul.mubr.f32.gmra.mrb[0].mxu0 %v1072
        %v1250 = vpop.f32.mrb[0].mxu0
        %v1251 = vadd.f32 0.0, %v1250
        %v1252 = vpop.f32.mrb[0].mxu0
        %1253 = vmatprep.mubr.f32.mxu0 0.0
        %1254 = vmatmul.mubr.f32.gmra.mrb[0].mxu0 %v1074
        %v1255 = vpop.f32.mrb[0].mxu0
        %v1256 = vadd.f32 0.0, %v1255
        %v1257 = vpop.f32.mrb[0].mxu0
        %1258 = vmatprep.mubr.f32.mxu0 0.0
        %1259 = vmatmul.mubr.f32.gmra.mrb[0].mxu0 %v1076
        %v1260 = vpop.f32.mrb[0].mxu0
        %v1261 = vadd.f32 0.0, %v1260
        %v1262 = vpop.f32.mrb[0].mxu0
        %1263 = vmatprep.mubr.f32.mxu0 0.0
        %1264 = vmatmul.mubr.f32.gmra.mrb[0].mxu0 %v1078
        %v1265 = vpop.f32.mrb[0].mxu0
        %v1266 = vadd.f32 0.0, %v1265
        %v1267 = vpop.f32.mrb[0].mxu0
        %1268 = vmatprep.mubr.f32.mxu0 0.0
        %1269 = vmatmul.mubr.f32.gmra.mrb[0].mxu0 %v1080
        %v1270 = vpop.f32.mrb[0].mxu0
        %v1271 = vadd.f32 0.0, %v1270
        %v1272 = vpop.f32.mrb[0].mxu0
        %1273 = vmatprep.mubr.f32.mxu0 0.0
        %1274 = vmatmul.mubr.f32.gmra.mrb[0].mxu0 %v1082
        %v1275 = vpop.f32.mrb[0].mxu0
        %v1276 = vadd.f32 0.0, %v1275
        %v1277 = vpop.f32.mrb[0].mxu0
        %1278 = vmatprep.mubr.f32.mxu0 0.0
        %1279 = vmatmul.mubr.f32.gmra.mrb[0].mxu0 %v1084
        %v1280 = vpop.f32.mrb[0].mxu0
        %v1281 = vadd.f32 0.0, %v1280
        %v1282 = vpop.f32.mrb[0].mxu0
        %1283 = vmatprep.mubr.f32.mxu0 0.0
        %1284 = vmatmul.mubr.f32.gmra.mrb[0].mxu0 %v1086
        %v1285 = vpop.f32.mrb[0].mxu0
        %v1286 = vadd.f32 0.0, %v1285
        %v1287 = vpop.f32.mrb[0].mxu0
        %1288 = vmatprep.mubr.f32.mxu0 0.0
        %1289 = vmatmul.mubr.f32.gmra.mrb[0].mxu0 %v1088
        %v1290 = vpop.f32.mrb[0].mxu0
        %v1291 = vadd.f32 0.0, %v1290
        %v1292 = vpop.f32.mrb[0].mxu0
        %1293 = vmatprep.mubr.f32.mxu0 0.0
        %1294 = vmatmul.mubr.f32.gmra.mrb[0].mxu0 %v1090
        %v1295 = vpop.f32.mrb[0].mxu0
        %v1296 = vadd.f32 0.0, %v1295
        %v1297 = vpop.f32.mrb[0].mxu0
        %1298 = vmatprep.mubr.f32.mxu0 0.0
        %1299 = vmatmul.mubr.f32.gmra.mrb[0].mxu0 %v1092
        %v1300 = vpop.f32.mrb[0].mxu0
        %v1301 = vadd.f32 0.0, %v1300
        %v1302 = vpop.f32.mrb[0].mxu0
        %1303 = vmatprep.mubr.f32.mxu0 0.0
        %1304 = vmatmul.mubr.f32.gmra.mrb[0].mxu0 %v1094
        %v1305 = vpop.f32.mrb[0].mxu0
        %v1306 = vadd.f32 0.0, %v1305
        %v1307 = vpop.f32.mrb[0].mxu0
        %1308 = vmatprep.mubr.f32.mxu0 0.0
        %1309 = vmatmul.mubr.f32.gmra.mrb[0].mxu0 %v1096
        %v1310 = vpop.f32.mrb[0].mxu0
        %v1311 = vadd.f32 0.0, %v1310
        %v1312 = vpop.f32.mrb[0].mxu0
        %1313 = vmatprep.mubr.f32.mxu0 0.0
        %1314 = vmatmul.mubr.f32.gmra.mrb[0].mxu0 %v1098
        %v1315 = vpop.f32.mrb[0].mxu0
        %v1316 = vadd.f32 0.0, %v1315
        %v1317 = vpop.f32.mrb[0].mxu0
        %1318 = vmatprep.mubr.f32.mxu0 0.0
        %1319 = vmatmul.mubr.f32.gmra.mrb[0].mxu0 %v1100
        %v1320 = vpop.f32.mrb[0].mxu0
        %v1321 = vadd.f32 0.0, %v1320
        %v1322 = vpop.f32.mrb[0].mxu0
        %1323 = vmatprep.mubr.f32.mxu0 0.0
        %1324 = vmatmul.mubr.f32.gmra.mrb[0].mxu0 %v1102
        %v1325 = vpop.f32.mrb[0].mxu0
        %v1326 = vadd.f32 0.0, %v1325
        %v1327 = vpop.f32.mrb[0].mxu0
        %1328 = vmatprep.mubr.f32.mxu0 0.0
        %1329 = vmatmul.mubr.f32.gmra.mrb[0].mxu0 %v1104
        %v1330 = vpop.f32.mrb[0].mxu0
        %v1331 = vadd.f32 0.0, %v1330
        %v1332 = vpop.f32.mrb[0].mxu0
        %1333 = vdwg.mxu0
        %v1334 = vadd.f32 %v801, %v1176
        %v1335 = vadd.f32 %v806, %v1181
        %v1336 = vadd.f32 %v811, %v1186
        %v1337 = vadd.f32 %v816, %v1191
        %v1338 = vadd.f32 %v821, %v1196
        %v1339 = vadd.f32 %v826, %v1201
        %v1340 = vadd.f32 %v831, %v1206
        %v1341 = vadd.f32 %v836, %v1211
        %v1342 = vadd.f32 %v841, %v1216
        %v1343 = vadd.f32 %v846, %v1221
        %v1344 = vadd.f32 %v851, %v1226
        %v1345 = vadd.f32 %v856, %v1231
        %v1346 = vadd.f32 %v861, %v1236
        %v1347 = vadd.f32 %v866, %v1241
        %v1348 = vadd.f32 %v871, %v1246
        %v1349 = vadd.f32 %v876, %v1251
        %v1350 = vadd.f32 %v881, %v1256
        %v1351 = vadd.f32 %v886, %v1261
        %v1352 = vadd.f32 %v891, %v1266
        %v1353 = vadd.f32 %v896, %v1271
        %v1354 = vadd.f32 %v901, %v1276
        %v1355 = vadd.f32 %v906, %v1281
        %v1356 = vadd.f32 %v911, %v1286
        %v1357 = vadd.f32 %v916, %v1291
        %v1358 = vadd.f32 %v921, %v1296
        %v1359 = vadd.f32 %v926, %v1301
        %v1360 = vadd.f32 %v931, %v1306
        %v1361 = vadd.f32 %v936, %v1311
        %v1362 = vadd.f32 %v941, %v1316
        %v1363 = vadd.f32 %v946, %v1321
        %v1364 = vadd.f32 %v951, %v1326
        %v1365 = vadd.f32 %v956, %v1331
        %vm1366 = vcmask 1044480
        %v1367 = vrot.slane %v184, 3
        %v1368 = vrot.slane %v185, 3
        %v1369 = vsel %vm1366, %v1367, %v1368
        %v1370 = vrot.slane %v186, 3
        %v1371 = vsel %vm1366, %v1368, %v1370
        %v1372 = vrot.slane %v187, 3
        %v1373 = vrot.slane %v188, 3
        %v1374 = vsel %vm1366, %v1372, %v1373
        %v1375 = vrot.slane %v189, 3
        %v1376 = vsel %vm1366, %v1373, %v1375
        %v1377 = vrot.slane %v190, 3
        %v1378 = vrot.slane %v191, 3
        %v1379 = vsel %vm1366, %v1377, %v1378
        %v1380 = vrot.slane %v192, 3
        %v1381 = vsel %vm1366, %v1378, %v1380
        %v1382 = vrot.slane %v193, 3
        %v1383 = vrot.slane %v194, 3
        %v1384 = vsel %vm1366, %v1382, %v1383
        %v1385 = vrot.slane %v195, 3
        %v1386 = vsel %vm1366, %v1383, %v1385
        %v1387 = vrot.slane %v196, 3
        %v1388 = vrot.slane %v197, 3
        %v1389 = vsel %vm1366, %v1387, %v1388
        %v1390 = vrot.slane %v198, 3
        %v1391 = vsel %vm1366, %v1388, %v1390
        %v1392 = vrot.slane %v199, 3
        %v1393 = vrot.slane %v200, 3
        %v1394 = vsel %vm1366, %v1392, %v1393
        %v1395 = vrot.slane %v201, 3
        %v1396 = vsel %vm1366, %v1393, %v1395
        %v1397 = vrot.slane %v202, 3
        %v1398 = vrot.slane %v203, 3
        %v1399 = vsel %vm1366, %v1397, %v1398
        %v1400 = vrot.slane %v204, 3
        %v1401 = vsel %vm1366, %v1398, %v1400
        %v1402 = vrot.slane %v205, 3
        %v1403 = vrot.slane %v206, 3
        %v1404 = vsel %vm1366, %v1402, %v1403
        %v1405 = vrot.slane %v207, 3
        %v1406 = vsel %vm1366, %v1403, %v1405
        %v1407 = vrot.slane %v208, 3
        %v1408 = vrot.slane %v209, 3
        %v1409 = vsel %vm1366, %v1407, %v1408
        %v1410 = vrot.slane %v210, 3
        %v1411 = vsel %vm1366, %v1408, %v1410
        %v1412 = vrot.slane %v211, 3
        %v1413 = vrot.slane %v212, 3
        %v1414 = vsel %vm1366, %v1412, %v1413
        %v1415 = vrot.slane %v213, 3
        %v1416 = vsel %vm1366, %v1413, %v1415
        %v1417 = vrot.slane %v214, 3
        %v1418 = vrot.slane %v215, 3
        %v1419 = vsel %vm1366, %v1417, %v1418
        %v1420 = vrot.slane %v216, 3
        %v1421 = vsel %vm1366, %v1418, %v1420
        %v1422 = vrot.slane %v217, 3
        %v1423 = vrot.slane %v218, 3
        %v1424 = vsel %vm1366, %v1422, %v1423
        %v1425 = vrot.slane %v219, 3
        %v1426 = vsel %vm1366, %v1423, %v1425
        %v1427 = vrot.slane %v220, 3
        %v1428 = vrot.slane %v221, 3
        %v1429 = vsel %vm1366, %v1427, %v1428
        %v1430 = vrot.slane %v222, 3
        %v1431 = vsel %vm1366, %v1428, %v1430
        %v1432 = vrot.slane %v223, 3
        %v1433 = vrot.slane %v224, 3
        %v1434 = vsel %vm1366, %v1432, %v1433
        %v1435 = vrot.slane %v225, 3
        %v1436 = vsel %vm1366, %v1433, %v1435
        %v1437 = vrot.slane %v226, 3
        %v1438 = vrot.slane %v227, 3
        %v1439 = vsel %vm1366, %v1437, %v1438
        %v1440 = vrot.slane %v228, 3
        %v1441 = vsel %vm1366, %v1438, %v1440
        %v1442 = vrot.slane %v229, 3
        %v1443 = vrot.slane %v230, 3
        %v1444 = vsel %vm1366, %v1442, %v1443
        %v1445 = vrot.slane %v231, 3
        %v1446 = vsel %vm1366, %v1443, %v1445
        %s1447 = scalar_lea.vmem %s1, 12
        %v1448 = vld [vmem:[%s1447] sm:$0xf]
        %v1449 = vsel %vm373, %v1369, 0
        %v1451 = vsel %vm373, %v1371, 0
        %v1453 = vsel %vm373, %v1374, 0
        %v1455 = vsel %vm373, %v1376, 0
        %v1457 = vsel %vm373, %v1379, 0
        %v1459 = vsel %vm373, %v1381, 0
        %v1461 = vsel %vm373, %v1384, 0
        %v1463 = vsel %vm373, %v1386, 0
        %v1465 = vsel %vm373, %v1389, 0
        %v1467 = vsel %vm373, %v1391, 0
        %v1469 = vsel %vm373, %v1394, 0
        %v1471 = vsel %vm373, %v1396, 0
        %v1473 = vsel %vm373, %v1399, 0
        %v1475 = vsel %vm373, %v1401, 0
        %v1477 = vsel %vm373, %v1404, 0
        %v1479 = vsel %vm373, %v1406, 0
        %v1481 = vsel %vm373, %v1409, 0
        %v1483 = vsel %vm373, %v1411, 0
        %v1485 = vsel %vm373, %v1414, 0
        %v1487 = vsel %vm373, %v1416, 0
        %v1489 = vsel %vm373, %v1419, 0
        %v1491 = vsel %vm373, %v1421, 0
        %v1493 = vsel %vm373, %v1424, 0
        %v1495 = vsel %vm373, %v1426, 0
        %v1497 = vsel %vm373, %v1429, 0
        %v1499 = vsel %vm373, %v1431, 0
        %v1501 = vsel %vm373, %v1434, 0
        %v1503 = vsel %vm373, %v1436, 0
        %v1505 = vsel %vm373, %v1439, 0
        %v1507 = vsel %vm373, %v1441, 0
        %v1509 = vsel %vm373, %v1444, 0
        %v1511 = vsel %vm373, %v1446, 0
        %v1514 = vsel %vm438, %v1448, 0
        %1516 = vmatprep.subr.mxu0 0.0
        %1517 = vmatpush1.msra.mxu0 %v1514
        %1518 = vmatprep.subr.mxu0 0.0
        %1519 = vmatpush1.msra.mxu0 0.0
        %1520 = vmatprep.subr.mxu0 0.0
        %1521 = vmatpush1.msra.mxu0 0.0
        %1522 = vmatprep.subr.mxu0 0.0
        %1523 = vmatpush1.msra.mxu0 0.0
        %1524 = vmatprep.subr.mxu0 0.0
        %1525 = vmatpush1.msra.mxu0 0.0
        %1526 = vmatprep.subr.mxu0 0.0
        %1527 = vmatpush1.msra.mxu0 0.0
        %1528 = vmatprep.subr.mxu0 0.0
        %1529 = vmatpush1.msra.mxu0 0.0
        %1530 = vmatprep.subr.mxu0 0.0
        %1531 = vmatpush1.msra.mxu0 0.0
        %1532 = vmatprep.subr.mxu0 0.0
        %1533 = vmatpush1.msra.mxu0 0.0
        %1534 = vmatprep.subr.mxu0 0.0
        %1535 = vmatpush1.msra.mxu0 0.0
        %1536 = vmatprep.subr.mxu0 0.0
        %1537 = vmatpush1.msra.mxu0 0.0
        %1538 = vmatprep.subr.mxu0 0.0
        %1539 = vmatpush1.msra.mxu0 0.0
        %1540 = vmatprep.subr.mxu0 0.0
        %1541 = vmatpush1.msra.mxu0 0.0
        %1542 = vmatprep.subr.mxu0 0.0
        %1543 = vmatpush1.msra.mxu0 0.0
        %1544 = vmatprep.subr.mxu0 0.0
        %1545 = vmatpush1.msra.mxu0 0.0
        %1546 = vmatprep.subr.mxu0 0.0
        %1547 = vmatpush1.msra.mxu0 0.0
        %1548 = vmatprep.subr.mxu0 0.0
        %1549 = vmatpush1.msra.mxu0 0.0
        %1550 = vmatprep.subr.mxu0 0.0
        %1551 = vmatpush1.msra.mxu0 0.0
        %1552 = vmatprep.subr.mxu0 0.0
        %1553 = vmatpush1.msra.mxu0 0.0
        %1554 = vmatprep.subr.mxu0 0.0
        %1555 = vmatpush1.msra.mxu0 0.0
        %1556 = vmatprep.subr.mxu0 0.0
        %1557 = vmatpush1.msra.mxu0 0.0
        %1558 = vmatprep.subr.mxu0 0.0
        %1559 = vmatpush1.msra.mxu0 0.0
        %1560 = vmatprep.subr.mxu0 0.0
        %1561 = vmatpush1.msra.mxu0 0.0
        %1562 = vmatprep.subr.mxu0 0.0
        %1563 = vmatpush1.msra.mxu0 0.0
        %1564 = vmatprep.subr.mxu0 0.0
        %1565 = vmatpush1.msra.mxu0 0.0
        %1566 = vmatprep.subr.mxu0 0.0
        %1567 = vmatpush1.msra.mxu0 0.0
        %1568 = vmatprep.subr.mxu0 0.0
        %1569 = vmatpush1.msra.mxu0 0.0
        %1570 = vmatprep.subr.mxu0 0.0
        %1571 = vmatpush1.msra.mxu0 0.0
        %1572 = vmatprep.subr.mxu0 0.0
        %1573 = vmatpush1.msra.mxu0 0.0
        %1574 = vmatprep.subr.mxu0 0.0
        %1575 = vmatpush1.msra.mxu0 0.0
        %1576 = vmatprep.subr.mxu0 0.0
        %1577 = vmatpush1.msra.mxu0 0.0
        %1578 = vmatprep.subr.mxu0 0.0
        %1579 = vmatpush1.msra.mxu0 0.0
        %1580 = vmatprep.mubr.f32.mxu0 0.0
        %1581 = vmatmul.mubr.f32.gmra.mrb[0].mxu0 %v1449
        %v1582 = vpop.f32.mrb[0].mxu0
        %v1583 = vadd.f32 0.0, %v1582
        %v1584 = vpop.f32.mrb[0].mxu0
        %1585 = vmatprep.mubr.f32.mxu0 0.0
        %1586 = vmatmul.mubr.f32.gmra.mrb[0].mxu0 %v1451
        %v1587 = vpop.f32.mrb[0].mxu0
        %v1588 = vadd.f32 0.0, %v1587
        %v1589 = vpop.f32.mrb[0].mxu0
        %1590 = vmatprep.mubr.f32.mxu0 0.0
        %1591 = vmatmul.mubr.f32.gmra.mrb[0].mxu0 %v1453
        %v1592 = vpop.f32.mrb[0].mxu0
        %v1593 = vadd.f32 0.0, %v1592
        %v1594 = vpop.f32.mrb[0].mxu0
        %1595 = vmatprep.mubr.f32.mxu0 0.0
        %1596 = vmatmul.mubr.f32.gmra.mrb[0].mxu0 %v1455
        %v1597 = vpop.f32.mrb[0].mxu0
        %v1598 = vadd.f32 0.0, %v1597
        %v1599 = vpop.f32.mrb[0].mxu0
        %1600 = vmatprep.mubr.f32.mxu0 0.0
        %1601 = vmatmul.mubr.f32.gmra.mrb[0].mxu0 %v1457
        %v1602 = vpop.f32.mrb[0].mxu0
        %v1603 = vadd.f32 0.0, %v1602
        %v1604 = vpop.f32.mrb[0].mxu0
        %1605 = vmatprep.mubr.f32.mxu0 0.0
        %1606 = vmatmul.mubr.f32.gmra.mrb[0].mxu0 %v1459
        %v1607 = vpop.f32.mrb[0].mxu0
        %v1608 = vadd.f32 0.0, %v1607
        %v1609 = vpop.f32.mrb[0].mxu0
        %1610 = vmatprep.mubr.f32.mxu0 0.0
        %1611 = vmatmul.mubr.f32.gmra.mrb[0].mxu0 %v1461
        %v1612 = vpop.f32.mrb[0].mxu0
        %v1613 = vadd.f32 0.0, %v1612
        %v1614 = vpop.f32.mrb[0].mxu0
        %1615 = vmatprep.mubr.f32.mxu0 0.0
        %1616 = vmatmul.mubr.f32.gmra.mrb[0].mxu0 %v1463
        %v1617 = vpop.f32.mrb[0].mxu0
        %v1618 = vadd.f32 0.0, %v1617
        %v1619 = vpop.f32.mrb[0].mxu0
        %1620 = vmatprep.mubr.f32.mxu0 0.0
        %1621 = vmatmul.mubr.f32.gmra.mrb[0].mxu0 %v1465
        %v1622 = vpop.f32.mrb[0].mxu0
        %v1623 = vadd.f32 0.0, %v1622
        %v1624 = vpop.f32.mrb[0].mxu0
        %1625 = vmatprep.mubr.f32.mxu0 0.0
        %1626 = vmatmul.mubr.f32.gmra.mrb[0].mxu0 %v1467
        %v1627 = vpop.f32.mrb[0].mxu0
        %v1628 = vadd.f32 0.0, %v1627
        %v1629 = vpop.f32.mrb[0].mxu0
        %1630 = vmatprep.mubr.f32.mxu0 0.0
        %1631 = vmatmul.mubr.f32.gmra.mrb[0].mxu0 %v1469
        %v1632 = vpop.f32.mrb[0].mxu0
        %v1633 = vadd.f32 0.0, %v1632
        %v1634 = vpop.f32.mrb[0].mxu0
        %1635 = vmatprep.mubr.f32.mxu0 0.0
        %1636 = vmatmul.mubr.f32.gmra.mrb[0].mxu0 %v1471
        %v1637 = vpop.f32.mrb[0].mxu0
        %v1638 = vadd.f32 0.0, %v1637
        %v1639 = vpop.f32.mrb[0].mxu0
        %1640 = vmatprep.mubr.f32.mxu0 0.0
        %1641 = vmatmul.mubr.f32.gmra.mrb[0].mxu0 %v1473
        %v1642 = vpop.f32.mrb[0].mxu0
        %v1643 = vadd.f32 0.0, %v1642
        %v1644 = vpop.f32.mrb[0].mxu0
        %1645 = vmatprep.mubr.f32.mxu0 0.0
        %1646 = vmatmul.mubr.f32.gmra.mrb[0].mxu0 %v1475
        %v1647 = vpop.f32.mrb[0].mxu0
        %v1648 = vadd.f32 0.0, %v1647
        %v1649 = vpop.f32.mrb[0].mxu0
        %1650 = vmatprep.mubr.f32.mxu0 0.0
        %1651 = vmatmul.mubr.f32.gmra.mrb[0].mxu0 %v1477
        %v1652 = vpop.f32.mrb[0].mxu0
        %v1653 = vadd.f32 0.0, %v1652
        %v1654 = vpop.f32.mrb[0].mxu0
        %1655 = vmatprep.mubr.f32.mxu0 0.0
        %1656 = vmatmul.mubr.f32.gmra.mrb[0].mxu0 %v1479
        %v1657 = vpop.f32.mrb[0].mxu0
        %v1658 = vadd.f32 0.0, %v1657
        %v1659 = vpop.f32.mrb[0].mxu0
        %1660 = vmatprep.mubr.f32.mxu0 0.0
        %1661 = vmatmul.mubr.f32.gmra.mrb[0].mxu0 %v1481
        %v1662 = vpop.f32.mrb[0].mxu0
        %v1663 = vadd.f32 0.0, %v1662
        %v1664 = vpop.f32.mrb[0].mxu0
        %1665 = vmatprep.mubr.f32.mxu0 0.0
        %1666 = vmatmul.mubr.f32.gmra.mrb[0].mxu0 %v1483
        %v1667 = vpop.f32.mrb[0].mxu0
        %v1668 = vadd.f32 0.0, %v1667
        %v1669 = vpop.f32.mrb[0].mxu0
        %1670 = vmatprep.mubr.f32.mxu0 0.0
        %1671 = vmatmul.mubr.f32.gmra.mrb[0].mxu0 %v1485
        %v1672 = vpop.f32.mrb[0].mxu0
        %v1673 = vadd.f32 0.0, %v1672
        %v1674 = vpop.f32.mrb[0].mxu0
        %1675 = vmatprep.mubr.f32.mxu0 0.0
        %1676 = vmatmul.mubr.f32.gmra.mrb[0].mxu0 %v1487
        %v1677 = vpop.f32.mrb[0].mxu0
        %v1678 = vadd.f32 0.0, %v1677
        %v1679 = vpop.f32.mrb[0].mxu0
        %1680 = vmatprep.mubr.f32.mxu0 0.0
        %1681 = vmatmul.mubr.f32.gmra.mrb[0].mxu0 %v1489
        %v1682 = vpop.f32.mrb[0].mxu0
        %v1683 = vadd.f32 0.0, %v1682
        %v1684 = vpop.f32.mrb[0].mxu0
        %1685 = vmatprep.mubr.f32.mxu0 0.0
        %1686 = vmatmul.mubr.f32.gmra.mrb[0].mxu0 %v1491
        %v1687 = vpop.f32.mrb[0].mxu0
        %v1688 = vadd.f32 0.0, %v1687
        %v1689 = vpop.f32.mrb[0].mxu0
        %1690 = vmatprep.mubr.f32.mxu0 0.0
        %1691 = vmatmul.mubr.f32.gmra.mrb[0].mxu0 %v1493
        %v1692 = vpop.f32.mrb[0].mxu0
        %v1693 = vadd.f32 0.0, %v1692
        %v1694 = vpop.f32.mrb[0].mxu0
        %1695 = vmatprep.mubr.f32.mxu0 0.0
        %1696 = vmatmul.mubr.f32.gmra.mrb[0].mxu0 %v1495
        %v1697 = vpop.f32.mrb[0].mxu0
        %v1698 = vadd.f32 0.0, %v1697
        %v1699 = vpop.f32.mrb[0].mxu0
        %1700 = vmatprep.mubr.f32.mxu0 0.0
        %1701 = vmatmul.mubr.f32.gmra.mrb[0].mxu0 %v1497
        %v1702 = vpop.f32.mrb[0].mxu0
        %v1703 = vadd.f32 0.0, %v1702
        %v1704 = vpop.f32.mrb[0].mxu0
        %1705 = vmatprep.mubr.f32.mxu0 0.0
        %1706 = vmatmul.mubr.f32.gmra.mrb[0].mxu0 %v1499
        %v1707 = vpop.f32.mrb[0].mxu0
        %v1708 = vadd.f32 0.0, %v1707
        %v1709 = vpop.f32.mrb[0].mxu0
        %1710 = vmatprep.mubr.f32.mxu0 0.0
        %1711 = vmatmul.mubr.f32.gmra.mrb[0].mxu0 %v1501
        %v1712 = vpop.f32.mrb[0].mxu0
        %v1713 = vadd.f32 0.0, %v1712
        %v1714 = vpop.f32.mrb[0].mxu0
        %1715 = vmatprep.mubr.f32.mxu0 0.0
        %1716 = vmatmul.mubr.f32.gmra.mrb[0].mxu0 %v1503
        %v1717 = vpop.f32.mrb[0].mxu0
        %v1718 = vadd.f32 0.0, %v1717
        %v1719 = vpop.f32.mrb[0].mxu0
        %1720 = vmatprep.mubr.f32.mxu0 0.0
        %1721 = vmatmul.mubr.f32.gmra.mrb[0].mxu0 %v1505
        %v1722 = vpop.f32.mrb[0].mxu0
        %v1723 = vadd.f32 0.0, %v1722
        %v1724 = vpop.f32.mrb[0].mxu0
        %1725 = vmatprep.mubr.f32.mxu0 0.0
        %1726 = vmatmul.mubr.f32.gmra.mrb[0].mxu0 %v1507
        %v1727 = vpop.f32.mrb[0].mxu0
        %v1728 = vadd.f32 0.0, %v1727
        %v1729 = vpop.f32.mrb[0].mxu0
        %1730 = vmatprep.mubr.f32.mxu0 0.0
        %1731 = vmatmul.mubr.f32.gmra.mrb[0].mxu0 %v1509
        %v1732 = vpop.f32.mrb[0].mxu0
        %v1733 = vadd.f32 0.0, %v1732
        %v1734 = vpop.f32.mrb[0].mxu0
        %1735 = vmatprep.mubr.f32.mxu0 0.0
        %1736 = vmatmul.mubr.f32.gmra.mrb[0].mxu0 %v1511
        %v1737 = vpop.f32.mrb[0].mxu0
        %v1738 = vadd.f32 0.0, %v1737
        %v1739 = vpop.f32.mrb[0].mxu0
        %1740 = vdwg.mxu0
        %v1741 = vadd.f32 %v1334, %v1583
        %v1742 = vadd.f32 %v1335, %v1588
        %v1743 = vadd.f32 %v1336, %v1593
        %v1744 = vadd.f32 %v1337, %v1598
        %v1745 = vadd.f32 %v1338, %v1603
        %v1746 = vadd.f32 %v1339, %v1608
        %v1747 = vadd.f32 %v1340, %v1613
        %v1748 = vadd.f32 %v1341, %v1618
        %v1749 = vadd.f32 %v1342, %v1623
        %v1750 = vadd.f32 %v1343, %v1628
        %v1751 = vadd.f32 %v1344, %v1633
        %v1752 = vadd.f32 %v1345, %v1638
        %v1753 = vadd.f32 %v1346, %v1643
        %v1754 = vadd.f32 %v1347, %v1648
        %v1755 = vadd.f32 %v1348, %v1653
        %v1756 = vadd.f32 %v1349, %v1658
        %v1757 = vadd.f32 %v1350, %v1663
        %v1758 = vadd.f32 %v1351, %v1668
        %v1759 = vadd.f32 %v1352, %v1673
        %v1760 = vadd.f32 %v1353, %v1678
        %v1761 = vadd.f32 %v1354, %v1683
        %v1762 = vadd.f32 %v1355, %v1688
        %v1763 = vadd.f32 %v1356, %v1693
        %v1764 = vadd.f32 %v1357, %v1698
        %v1765 = vadd.f32 %v1358, %v1703
        %v1766 = vadd.f32 %v1359, %v1708
        %v1767 = vadd.f32 %v1360, %v1713
        %v1768 = vadd.f32 %v1361, %v1718
        %v1769 = vadd.f32 %v1362, %v1723
        %v1770 = vadd.f32 %v1363, %v1728
        %v1771 = vadd.f32 %v1364, %v1733
        %v1772 = vadd.f32 %v1365, %v1738
        %s1773 = scalar_lea.vmem %s1, 16
        %v1774 = vld [vmem:[%s1773] sm:$0xf]
        %v1776 = vsel %vm373, %v232, 0
        %v1779 = vsel %vm373, %v233, 0
        %v1782 = vsel %vm438, %v1774, 0
        %1784 = vmatprep.subr.mxu0 0.0
        %1785 = vmatpush1.msra.mxu0 %v1782
        %1786 = vmatprep.subr.mxu0 0.0
        %1787 = vmatpush1.msra.mxu0 0.0
        %1788 = vmatprep.subr.mxu0 0.0
        %1789 = vmatpush1.msra.mxu0 0.0
        %1790 = vmatprep.subr.mxu0 0.0
        %1791 = vmatpush1.msra.mxu0 0.0
        %1792 = vmatprep.subr.mxu0 0.0
        %1793 = vmatpush1.msra.mxu0 0.0
        %1794 = vmatprep.subr.mxu0 0.0
        %1795 = vmatpush1.msra.mxu0 0.0
        %1796 = vmatprep.subr.mxu0 0.0
        %1797 = vmatpush1.msra.mxu0 0.0
        %1798 = vmatprep.subr.mxu0 0.0
        %1799 = vmatpush1.msra.mxu0 0.0
        %1800 = vmatprep.subr.mxu0 0.0
        %1801 = vmatpush1.msra.mxu0 0.0
        %1802 = vmatprep.subr.mxu0 0.0
        %1803 = vmatpush1.msra.mxu0 0.0
        %1804 = vmatprep.subr.mxu0 0.0
        %1805 = vmatpush1.msra.mxu0 0.0
        %1806 = vmatprep.subr.mxu0 0.0
        %1807 = vmatpush1.msra.mxu0 0.0
        %1808 = vmatprep.subr.mxu0 0.0
        %1809 = vmatpush1.msra.mxu0 0.0
        %1810 = vmatprep.subr.mxu0 0.0
        %1811 = vmatpush1.msra.mxu0 0.0
        %1812 = vmatprep.subr.mxu0 0.0
        %1813 = vmatpush1.msra.mxu0 0.0
        %1814 = vmatprep.subr.mxu0 0.0
        %1815 = vmatpush1.msra.mxu0 0.0
        %1816 = vmatprep.subr.mxu0 0.0
        %1817 = vmatpush1.msra.mxu0 0.0
        %1818 = vmatprep.subr.mxu0 0.0
        %1819 = vmatpush1.msra.mxu0 0.0
        %1820 = vmatprep.subr.mxu0 0.0
        %1821 = vmatpush1.msra.mxu0 0.0
        %1822 = vmatprep.subr.mxu0 0.0
        %1823 = vmatpush1.msra.mxu0 0.0
        %1824 = vmatprep.subr.mxu0 0.0
        %1825 = vmatpush1.msra.mxu0 0.0
        %1826 = vmatprep.subr.mxu0 0.0
        %1827 = vmatpush1.msra.mxu0 0.0
        %1828 = vmatprep.subr.mxu0 0.0
        %1829 = vmatpush1.msra.mxu0 0.0
        %1830 = vmatprep.subr.mxu0 0.0
        %1831 = vmatpush1.msra.mxu0 0.0
        %1832 = vmatprep.subr.mxu0 0.0
        %1833 = vmatpush1.msra.mxu0 0.0
        %1834 = vmatprep.subr.mxu0 0.0
        %1835 = vmatpush1.msra.mxu0 0.0
        %1836 = vmatprep.subr.mxu0 0.0
        %1837 = vmatpush1.msra.mxu0 0.0
        %1838 = vmatprep.subr.mxu0 0.0
        %1839 = vmatpush1.msra.mxu0 0.0
        %1840 = vmatprep.subr.mxu0 0.0
        %1841 = vmatpush1.msra.mxu0 0.0
        %1842 = vmatprep.subr.mxu0 0.0
        %1843 = vmatpush1.msra.mxu0 0.0
        %1844 = vmatprep.subr.mxu0 0.0
        %1845 = vmatpush1.msra.mxu0 0.0
        %1846 = vmatprep.subr.mxu0 0.0
        %1847 = vmatpush1.msra.mxu0 0.0
        %1848 = vmatprep.mubr.f32.mxu0 0.0
        %1849 = vmatmul.mubr.f32.gmra.mrb[0].mxu0 %v671
        %v1850 = vpop.f32.mrb[0].mxu0
        %v1851 = vadd.f32 0.0, %v1850
        %v1852 = vpop.f32.mrb[0].mxu0
        %1853 = vmatprep.mubr.f32.mxu0 0.0
        %1854 = vmatmul.mubr.f32.gmra.mrb[0].mxu0 %v673
        %v1855 = vpop.f32.mrb[0].mxu0
        %v1856 = vadd.f32 0.0, %v1855
        %v1857 = vpop.f32.mrb[0].mxu0
        %1858 = vmatprep.mubr.f32.mxu0 0.0
        %1859 = vmatmul.mubr.f32.gmra.mrb[0].mxu0 %v675
        %v1860 = vpop.f32.mrb[0].mxu0
        %v1861 = vadd.f32 0.0, %v1860
        %v1862 = vpop.f32.mrb[0].mxu0
        %1863 = vmatprep.mubr.f32.mxu0 0.0
        %1864 = vmatmul.mubr.f32.gmra.mrb[0].mxu0 %v677
        %v1865 = vpop.f32.mrb[0].mxu0
        %v1866 = vadd.f32 0.0, %v1865
        %v1867 = vpop.f32.mrb[0].mxu0
        %1868 = vmatprep.mubr.f32.mxu0 0.0
        %1869 = vmatmul.mubr.f32.gmra.mrb[0].mxu0 %v679
        %v1870 = vpop.f32.mrb[0].mxu0
        %v1871 = vadd.f32 0.0, %v1870
        %v1872 = vpop.f32.mrb[0].mxu0
        %1873 = vmatprep.mubr.f32.mxu0 0.0
        %1874 = vmatmul.mubr.f32.gmra.mrb[0].mxu0 %v681
        %v1875 = vpop.f32.mrb[0].mxu0
        %v1876 = vadd.f32 0.0, %v1875
        %v1877 = vpop.f32.mrb[0].mxu0
        %1878 = vmatprep.mubr.f32.mxu0 0.0
        %1879 = vmatmul.mubr.f32.gmra.mrb[0].mxu0 %v683
        %v1880 = vpop.f32.mrb[0].mxu0
        %v1881 = vadd.f32 0.0, %v1880
        %v1882 = vpop.f32.mrb[0].mxu0
        %1883 = vmatprep.mubr.f32.mxu0 0.0
        %1884 = vmatmul.mubr.f32.gmra.mrb[0].mxu0 %v685
        %v1885 = vpop.f32.mrb[0].mxu0
        %v1886 = vadd.f32 0.0, %v1885
        %v1887 = vpop.f32.mrb[0].mxu0
        %1888 = vmatprep.mubr.f32.mxu0 0.0
        %1889 = vmatmul.mubr.f32.gmra.mrb[0].mxu0 %v687
        %v1890 = vpop.f32.mrb[0].mxu0
        %v1891 = vadd.f32 0.0, %v1890
        %v1892 = vpop.f32.mrb[0].mxu0
        %1893 = vmatprep.mubr.f32.mxu0 0.0
        %1894 = vmatmul.mubr.f32.gmra.mrb[0].mxu0 %v689
        %v1895 = vpop.f32.mrb[0].mxu0
        %v1896 = vadd.f32 0.0, %v1895
        %v1897 = vpop.f32.mrb[0].mxu0
        %1898 = vmatprep.mubr.f32.mxu0 0.0
        %1899 = vmatmul.mubr.f32.gmra.mrb[0].mxu0 %v691
        %v1900 = vpop.f32.mrb[0].mxu0
        %v1901 = vadd.f32 0.0, %v1900
        %v1902 = vpop.f32.mrb[0].mxu0
        %1903 = vmatprep.mubr.f32.mxu0 0.0
        %1904 = vmatmul.mubr.f32.gmra.mrb[0].mxu0 %v693
        %v1905 = vpop.f32.mrb[0].mxu0
        %v1906 = vadd.f32 0.0, %v1905
        %v1907 = vpop.f32.mrb[0].mxu0
        %1908 = vmatprep.mubr.f32.mxu0 0.0
        %1909 = vmatmul.mubr.f32.gmra.mrb[0].mxu0 %v695
        %v1910 = vpop.f32.mrb[0].mxu0
        %v1911 = vadd.f32 0.0, %v1910
        %v1912 = vpop.f32.mrb[0].mxu0
        %1913 = vmatprep.mubr.f32.mxu0 0.0
        %1914 = vmatmul.mubr.f32.gmra.mrb[0].mxu0 %v697
        %v1915 = vpop.f32.mrb[0].mxu0
        %v1916 = vadd.f32 0.0, %v1915
        %v1917 = vpop.f32.mrb[0].mxu0
        %1918 = vmatprep.mubr.f32.mxu0 0.0
        %1919 = vmatmul.mubr.f32.gmra.mrb[0].mxu0 %v699
        %v1920 = vpop.f32.mrb[0].mxu0
        %v1921 = vadd.f32 0.0, %v1920
        %v1922 = vpop.f32.mrb[0].mxu0
        %1923 = vmatprep.mubr.f32.mxu0 0.0
        %1924 = vmatmul.mubr.f32.gmra.mrb[0].mxu0 %v701
        %v1925 = vpop.f32.mrb[0].mxu0
        %v1926 = vadd.f32 0.0, %v1925
        %v1927 = vpop.f32.mrb[0].mxu0
        %1928 = vmatprep.mubr.f32.mxu0 0.0
        %1929 = vmatmul.mubr.f32.gmra.mrb[0].mxu0 %v703
        %v1930 = vpop.f32.mrb[0].mxu0
        %v1931 = vadd.f32 0.0, %v1930
        %v1932 = vpop.f32.mrb[0].mxu0
        %1933 = vmatprep.mubr.f32.mxu0 0.0
        %1934 = vmatmul.mubr.f32.gmra.mrb[0].mxu0 %v705
        %v1935 = vpop.f32.mrb[0].mxu0
        %v1936 = vadd.f32 0.0, %v1935
        %v1937 = vpop.f32.mrb[0].mxu0
        %1938 = vmatprep.mubr.f32.mxu0 0.0
        %1939 = vmatmul.mubr.f32.gmra.mrb[0].mxu0 %v707
        %v1940 = vpop.f32.mrb[0].mxu0
        %v1941 = vadd.f32 0.0, %v1940
        %v1942 = vpop.f32.mrb[0].mxu0
        %1943 = vmatprep.mubr.f32.mxu0 0.0
        %1944 = vmatmul.mubr.f32.gmra.mrb[0].mxu0 %v709
        %v1945 = vpop.f32.mrb[0].mxu0
        %v1946 = vadd.f32 0.0, %v1945
        %v1947 = vpop.f32.mrb[0].mxu0
        %1948 = vmatprep.mubr.f32.mxu0 0.0
        %1949 = vmatmul.mubr.f32.gmra.mrb[0].mxu0 %v711
        %v1950 = vpop.f32.mrb[0].mxu0
        %v1951 = vadd.f32 0.0, %v1950
        %v1952 = vpop.f32.mrb[0].mxu0
        %1953 = vmatprep.mubr.f32.mxu0 0.0
        %1954 = vmatmul.mubr.f32.gmra.mrb[0].mxu0 %v713
        %v1955 = vpop.f32.mrb[0].mxu0
        %v1956 = vadd.f32 0.0, %v1955
        %v1957 = vpop.f32.mrb[0].mxu0
        %1958 = vmatprep.mubr.f32.mxu0 0.0
        %1959 = vmatmul.mubr.f32.gmra.mrb[0].mxu0 %v715
        %v1960 = vpop.f32.mrb[0].mxu0
        %v1961 = vadd.f32 0.0, %v1960
        %v1962 = vpop.f32.mrb[0].mxu0
        %1963 = vmatprep.mubr.f32.mxu0 0.0
        %1964 = vmatmul.mubr.f32.gmra.mrb[0].mxu0 %v717
        %v1965 = vpop.f32.mrb[0].mxu0
        %v1966 = vadd.f32 0.0, %v1965
        %v1967 = vpop.f32.mrb[0].mxu0
        %1968 = vmatprep.mubr.f32.mxu0 0.0
        %1969 = vmatmul.mubr.f32.gmra.mrb[0].mxu0 %v719
        %v1970 = vpop.f32.mrb[0].mxu0
        %v1971 = vadd.f32 0.0, %v1970
        %v1972 = vpop.f32.mrb[0].mxu0
        %1973 = vmatprep.mubr.f32.mxu0 0.0
        %1974 = vmatmul.mubr.f32.gmra.mrb[0].mxu0 %v721
        %v1975 = vpop.f32.mrb[0].mxu0
        %v1976 = vadd.f32 0.0, %v1975
        %v1977 = vpop.f32.mrb[0].mxu0
        %1978 = vmatprep.mubr.f32.mxu0 0.0
        %1979 = vmatmul.mubr.f32.gmra.mrb[0].mxu0 %v723
        %v1980 = vpop.f32.mrb[0].mxu0
        %v1981 = vadd.f32 0.0, %v1980
        %v1982 = vpop.f32.mrb[0].mxu0
        %1983 = vmatprep.mubr.f32.mxu0 0.0
        %1984 = vmatmul.mubr.f32.gmra.mrb[0].mxu0 %v725
        %v1985 = vpop.f32.mrb[0].mxu0
        %v1986 = vadd.f32 0.0, %v1985
        %v1987 = vpop.f32.mrb[0].mxu0
        %1988 = vmatprep.mubr.f32.mxu0 0.0
        %1989 = vmatmul.mubr.f32.gmra.mrb[0].mxu0 %v727
        %v1990 = vpop.f32.mrb[0].mxu0
        %v1991 = vadd.f32 0.0, %v1990
        %v1992 = vpop.f32.mrb[0].mxu0
        %1993 = vmatprep.mubr.f32.mxu0 0.0
        %1994 = vmatmul.mubr.f32.gmra.mrb[0].mxu0 %v729
        %v1995 = vpop.f32.mrb[0].mxu0
        %v1996 = vadd.f32 0.0, %v1995
        %v1997 = vpop.f32.mrb[0].mxu0
        %1998 = vmatprep.mubr.f32.mxu0 0.0
        %1999 = vmatmul.mubr.f32.gmra.mrb[0].mxu0 %v1776
        %v2000 = vpop.f32.mrb[0].mxu0
        %v2001 = vadd.f32 0.0, %v2000
        %v2002 = vpop.f32.mrb[0].mxu0
        %2003 = vmatprep.mubr.f32.mxu0 0.0
        %2004 = vmatmul.mubr.f32.gmra.mrb[0].mxu0 %v1779
        %v2005 = vpop.f32.mrb[0].mxu0
        %v2006 = vadd.f32 0.0, %v2005
        %v2007 = vpop.f32.mrb[0].mxu0
        %2008 = vdwg.mxu0
        %v2009 = vadd.f32 %v1741, %v1851
        %v2010 = vadd.f32 %v1742, %v1856
        %v2011 = vadd.f32 %v1743, %v1861
        %v2012 = vadd.f32 %v1744, %v1866
        %v2013 = vadd.f32 %v1745, %v1871
        %v2014 = vadd.f32 %v1746, %v1876
        %v2015 = vadd.f32 %v1747, %v1881
        %v2016 = vadd.f32 %v1748, %v1886
        %v2017 = vadd.f32 %v1749, %v1891
        %v2018 = vadd.f32 %v1750, %v1896
        %v2019 = vadd.f32 %v1751, %v1901
        %v2020 = vadd.f32 %v1752, %v1906
        %v2021 = vadd.f32 %v1753, %v1911
        %v2022 = vadd.f32 %v1754, %v1916
        %v2023 = vadd.f32 %v1755, %v1921
        %v2024 = vadd.f32 %v1756, %v1926
        %v2025 = vadd.f32 %v1757, %v1931
        %v2026 = vadd.f32 %v1758, %v1936
        %v2027 = vadd.f32 %v1759, %v1941
        %v2028 = vadd.f32 %v1760, %v1946
        %v2029 = vadd.f32 %v1761, %v1951
        %v2030 = vadd.f32 %v1762, %v1956
        %v2031 = vadd.f32 %v1763, %v1961
        %v2032 = vadd.f32 %v1764, %v1966
        %v2033 = vadd.f32 %v1765, %v1971
        %v2034 = vadd.f32 %v1766, %v1976
        %v2035 = vadd.f32 %v1767, %v1981
        %v2036 = vadd.f32 %v1768, %v1986
        %v2037 = vadd.f32 %v1769, %v1991
        %v2038 = vadd.f32 %v1770, %v1996
        %v2039 = vadd.f32 %v1771, %v2001
        %v2040 = vadd.f32 %v1772, %v2006
        %v2042 = vrot.slane %v232, 1
        %v2043 = vrot.slane %v233, 1
        %v2044 = vsel %vm290, %v2042, %v2043
        %v2045 = vrot.slane %v234, 1
        %v2046 = vsel %vm290, %v2043, %v2045
        %s2047 = scalar_lea.vmem %s1, 20
        %v2048 = vld [vmem:[%s2047] sm:$0xf]
        %v2049 = vsel %vm373, %v2044, 0
        %v2051 = vsel %vm373, %v2046, 0
        %v2054 = vsel %vm438, %v2048, 0
        %2056 = vmatprep.subr.mxu0 0.0
        %2057 = vmatpush1.msra.mxu0 %v2054
        %2058 = vmatprep.subr.mxu0 0.0
        %2059 = vmatpush1.msra.mxu0 0.0
        %2060 = vmatprep.subr.mxu0 0.0
        %2061 = vmatpush1.msra.mxu0 0.0
        %2062 = vmatprep.subr.mxu0 0.0
        %2063 = vmatpush1.msra.mxu0 0.0
        %2064 = vmatprep.subr.mxu0 0.0
        %2065 = vmatpush1.msra.mxu0 0.0
        %2066 = vmatprep.subr.mxu0 0.0
        %2067 = vmatpush1.msra.mxu0 0.0
        %2068 = vmatprep.subr.mxu0 0.0
        %2069 = vmatpush1.msra.mxu0 0.0
        %2070 = vmatprep.subr.mxu0 0.0
        %2071 = vmatpush1.msra.mxu0 0.0
        %2072 = vmatprep.subr.mxu0 0.0
        %2073 = vmatpush1.msra.mxu0 0.0
        %2074 = vmatprep.subr.mxu0 0.0
        %2075 = vmatpush1.msra.mxu0 0.0
        %2076 = vmatprep.subr.mxu0 0.0
        %2077 = vmatpush1.msra.mxu0 0.0
        %2078 = vmatprep.subr.mxu0 0.0
        %2079 = vmatpush1.msra.mxu0 0.0
        %2080 = vmatprep.subr.mxu0 0.0
        %2081 = vmatpush1.msra.mxu0 0.0
        %2082 = vmatprep.subr.mxu0 0.0
        %2083 = vmatpush1.msra.mxu0 0.0
        %2084 = vmatprep.subr.mxu0 0.0
        %2085 = vmatpush1.msra.mxu0 0.0
        %2086 = vmatprep.subr.mxu0 0.0
        %2087 = vmatpush1.msra.mxu0 0.0
        %2088 = vmatprep.subr.mxu0 0.0
        %2089 = vmatpush1.msra.mxu0 0.0
        %2090 = vmatprep.subr.mxu0 0.0
        %2091 = vmatpush1.msra.mxu0 0.0
        %2092 = vmatprep.subr.mxu0 0.0
        %2093 = vmatpush1.msra.mxu0 0.0
        %2094 = vmatprep.subr.mxu0 0.0
        %2095 = vmatpush1.msra.mxu0 0.0
        %2096 = vmatprep.subr.mxu0 0.0
        %2097 = vmatpush1.msra.mxu0 0.0
        %2098 = vmatprep.subr.mxu0 0.0
        %2099 = vmatpush1.msra.mxu0 0.0
        %2100 = vmatprep.subr.mxu0 0.0
        %2101 = vmatpush1.msra.mxu0 0.0
        %2102 = vmatprep.subr.mxu0 0.0
        %2103 = vmatpush1.msra.mxu0 0.0
        %2104 = vmatprep.subr.mxu0 0.0
        %2105 = vmatpush1.msra.mxu0 0.0
        %2106 = vmatprep.subr.mxu0 0.0
        %2107 = vmatpush1.msra.mxu0 0.0
        %2108 = vmatprep.subr.mxu0 0.0
        %2109 = vmatpush1.msra.mxu0 0.0
        %2110 = vmatprep.subr.mxu0 0.0
        %2111 = vmatpush1.msra.mxu0 0.0
        %2112 = vmatprep.subr.mxu0 0.0
        %2113 = vmatpush1.msra.mxu0 0.0
        %2114 = vmatprep.subr.mxu0 0.0
        %2115 = vmatpush1.msra.mxu0 0.0
        %2116 = vmatprep.subr.mxu0 0.0
        %2117 = vmatpush1.msra.mxu0 0.0
        %2118 = vmatprep.subr.mxu0 0.0
        %2119 = vmatpush1.msra.mxu0 0.0
        %2120 = vmatprep.mubr.f32.mxu0 0.0
        %2121 = vmatmul.mubr.f32.gmra.mrb[0].mxu0 %v378
        %v2122 = vpop.f32.mrb[0].mxu0
        %v2123 = vadd.f32 0.0, %v2122
        %v2124 = vpop.f32.mrb[0].mxu0
        %2125 = vmatprep.mubr.f32.mxu0 0.0
        %2126 = vmatmul.mubr.f32.gmra.mrb[0].mxu0 %v380
        %v2127 = vpop.f32.mrb[0].mxu0
        %v2128 = vadd.f32 0.0, %v2127
        %v2129 = vpop.f32.mrb[0].mxu0
        %2130 = vmatprep.mubr.f32.mxu0 0.0
        %2131 = vmatmul.mubr.f32.gmra.mrb[0].mxu0 %v382
        %v2132 = vpop.f32.mrb[0].mxu0
        %v2133 = vadd.f32 0.0, %v2132
        %v2134 = vpop.f32.mrb[0].mxu0
        %2135 = vmatprep.mubr.f32.mxu0 0.0
        %2136 = vmatmul.mubr.f32.gmra.mrb[0].mxu0 %v384
        %v2137 = vpop.f32.mrb[0].mxu0
        %v2138 = vadd.f32 0.0, %v2137
        %v2139 = vpop.f32.mrb[0].mxu0
        %2140 = vmatprep.mubr.f32.mxu0 0.0
        %2141 = vmatmul.mubr.f32.gmra.mrb[0].mxu0 %v386
        %v2142 = vpop.f32.mrb[0].mxu0
        %v2143 = vadd.f32 0.0, %v2142
        %v2144 = vpop.f32.mrb[0].mxu0
        %2145 = vmatprep.mubr.f32.mxu0 0.0
        %2146 = vmatmul.mubr.f32.gmra.mrb[0].mxu0 %v388
        %v2147 = vpop.f32.mrb[0].mxu0
        %v2148 = vadd.f32 0.0, %v2147
        %v2149 = vpop.f32.mrb[0].mxu0
        %2150 = vmatprep.mubr.f32.mxu0 0.0
        %2151 = vmatmul.mubr.f32.gmra.mrb[0].mxu0 %v390
        %v2152 = vpop.f32.mrb[0].mxu0
        %v2153 = vadd.f32 0.0, %v2152
        %v2154 = vpop.f32.mrb[0].mxu0
        %2155 = vmatprep.mubr.f32.mxu0 0.0
        %2156 = vmatmul.mubr.f32.gmra.mrb[0].mxu0 %v392
        %v2157 = vpop.f32.mrb[0].mxu0
        %v2158 = vadd.f32 0.0, %v2157
        %v2159 = vpop.f32.mrb[0].mxu0
        %2160 = vmatprep.mubr.f32.mxu0 0.0
        %2161 = vmatmul.mubr.f32.gmra.mrb[0].mxu0 %v394
        %v2162 = vpop.f32.mrb[0].mxu0
        %v2163 = vadd.f32 0.0, %v2162
        %v2164 = vpop.f32.mrb[0].mxu0
        %2165 = vmatprep.mubr.f32.mxu0 0.0
        %2166 = vmatmul.mubr.f32.gmra.mrb[0].mxu0 %v396
        %v2167 = vpop.f32.mrb[0].mxu0
        %v2168 = vadd.f32 0.0, %v2167
        %v2169 = vpop.f32.mrb[0].mxu0
        %2170 = vmatprep.mubr.f32.mxu0 0.0
        %2171 = vmatmul.mubr.f32.gmra.mrb[0].mxu0 %v398
        %v2172 = vpop.f32.mrb[0].mxu0
        %v2173 = vadd.f32 0.0, %v2172
        %v2174 = vpop.f32.mrb[0].mxu0
        %2175 = vmatprep.mubr.f32.mxu0 0.0
        %2176 = vmatmul.mubr.f32.gmra.mrb[0].mxu0 %v400
        %v2177 = vpop.f32.mrb[0].mxu0
        %v2178 = vadd.f32 0.0, %v2177
        %v2179 = vpop.f32.mrb[0].mxu0
        %2180 = vmatprep.mubr.f32.mxu0 0.0
        %2181 = vmatmul.mubr.f32.gmra.mrb[0].mxu0 %v402
        %v2182 = vpop.f32.mrb[0].mxu0
        %v2183 = vadd.f32 0.0, %v2182
        %v2184 = vpop.f32.mrb[0].mxu0
        %2185 = vmatprep.mubr.f32.mxu0 0.0
        %2186 = vmatmul.mubr.f32.gmra.mrb[0].mxu0 %v404
        %v2187 = vpop.f32.mrb[0].mxu0
        %v2188 = vadd.f32 0.0, %v2187
        %v2189 = vpop.f32.mrb[0].mxu0
        %2190 = vmatprep.mubr.f32.mxu0 0.0
        %2191 = vmatmul.mubr.f32.gmra.mrb[0].mxu0 %v406
        %v2192 = vpop.f32.mrb[0].mxu0
        %v2193 = vadd.f32 0.0, %v2192
        %v2194 = vpop.f32.mrb[0].mxu0
        %2195 = vmatprep.mubr.f32.mxu0 0.0
        %2196 = vmatmul.mubr.f32.gmra.mrb[0].mxu0 %v408
        %v2197 = vpop.f32.mrb[0].mxu0
        %v2198 = vadd.f32 0.0, %v2197
        %v2199 = vpop.f32.mrb[0].mxu0
        %2200 = vmatprep.mubr.f32.mxu0 0.0
        %2201 = vmatmul.mubr.f32.gmra.mrb[0].mxu0 %v410
        %v2202 = vpop.f32.mrb[0].mxu0
        %v2203 = vadd.f32 0.0, %v2202
        %v2204 = vpop.f32.mrb[0].mxu0
        %2205 = vmatprep.mubr.f32.mxu0 0.0
        %2206 = vmatmul.mubr.f32.gmra.mrb[0].mxu0 %v412
        %v2207 = vpop.f32.mrb[0].mxu0
        %v2208 = vadd.f32 0.0, %v2207
        %v2209 = vpop.f32.mrb[0].mxu0
        %2210 = vmatprep.mubr.f32.mxu0 0.0
        %2211 = vmatmul.mubr.f32.gmra.mrb[0].mxu0 %v414
        %v2212 = vpop.f32.mrb[0].mxu0
        %v2213 = vadd.f32 0.0, %v2212
        %v2214 = vpop.f32.mrb[0].mxu0
        %2215 = vmatprep.mubr.f32.mxu0 0.0
        %2216 = vmatmul.mubr.f32.gmra.mrb[0].mxu0 %v416
        %v2217 = vpop.f32.mrb[0].mxu0
        %v2218 = vadd.f32 0.0, %v2217
        %v2219 = vpop.f32.mrb[0].mxu0
        %2220 = vmatprep.mubr.f32.mxu0 0.0
        %2221 = vmatmul.mubr.f32.gmra.mrb[0].mxu0 %v418
        %v2222 = vpop.f32.mrb[0].mxu0
        %v2223 = vadd.f32 0.0, %v2222
        %v2224 = vpop.f32.mrb[0].mxu0
        %2225 = vmatprep.mubr.f32.mxu0 0.0
        %2226 = vmatmul.mubr.f32.gmra.mrb[0].mxu0 %v420
        %v2227 = vpop.f32.mrb[0].mxu0
        %v2228 = vadd.f32 0.0, %v2227
        %v2229 = vpop.f32.mrb[0].mxu0
        %2230 = vmatprep.mubr.f32.mxu0 0.0
        %2231 = vmatmul.mubr.f32.gmra.mrb[0].mxu0 %v422
        %v2232 = vpop.f32.mrb[0].mxu0
        %v2233 = vadd.f32 0.0, %v2232
        %v2234 = vpop.f32.mrb[0].mxu0
        %2235 = vmatprep.mubr.f32.mxu0 0.0
        %2236 = vmatmul.mubr.f32.gmra.mrb[0].mxu0 %v424
        %v2237 = vpop.f32.mrb[0].mxu0
        %v2238 = vadd.f32 0.0, %v2237
        %v2239 = vpop.f32.mrb[0].mxu0
        %2240 = vmatprep.mubr.f32.mxu0 0.0
        %2241 = vmatmul.mubr.f32.gmra.mrb[0].mxu0 %v426
        %v2242 = vpop.f32.mrb[0].mxu0
        %v2243 = vadd.f32 0.0, %v2242
        %v2244 = vpop.f32.mrb[0].mxu0
        %2245 = vmatprep.mubr.f32.mxu0 0.0
        %2246 = vmatmul.mubr.f32.gmra.mrb[0].mxu0 %v428
        %v2247 = vpop.f32.mrb[0].mxu0
        %v2248 = vadd.f32 0.0, %v2247
        %v2249 = vpop.f32.mrb[0].mxu0
        %2250 = vmatprep.mubr.f32.mxu0 0.0
        %2251 = vmatmul.mubr.f32.gmra.mrb[0].mxu0 %v430
        %v2252 = vpop.f32.mrb[0].mxu0
        %v2253 = vadd.f32 0.0, %v2252
        %v2254 = vpop.f32.mrb[0].mxu0
        %2255 = vmatprep.mubr.f32.mxu0 0.0
        %2256 = vmatmul.mubr.f32.gmra.mrb[0].mxu0 %v432
        %v2257 = vpop.f32.mrb[0].mxu0
        %v2258 = vadd.f32 0.0, %v2257
        %v2259 = vpop.f32.mrb[0].mxu0
        %2260 = vmatprep.mubr.f32.mxu0 0.0
        %2261 = vmatmul.mubr.f32.gmra.mrb[0].mxu0 %v434
        %v2262 = vpop.f32.mrb[0].mxu0
        %v2263 = vadd.f32 0.0, %v2262
        %v2264 = vpop.f32.mrb[0].mxu0
        %2265 = vmatprep.mubr.f32.mxu0 0.0
        %2266 = vmatmul.mubr.f32.gmra.mrb[0].mxu0 %v436
        %v2267 = vpop.f32.mrb[0].mxu0
        %v2268 = vadd.f32 0.0, %v2267
        %v2269 = vpop.f32.mrb[0].mxu0
        %2270 = vmatprep.mubr.f32.mxu0 0.0
        %2271 = vmatmul.mubr.f32.gmra.mrb[0].mxu0 %v2049
        %v2272 = vpop.f32.mrb[0].mxu0
        %v2273 = vadd.f32 0.0, %v2272
        %v2274 = vpop.f32.mrb[0].mxu0
        %2275 = vmatprep.mubr.f32.mxu0 0.0
        %2276 = vmatmul.mubr.f32.gmra.mrb[0].mxu0 %v2051
        %v2277 = vpop.f32.mrb[0].mxu0
        %v2278 = vadd.f32 0.0, %v2277
        %v2279 = vpop.f32.mrb[0].mxu0
        %2280 = vdwg.mxu0
        %v2281 = vadd.f32 %v2009, %v2123
        %v2282 = vadd.f32 %v2010, %v2128
        %v2283 = vadd.f32 %v2011, %v2133
        %v2284 = vadd.f32 %v2012, %v2138
        %v2285 = vadd.f32 %v2013, %v2143
        %v2286 = vadd.f32 %v2014, %v2148
        %v2287 = vadd.f32 %v2015, %v2153
        %v2288 = vadd.f32 %v2016, %v2158
        %v2289 = vadd.f32 %v2017, %v2163
        %v2290 = vadd.f32 %v2018, %v2168
        %v2291 = vadd.f32 %v2019, %v2173
        %v2292 = vadd.f32 %v2020, %v2178
        %v2293 = vadd.f32 %v2021, %v2183
        %v2294 = vadd.f32 %v2022, %v2188
        %v2295 = vadd.f32 %v2023, %v2193
        %v2296 = vadd.f32 %v2024, %v2198
        %v2297 = vadd.f32 %v2025, %v2203
        %v2298 = vadd.f32 %v2026, %v2208
        %v2299 = vadd.f32 %v2027, %v2213
        %v2300 = vadd.f32 %v2028, %v2218
        %v2301 = vadd.f32 %v2029, %v2223
        %v2302 = vadd.f32 %v2030, %v2228
        %v2303 = vadd.f32 %v2031, %v2233
        %v2304 = vadd.f32 %v2032, %v2238
        %v2305 = vadd.f32 %v2033, %v2243
        %v2306 = vadd.f32 %v2034, %v2248
        %v2307 = vadd.f32 %v2035, %v2253
        %v2308 = vadd.f32 %v2036, %v2258
        %v2309 = vadd.f32 %v2037, %v2263
        %v2310 = vadd.f32 %v2038, %v2268
        %v2311 = vadd.f32 %v2039, %v2273
        %v2312 = vadd.f32 %v2040, %v2278
        %v2313 = vrot.slane %v232, 2
        %v2314 = vrot.slane %v233, 2
        %v2315 = vsel %vm959, %v2313, %v2314
        %v2316 = vrot.slane %v234, 2
        %v2317 = vsel %vm959, %v2314, %v2316
        %s2318 = scalar_lea.vmem %s1, 24
        %v2319 = vld [vmem:[%s2318] sm:$0xf]
        %v2320 = vsel %vm373, %v2315, 0
        %v2322 = vsel %vm373, %v2317, 0
        %v2325 = vsel %vm438, %v2319, 0
        %2327 = vmatprep.subr.mxu0 0.0
        %2328 = vmatpush1.msra.mxu0 %v2325
        %2329 = vmatprep.subr.mxu0 0.0
        %2330 = vmatpush1.msra.mxu0 0.0
        %2331 = vmatprep.subr.mxu0 0.0
        %2332 = vmatpush1.msra.mxu0 0.0
        %2333 = vmatprep.subr.mxu0 0.0
        %2334 = vmatpush1.msra.mxu0 0.0
        %2335 = vmatprep.subr.mxu0 0.0
        %2336 = vmatpush1.msra.mxu0 0.0
        %2337 = vmatprep.subr.mxu0 0.0
        %2338 = vmatpush1.msra.mxu0 0.0
        %2339 = vmatprep.subr.mxu0 0.0
        %2340 = vmatpush1.msra.mxu0 0.0
        %2341 = vmatprep.subr.mxu0 0.0
        %2342 = vmatpush1.msra.mxu0 0.0
        %2343 = vmatprep.subr.mxu0 0.0
        %2344 = vmatpush1.msra.mxu0 0.0
        %2345 = vmatprep.subr.mxu0 0.0
        %2346 = vmatpush1.msra.mxu0 0.0
        %2347 = vmatprep.subr.mxu0 0.0
        %2348 = vmatpush1.msra.mxu0 0.0
        %2349 = vmatprep.subr.mxu0 0.0
        %2350 = vmatpush1.msra.mxu0 0.0
        %2351 = vmatprep.subr.mxu0 0.0
        %2352 = vmatpush1.msra.mxu0 0.0
        %2353 = vmatprep.subr.mxu0 0.0
        %2354 = vmatpush1.msra.mxu0 0.0
        %2355 = vmatprep.subr.mxu0 0.0
        %2356 = vmatpush1.msra.mxu0 0.0
        %2357 = vmatprep.subr.mxu0 0.0
        %2358 = vmatpush1.msra.mxu0 0.0
        %2359 = vmatprep.subr.mxu0 0.0
        %2360 = vmatpush1.msra.mxu0 0.0
        %2361 = vmatprep.subr.mxu0 0.0
        %2362 = vmatpush1.msra.mxu0 0.0
        %2363 = vmatprep.subr.mxu0 0.0
        %2364 = vmatpush1.msra.mxu0 0.0
        %2365 = vmatprep.subr.mxu0 0.0
        %2366 = vmatpush1.msra.mxu0 0.0
        %2367 = vmatprep.subr.mxu0 0.0
        %2368 = vmatpush1.msra.mxu0 0.0
        %2369 = vmatprep.subr.mxu0 0.0
        %2370 = vmatpush1.msra.mxu0 0.0
        %2371 = vmatprep.subr.mxu0 0.0
        %2372 = vmatpush1.msra.mxu0 0.0
        %2373 = vmatprep.subr.mxu0 0.0
        %2374 = vmatpush1.msra.mxu0 0.0
        %2375 = vmatprep.subr.mxu0 0.0
        %2376 = vmatpush1.msra.mxu0 0.0
        %2377 = vmatprep.subr.mxu0 0.0
        %2378 = vmatpush1.msra.mxu0 0.0
        %2379 = vmatprep.subr.mxu0 0.0
        %2380 = vmatpush1.msra.mxu0 0.0
        %2381 = vmatprep.subr.mxu0 0.0
        %2382 = vmatpush1.msra.mxu0 0.0
        %2383 = vmatprep.subr.mxu0 0.0
        %2384 = vmatpush1.msra.mxu0 0.0
        %2385 = vmatprep.subr.mxu0 0.0
        %2386 = vmatpush1.msra.mxu0 0.0
        %2387 = vmatprep.subr.mxu0 0.0
        %2388 = vmatpush1.msra.mxu0 0.0
        %2389 = vmatprep.subr.mxu0 0.0
        %2390 = vmatpush1.msra.mxu0 0.0
        %2391 = vmatprep.mubr.f32.mxu0 0.0
        %2392 = vmatmul.mubr.f32.gmra.mrb[0].mxu0 %v1046
        %v2393 = vpop.f32.mrb[0].mxu0
        %v2394 = vadd.f32 0.0, %v2393
        %v2395 = vpop.f32.mrb[0].mxu0
        %2396 = vmatprep.mubr.f32.mxu0 0.0
        %2397 = vmatmul.mubr.f32.gmra.mrb[0].mxu0 %v1048
        %v2398 = vpop.f32.mrb[0].mxu0
        %v2399 = vadd.f32 0.0, %v2398
        %v2400 = vpop.f32.mrb[0].mxu0
        %2401 = vmatprep.mubr.f32.mxu0 0.0
        %2402 = vmatmul.mubr.f32.gmra.mrb[0].mxu0 %v1050
        %v2403 = vpop.f32.mrb[0].mxu0
        %v2404 = vadd.f32 0.0, %v2403
        %v2405 = vpop.f32.mrb[0].mxu0
        %2406 = vmatprep.mubr.f32.mxu0 0.0
        %2407 = vmatmul.mubr.f32.gmra.mrb[0].mxu0 %v1052
        %v2408 = vpop.f32.mrb[0].mxu0
        %v2409 = vadd.f32 0.0, %v2408
        %v2410 = vpop.f32.mrb[0].mxu0
        %2411 = vmatprep.mubr.f32.mxu0 0.0
        %2412 = vmatmul.mubr.f32.gmra.mrb[0].mxu0 %v1054
        %v2413 = vpop.f32.mrb[0].mxu0
        %v2414 = vadd.f32 0.0, %v2413
        %v2415 = vpop.f32.mrb[0].mxu0
        %2416 = vmatprep.mubr.f32.mxu0 0.0
        %2417 = vmatmul.mubr.f32.gmra.mrb[0].mxu0 %v1056
        %v2418 = vpop.f32.mrb[0].mxu0
        %v2419 = vadd.f32 0.0, %v2418
        %v2420 = vpop.f32.mrb[0].mxu0
        %2421 = vmatprep.mubr.f32.mxu0 0.0
        %2422 = vmatmul.mubr.f32.gmra.mrb[0].mxu0 %v1058
        %v2423 = vpop.f32.mrb[0].mxu0
        %v2424 = vadd.f32 0.0, %v2423
        %v2425 = vpop.f32.mrb[0].mxu0
        %2426 = vmatprep.mubr.f32.mxu0 0.0
        %2427 = vmatmul.mubr.f32.gmra.mrb[0].mxu0 %v1060
        %v2428 = vpop.f32.mrb[0].mxu0
        %v2429 = vadd.f32 0.0, %v2428
        %v2430 = vpop.f32.mrb[0].mxu0
        %2431 = vmatprep.mubr.f32.mxu0 0.0
        %2432 = vmatmul.mubr.f32.gmra.mrb[0].mxu0 %v1062
        %v2433 = vpop.f32.mrb[0].mxu0
        %v2434 = vadd.f32 0.0, %v2433
        %v2435 = vpop.f32.mrb[0].mxu0
        %2436 = vmatprep.mubr.f32.mxu0 0.0
        %2437 = vmatmul.mubr.f32.gmra.mrb[0].mxu0 %v1064
        %v2438 = vpop.f32.mrb[0].mxu0
        %v2439 = vadd.f32 0.0, %v2438
        %v2440 = vpop.f32.mrb[0].mxu0
        %2441 = vmatprep.mubr.f32.mxu0 0.0
        %2442 = vmatmul.mubr.f32.gmra.mrb[0].mxu0 %v1066
        %v2443 = vpop.f32.mrb[0].mxu0
        %v2444 = vadd.f32 0.0, %v2443
        %v2445 = vpop.f32.mrb[0].mxu0
        %2446 = vmatprep.mubr.f32.mxu0 0.0
        %2447 = vmatmul.mubr.f32.gmra.mrb[0].mxu0 %v1068
        %v2448 = vpop.f32.mrb[0].mxu0
        %v2449 = vadd.f32 0.0, %v2448
        %v2450 = vpop.f32.mrb[0].mxu0
        %2451 = vmatprep.mubr.f32.mxu0 0.0
        %2452 = vmatmul.mubr.f32.gmra.mrb[0].mxu0 %v1070
        %v2453 = vpop.f32.mrb[0].mxu0
        %v2454 = vadd.f32 0.0, %v2453
        %v2455 = vpop.f32.mrb[0].mxu0
        %2456 = vmatprep.mubr.f32.mxu0 0.0
        %2457 = vmatmul.mubr.f32.gmra.mrb[0].mxu0 %v1072
        %v2458 = vpop.f32.mrb[0].mxu0
        %v2459 = vadd.f32 0.0, %v2458
        %v2460 = vpop.f32.mrb[0].mxu0
        %2461 = vmatprep.mubr.f32.mxu0 0.0
        %2462 = vmatmul.mubr.f32.gmra.mrb[0].mxu0 %v1074
        %v2463 = vpop.f32.mrb[0].mxu0
        %v2464 = vadd.f32 0.0, %v2463
        %v2465 = vpop.f32.mrb[0].mxu0
        %2466 = vmatprep.mubr.f32.mxu0 0.0
        %2467 = vmatmul.mubr.f32.gmra.mrb[0].mxu0 %v1076
        %v2468 = vpop.f32.mrb[0].mxu0
        %v2469 = vadd.f32 0.0, %v2468
        %v2470 = vpop.f32.mrb[0].mxu0
        %2471 = vmatprep.mubr.f32.mxu0 0.0
        %2472 = vmatmul.mubr.f32.gmra.mrb[0].mxu0 %v1078
        %v2473 = vpop.f32.mrb[0].mxu0
        %v2474 = vadd.f32 0.0, %v2473
        %v2475 = vpop.f32.mrb[0].mxu0
        %2476 = vmatprep.mubr.f32.mxu0 0.0
        %2477 = vmatmul.mubr.f32.gmra.mrb[0].mxu0 %v1080
        %v2478 = vpop.f32.mrb[0].mxu0
        %v2479 = vadd.f32 0.0, %v2478
        %v2480 = vpop.f32.mrb[0].mxu0
        %2481 = vmatprep.mubr.f32.mxu0 0.0
        %2482 = vmatmul.mubr.f32.gmra.mrb[0].mxu0 %v1082
        %v2483 = vpop.f32.mrb[0].mxu0
        %v2484 = vadd.f32 0.0, %v2483
        %v2485 = vpop.f32.mrb[0].mxu0
        %2486 = vmatprep.mubr.f32.mxu0 0.0
        %2487 = vmatmul.mubr.f32.gmra.mrb[0].mxu0 %v1084
        %v2488 = vpop.f32.mrb[0].mxu0
        %v2489 = vadd.f32 0.0, %v2488
        %v2490 = vpop.f32.mrb[0].mxu0
        %2491 = vmatprep.mubr.f32.mxu0 0.0
        %2492 = vmatmul.mubr.f32.gmra.mrb[0].mxu0 %v1086
        %v2493 = vpop.f32.mrb[0].mxu0
        %v2494 = vadd.f32 0.0, %v2493
        %v2495 = vpop.f32.mrb[0].mxu0
        %2496 = vmatprep.mubr.f32.mxu0 0.0
        %2497 = vmatmul.mubr.f32.gmra.mrb[0].mxu0 %v1088
        %v2498 = vpop.f32.mrb[0].mxu0
        %v2499 = vadd.f32 0.0, %v2498
        %v2500 = vpop.f32.mrb[0].mxu0
        %2501 = vmatprep.mubr.f32.mxu0 0.0
        %2502 = vmatmul.mubr.f32.gmra.mrb[0].mxu0 %v1090
        %v2503 = vpop.f32.mrb[0].mxu0
        %v2504 = vadd.f32 0.0, %v2503
        %v2505 = vpop.f32.mrb[0].mxu0
        %2506 = vmatprep.mubr.f32.mxu0 0.0
        %2507 = vmatmul.mubr.f32.gmra.mrb[0].mxu0 %v1092
        %v2508 = vpop.f32.mrb[0].mxu0
        %v2509 = vadd.f32 0.0, %v2508
        %v2510 = vpop.f32.mrb[0].mxu0
        %2511 = vmatprep.mubr.f32.mxu0 0.0
        %2512 = vmatmul.mubr.f32.gmra.mrb[0].mxu0 %v1094
        %v2513 = vpop.f32.mrb[0].mxu0
        %v2514 = vadd.f32 0.0, %v2513
        %v2515 = vpop.f32.mrb[0].mxu0
        %2516 = vmatprep.mubr.f32.mxu0 0.0
        %2517 = vmatmul.mubr.f32.gmra.mrb[0].mxu0 %v1096
        %v2518 = vpop.f32.mrb[0].mxu0
        %v2519 = vadd.f32 0.0, %v2518
        %v2520 = vpop.f32.mrb[0].mxu0
        %2521 = vmatprep.mubr.f32.mxu0 0.0
        %2522 = vmatmul.mubr.f32.gmra.mrb[0].mxu0 %v1098
        %v2523 = vpop.f32.mrb[0].mxu0
        %v2524 = vadd.f32 0.0, %v2523
        %v2525 = vpop.f32.mrb[0].mxu0
        %2526 = vmatprep.mubr.f32.mxu0 0.0
        %2527 = vmatmul.mubr.f32.gmra.mrb[0].mxu0 %v1100
        %v2528 = vpop.f32.mrb[0].mxu0
        %v2529 = vadd.f32 0.0, %v2528
        %v2530 = vpop.f32.mrb[0].mxu0
        %2531 = vmatprep.mubr.f32.mxu0 0.0
        %2532 = vmatmul.mubr.f32.gmra.mrb[0].mxu0 %v1102
        %v2533 = vpop.f32.mrb[0].mxu0
        %v2534 = vadd.f32 0.0, %v2533
        %v2535 = vpop.f32.mrb[0].mxu0
        %2536 = vmatprep.mubr.f32.mxu0 0.0
        %2537 = vmatmul.mubr.f32.gmra.mrb[0].mxu0 %v1104
        %v2538 = vpop.f32.mrb[0].mxu0
        %v2539 = vadd.f32 0.0, %v2538
        %v2540 = vpop.f32.mrb[0].mxu0
        %2541 = vmatprep.mubr.f32.mxu0 0.0
        %2542 = vmatmul.mubr.f32.gmra.mrb[0].mxu0 %v2320
        %v2543 = vpop.f32.mrb[0].mxu0
        %v2544 = vadd.f32 0.0, %v2543
        %v2545 = vpop.f32.mrb[0].mxu0
        %2546 = vmatprep.mubr.f32.mxu0 0.0
        %2547 = vmatmul.mubr.f32.gmra.mrb[0].mxu0 %v2322
        %v2548 = vpop.f32.mrb[0].mxu0
        %v2549 = vadd.f32 0.0, %v2548
        %v2550 = vpop.f32.mrb[0].mxu0
        %2551 = vdwg.mxu0
        %v2552 = vadd.f32 %v2281, %v2394
        %v2553 = vadd.f32 %v2282, %v2399
        %v2554 = vadd.f32 %v2283, %v2404
        %v2555 = vadd.f32 %v2284, %v2409
        %v2556 = vadd.f32 %v2285, %v2414
        %v2557 = vadd.f32 %v2286, %v2419
        %v2558 = vadd.f32 %v2287, %v2424
        %v2559 = vadd.f32 %v2288, %v2429
        %v2560 = vadd.f32 %v2289, %v2434
        %v2561 = vadd.f32 %v2290, %v2439
        %v2562 = vadd.f32 %v2291, %v2444
        %v2563 = vadd.f32 %v2292, %v2449
        %v2564 = vadd.f32 %v2293, %v2454
        %v2565 = vadd.f32 %v2294, %v2459
        %v2566 = vadd.f32 %v2295, %v2464
        %v2567 = vadd.f32 %v2296, %v2469
        %v2568 = vadd.f32 %v2297, %v2474
        %v2569 = vadd.f32 %v2298, %v2479
        %v2570 = vadd.f32 %v2299, %v2484
        %v2571 = vadd.f32 %v2300, %v2489
        %v2572 = vadd.f32 %v2301, %v2494
        %v2573 = vadd.f32 %v2302, %v2499
        %v2574 = vadd.f32 %v2303, %v2504
        %v2575 = vadd.f32 %v2304, %v2509
        %v2576 = vadd.f32 %v2305, %v2514
        %v2577 = vadd.f32 %v2306, %v2519
        %v2578 = vadd.f32 %v2307, %v2524
        %v2579 = vadd.f32 %v2308, %v2529
        %v2580 = vadd.f32 %v2309, %v2534
        %v2581 = vadd.f32 %v2310, %v2539
        %v2582 = vadd.f32 %v2311, %v2544
        %v2583 = vadd.f32 %v2312, %v2549
        %v2584 = vrot.slane %v232, 3
        %v2585 = vrot.slane %v233, 3
        %v2586 = vsel %vm1366, %v2584, %v2585
        %v2587 = vrot.slane %v234, 3
        %v2588 = vsel %vm1366, %v2585, %v2587
        %s2589 = scalar_lea.vmem %s1, 28
        %v2590 = vld [vmem:[%s2589] sm:$0xf]
        %v2591 = vsel %vm373, %v2586, 0
        %v2593 = vsel %vm373, %v2588, 0
        %v2596 = vsel %vm438, %v2590, 0
        %2598 = vmatprep.subr.mxu0 0.0
        %2599 = vmatpush1.msra.mxu0 %v2596
        %2600 = vmatprep.subr.mxu0 0.0
        %2601 = vmatpush1.msra.mxu0 0.0
        %2602 = vmatprep.subr.mxu0 0.0
        %2603 = vmatpush1.msra.mxu0 0.0
        %2604 = vmatprep.subr.mxu0 0.0
        %2605 = vmatpush1.msra.mxu0 0.0
        %2606 = vmatprep.subr.mxu0 0.0
        %2607 = vmatpush1.msra.mxu0 0.0
        %2608 = vmatprep.subr.mxu0 0.0
        %2609 = vmatpush1.msra.mxu0 0.0
        %2610 = vmatprep.subr.mxu0 0.0
        %2611 = vmatpush1.msra.mxu0 0.0
        %2612 = vmatprep.subr.mxu0 0.0
        %2613 = vmatpush1.msra.mxu0 0.0
        %2614 = vmatprep.subr.mxu0 0.0
        %2615 = vmatpush1.msra.mxu0 0.0
        %2616 = vmatprep.subr.mxu0 0.0
        %2617 = vmatpush1.msra.mxu0 0.0
        %2618 = vmatprep.subr.mxu0 0.0
        %2619 = vmatpush1.msra.mxu0 0.0
        %2620 = vmatprep.subr.mxu0 0.0
        %2621 = vmatpush1.msra.mxu0 0.0
        %2622 = vmatprep.subr.mxu0 0.0
        %2623 = vmatpush1.msra.mxu0 0.0
        %2624 = vmatprep.subr.mxu0 0.0
        %2625 = vmatpush1.msra.mxu0 0.0
        %2626 = vmatprep.subr.mxu0 0.0
        %2627 = vmatpush1.msra.mxu0 0.0
        %2628 = vmatprep.subr.mxu0 0.0
        %2629 = vmatpush1.msra.mxu0 0.0
        %2630 = vmatprep.subr.mxu0 0.0
        %2631 = vmatpush1.msra.mxu0 0.0
        %2632 = vmatprep.subr.mxu0 0.0
        %2633 = vmatpush1.msra.mxu0 0.0
        %2634 = vmatprep.subr.mxu0 0.0
        %2635 = vmatpush1.msra.mxu0 0.0
        %2636 = vmatprep.subr.mxu0 0.0
        %2637 = vmatpush1.msra.mxu0 0.0
        %2638 = vmatprep.subr.mxu0 0.0
        %2639 = vmatpush1.msra.mxu0 0.0
        %2640 = vmatprep.subr.mxu0 0.0
        %2641 = vmatpush1.msra.mxu0 0.0
        %2642 = vmatprep.subr.mxu0 0.0
        %2643 = vmatpush1.msra.mxu0 0.0
        %2644 = vmatprep.subr.mxu0 0.0
        %2645 = vmatpush1.msra.mxu0 0.0
        %2646 = vmatprep.subr.mxu0 0.0
        %2647 = vmatpush1.msra.mxu0 0.0
        %2648 = vmatprep.subr.mxu0 0.0
        %2649 = vmatpush1.msra.mxu0 0.0
        %2650 = vmatprep.subr.mxu0 0.0
        %2651 = vmatpush1.msra.mxu0 0.0
        %2652 = vmatprep.subr.mxu0 0.0
        %2653 = vmatpush1.msra.mxu0 0.0
        %2654 = vmatprep.subr.mxu0 0.0
        %2655 = vmatpush1.msra.mxu0 0.0
        %2656 = vmatprep.subr.mxu0 0.0
        %2657 = vmatpush1.msra.mxu0 0.0
        %2658 = vmatprep.subr.mxu0 0.0
        %2659 = vmatpush1.msra.mxu0 0.0
        %2660 = vmatprep.subr.mxu0 0.0
        %2661 = vmatpush1.msra.mxu0 0.0
        %2662 = vmatprep.mubr.f32.mxu0 0.0
        %2663 = vmatmul.mubr.f32.gmra.mrb[0].mxu0 %v1453
        %v2664 = vpop.f32.mrb[0].mxu0
        %v2665 = vadd.f32 0.0, %v2664
        %v2666 = vpop.f32.mrb[0].mxu0
        %2667 = vmatprep.mubr.f32.mxu0 0.0
        %2668 = vmatmul.mubr.f32.gmra.mrb[0].mxu0 %v1455
        %v2669 = vpop.f32.mrb[0].mxu0
        %v2670 = vadd.f32 0.0, %v2669
        %v2671 = vpop.f32.mrb[0].mxu0
        %2672 = vmatprep.mubr.f32.mxu0 0.0
        %2673 = vmatmul.mubr.f32.gmra.mrb[0].mxu0 %v1457
        %v2674 = vpop.f32.mrb[0].mxu0
        %v2675 = vadd.f32 0.0, %v2674
        %v2676 = vpop.f32.mrb[0].mxu0
        %2677 = vmatprep.mubr.f32.mxu0 0.0
        %2678 = vmatmul.mubr.f32.gmra.mrb[0].mxu0 %v1459
        %v2679 = vpop.f32.mrb[0].mxu0
        %v2680 = vadd.f32 0.0, %v2679
        %v2681 = vpop.f32.mrb[0].mxu0
        %2682 = vmatprep.mubr.f32.mxu0 0.0
        %2683 = vmatmul.mubr.f32.gmra.mrb[0].mxu0 %v1461
        %v2684 = vpop.f32.mrb[0].mxu0
        %v2685 = vadd.f32 0.0, %v2684
        %v2686 = vpop.f32.mrb[0].mxu0
        %2687 = vmatprep.mubr.f32.mxu0 0.0
        %2688 = vmatmul.mubr.f32.gmra.mrb[0].mxu0 %v1463
        %v2689 = vpop.f32.mrb[0].mxu0
        %v2690 = vadd.f32 0.0, %v2689
        %v2691 = vpop.f32.mrb[0].mxu0
        %2692 = vmatprep.mubr.f32.mxu0 0.0
        %2693 = vmatmul.mubr.f32.gmra.mrb[0].mxu0 %v1465
        %v2694 = vpop.f32.mrb[0].mxu0
        %v2695 = vadd.f32 0.0, %v2694
        %v2696 = vpop.f32.mrb[0].mxu0
        %2697 = vmatprep.mubr.f32.mxu0 0.0
        %2698 = vmatmul.mubr.f32.gmra.mrb[0].mxu0 %v1467
        %v2699 = vpop.f32.mrb[0].mxu0
        %v2700 = vadd.f32 0.0, %v2699
        %v2701 = vpop.f32.mrb[0].mxu0
        %2702 = vmatprep.mubr.f32.mxu0 0.0
        %2703 = vmatmul.mubr.f32.gmra.mrb[0].mxu0 %v1469
        %v2704 = vpop.f32.mrb[0].mxu0
        %v2705 = vadd.f32 0.0, %v2704
        %v2706 = vpop.f32.mrb[0].mxu0
        %2707 = vmatprep.mubr.f32.mxu0 0.0
        %2708 = vmatmul.mubr.f32.gmra.mrb[0].mxu0 %v1471
        %v2709 = vpop.f32.mrb[0].mxu0
        %v2710 = vadd.f32 0.0, %v2709
        %v2711 = vpop.f32.mrb[0].mxu0
        %2712 = vmatprep.mubr.f32.mxu0 0.0
        %2713 = vmatmul.mubr.f32.gmra.mrb[0].mxu0 %v1473
        %v2714 = vpop.f32.mrb[0].mxu0
        %v2715 = vadd.f32 0.0, %v2714
        %v2716 = vpop.f32.mrb[0].mxu0
        %2717 = vmatprep.mubr.f32.mxu0 0.0
        %2718 = vmatmul.mubr.f32.gmra.mrb[0].mxu0 %v1475
        %v2719 = vpop.f32.mrb[0].mxu0
        %v2720 = vadd.f32 0.0, %v2719
        %v2721 = vpop.f32.mrb[0].mxu0
        %2722 = vmatprep.mubr.f32.mxu0 0.0
        %2723 = vmatmul.mubr.f32.gmra.mrb[0].mxu0 %v1477
        %v2724 = vpop.f32.mrb[0].mxu0
        %v2725 = vadd.f32 0.0, %v2724
        %v2726 = vpop.f32.mrb[0].mxu0
        %2727 = vmatprep.mubr.f32.mxu0 0.0
        %2728 = vmatmul.mubr.f32.gmra.mrb[0].mxu0 %v1479
        %v2729 = vpop.f32.mrb[0].mxu0
        %v2730 = vadd.f32 0.0, %v2729
        %v2731 = vpop.f32.mrb[0].mxu0
        %2732 = vmatprep.mubr.f32.mxu0 0.0
        %2733 = vmatmul.mubr.f32.gmra.mrb[0].mxu0 %v1481
        %v2734 = vpop.f32.mrb[0].mxu0
        %v2735 = vadd.f32 0.0, %v2734
        %v2736 = vpop.f32.mrb[0].mxu0
        %2737 = vmatprep.mubr.f32.mxu0 0.0
        %2738 = vmatmul.mubr.f32.gmra.mrb[0].mxu0 %v1483
        %v2739 = vpop.f32.mrb[0].mxu0
        %v2740 = vadd.f32 0.0, %v2739
        %v2741 = vpop.f32.mrb[0].mxu0
        %2742 = vmatprep.mubr.f32.mxu0 0.0
        %2743 = vmatmul.mubr.f32.gmra.mrb[0].mxu0 %v1485
        %v2744 = vpop.f32.mrb[0].mxu0
        %v2745 = vadd.f32 0.0, %v2744
        %v2746 = vpop.f32.mrb[0].mxu0
        %2747 = vmatprep.mubr.f32.mxu0 0.0
        %2748 = vmatmul.mubr.f32.gmra.mrb[0].mxu0 %v1487
        %v2749 = vpop.f32.mrb[0].mxu0
        %v2750 = vadd.f32 0.0, %v2749
        %v2751 = vpop.f32.mrb[0].mxu0
        %2752 = vmatprep.mubr.f32.mxu0 0.0
        %2753 = vmatmul.mubr.f32.gmra.mrb[0].mxu0 %v1489
        %v2754 = vpop.f32.mrb[0].mxu0
        %v2755 = vadd.f32 0.0, %v2754
        %v2756 = vpop.f32.mrb[0].mxu0
        %2757 = vmatprep.mubr.f32.mxu0 0.0
        %2758 = vmatmul.mubr.f32.gmra.mrb[0].mxu0 %v1491
        %v2759 = vpop.f32.mrb[0].mxu0
        %v2760 = vadd.f32 0.0, %v2759
        %v2761 = vpop.f32.mrb[0].mxu0
        %2762 = vmatprep.mubr.f32.mxu0 0.0
        %2763 = vmatmul.mubr.f32.gmra.mrb[0].mxu0 %v1493
        %v2764 = vpop.f32.mrb[0].mxu0
        %v2765 = vadd.f32 0.0, %v2764
        %v2766 = vpop.f32.mrb[0].mxu0
        %2767 = vmatprep.mubr.f32.mxu0 0.0
        %2768 = vmatmul.mubr.f32.gmra.mrb[0].mxu0 %v1495
        %v2769 = vpop.f32.mrb[0].mxu0
        %v2770 = vadd.f32 0.0, %v2769
        %v2771 = vpop.f32.mrb[0].mxu0
        %2772 = vmatprep.mubr.f32.mxu0 0.0
        %2773 = vmatmul.mubr.f32.gmra.mrb[0].mxu0 %v1497
        %v2774 = vpop.f32.mrb[0].mxu0
        %v2775 = vadd.f32 0.0, %v2774
        %v2776 = vpop.f32.mrb[0].mxu0
        %2777 = vmatprep.mubr.f32.mxu0 0.0
        %2778 = vmatmul.mubr.f32.gmra.mrb[0].mxu0 %v1499
        %v2779 = vpop.f32.mrb[0].mxu0
        %v2780 = vadd.f32 0.0, %v2779
        %v2781 = vpop.f32.mrb[0].mxu0
        %2782 = vmatprep.mubr.f32.mxu0 0.0
        %2783 = vmatmul.mubr.f32.gmra.mrb[0].mxu0 %v1501
        %v2784 = vpop.f32.mrb[0].mxu0
        %v2785 = vadd.f32 0.0, %v2784
        %v2786 = vpop.f32.mrb[0].mxu0
        %2787 = vmatprep.mubr.f32.mxu0 0.0
        %2788 = vmatmul.mubr.f32.gmra.mrb[0].mxu0 %v1503
        %v2789 = vpop.f32.mrb[0].mxu0
        %v2790 = vadd.f32 0.0, %v2789
        %v2791 = vpop.f32.mrb[0].mxu0
        %2792 = vmatprep.mubr.f32.mxu0 0.0
        %2793 = vmatmul.mubr.f32.gmra.mrb[0].mxu0 %v1505
        %v2794 = vpop.f32.mrb[0].mxu0
        %v2795 = vadd.f32 0.0, %v2794
        %v2796 = vpop.f32.mrb[0].mxu0
        %2797 = vmatprep.mubr.f32.mxu0 0.0
        %2798 = vmatmul.mubr.f32.gmra.mrb[0].mxu0 %v1507
        %v2799 = vpop.f32.mrb[0].mxu0
        %v2800 = vadd.f32 0.0, %v2799
        %v2801 = vpop.f32.mrb[0].mxu0
        %2802 = vmatprep.mubr.f32.mxu0 0.0
        %2803 = vmatmul.mubr.f32.gmra.mrb[0].mxu0 %v1509
        %v2804 = vpop.f32.mrb[0].mxu0
        %v2805 = vadd.f32 0.0, %v2804
        %v2806 = vpop.f32.mrb[0].mxu0
        %2807 = vmatprep.mubr.f32.mxu0 0.0
        %2808 = vmatmul.mubr.f32.gmra.mrb[0].mxu0 %v1511
        %v2809 = vpop.f32.mrb[0].mxu0
        %v2810 = vadd.f32 0.0, %v2809
        %v2811 = vpop.f32.mrb[0].mxu0
        %2812 = vmatprep.mubr.f32.mxu0 0.0
        %2813 = vmatmul.mubr.f32.gmra.mrb[0].mxu0 %v2591
        %v2814 = vpop.f32.mrb[0].mxu0
        %v2815 = vadd.f32 0.0, %v2814
        %v2816 = vpop.f32.mrb[0].mxu0
        %2817 = vmatprep.mubr.f32.mxu0 0.0
        %2818 = vmatmul.mubr.f32.gmra.mrb[0].mxu0 %v2593
        %v2819 = vpop.f32.mrb[0].mxu0
        %v2820 = vadd.f32 0.0, %v2819
        %v2821 = vpop.f32.mrb[0].mxu0
        %2822 = vdwg.mxu0
        %v2823 = vadd.f32 %v2552, %v2665
        %v2824 = vadd.f32 %v2553, %v2670
        %v2825 = vadd.f32 %v2554, %v2675
        %v2826 = vadd.f32 %v2555, %v2680
        %v2827 = vadd.f32 %v2556, %v2685
        %v2828 = vadd.f32 %v2557, %v2690
        %v2829 = vadd.f32 %v2558, %v2695
        %v2830 = vadd.f32 %v2559, %v2700
        %v2831 = vadd.f32 %v2560, %v2705
        %v2832 = vadd.f32 %v2561, %v2710
        %v2833 = vadd.f32 %v2562, %v2715
        %v2834 = vadd.f32 %v2563, %v2720
        %v2835 = vadd.f32 %v2564, %v2725
        %v2836 = vadd.f32 %v2565, %v2730
        %v2837 = vadd.f32 %v2566, %v2735
        %v2838 = vadd.f32 %v2567, %v2740
        %v2839 = vadd.f32 %v2568, %v2745
        %v2840 = vadd.f32 %v2569, %v2750
        %v2841 = vadd.f32 %v2570, %v2755
        %v2842 = vadd.f32 %v2571, %v2760
        %v2843 = vadd.f32 %v2572, %v2765
        %v2844 = vadd.f32 %v2573, %v2770
        %v2845 = vadd.f32 %v2574, %v2775
        %v2846 = vadd.f32 %v2575, %v2780
        %v2847 = vadd.f32 %v2576, %v2785
        %v2848 = vadd.f32 %v2577, %v2790
        %v2849 = vadd.f32 %v2578, %v2795
        %v2850 = vadd.f32 %v2579, %v2800
        %v2851 = vadd.f32 %v2580, %v2805
        %v2852 = vadd.f32 %v2581, %v2810
        %v2853 = vadd.f32 %v2582, %v2815
        %v2854 = vadd.f32 %v2583, %v2820
        %s2855 = scalar_lea.vmem %s1, 32
        %v2856 = vld [vmem:[%s2855] sm:$0xf]
        %v2858 = vsel %vm373, %v235, 0
        %v2861 = vsel %vm373, %v236, 0
        %v2864 = vsel %vm438, %v2856, 0
        %2866 = vmatprep.subr.mxu0 0.0
        %2867 = vmatpush1.msra.mxu0 %v2864
        %2868 = vmatprep.subr.mxu0 0.0
        %2869 = vmatpush1.msra.mxu0 0.0
        %2870 = vmatprep.subr.mxu0 0.0
        %2871 = vmatpush1.msra.mxu0 0.0
        %2872 = vmatprep.subr.mxu0 0.0
        %2873 = vmatpush1.msra.mxu0 0.0
        %2874 = vmatprep.subr.mxu0 0.0
        %2875 = vmatpush1.msra.mxu0 0.0
        %2876 = vmatprep.subr.mxu0 0.0
        %2877 = vmatpush1.msra.mxu0 0.0
        %2878 = vmatprep.subr.mxu0 0.0
        %2879 = vmatpush1.msra.mxu0 0.0
        %2880 = vmatprep.subr.mxu0 0.0
        %2881 = vmatpush1.msra.mxu0 0.0
        %2882 = vmatprep.subr.mxu0 0.0
        %2883 = vmatpush1.msra.mxu0 0.0
        %2884 = vmatprep.subr.mxu0 0.0
        %2885 = vmatpush1.msra.mxu0 0.0
        %2886 = vmatprep.subr.mxu0 0.0
        %2887 = vmatpush1.msra.mxu0 0.0
        %2888 = vmatprep.subr.mxu0 0.0
        %2889 = vmatpush1.msra.mxu0 0.0
        %2890 = vmatprep.subr.mxu0 0.0
        %2891 = vmatpush1.msra.mxu0 0.0
        %2892 = vmatprep.subr.mxu0 0.0
        %2893 = vmatpush1.msra.mxu0 0.0
        %2894 = vmatprep.subr.mxu0 0.0
        %2895 = vmatpush1.msra.mxu0 0.0
        %2896 = vmatprep.subr.mxu0 0.0
        %2897 = vmatpush1.msra.mxu0 0.0
        %2898 = vmatprep.subr.mxu0 0.0
        %2899 = vmatpush1.msra.mxu0 0.0
        %2900 = vmatprep.subr.mxu0 0.0
        %2901 = vmatpush1.msra.mxu0 0.0
        %2902 = vmatprep.subr.mxu0 0.0
        %2903 = vmatpush1.msra.mxu0 0.0
        %2904 = vmatprep.subr.mxu0 0.0
        %2905 = vmatpush1.msra.mxu0 0.0
        %2906 = vmatprep.subr.mxu0 0.0
        %2907 = vmatpush1.msra.mxu0 0.0
        %2908 = vmatprep.subr.mxu0 0.0
        %2909 = vmatpush1.msra.mxu0 0.0
        %2910 = vmatprep.subr.mxu0 0.0
        %2911 = vmatpush1.msra.mxu0 0.0
        %2912 = vmatprep.subr.mxu0 0.0
        %2913 = vmatpush1.msra.mxu0 0.0
        %2914 = vmatprep.subr.mxu0 0.0
        %2915 = vmatpush1.msra.mxu0 0.0
        %2916 = vmatprep.subr.mxu0 0.0
        %2917 = vmatpush1.msra.mxu0 0.0
        %2918 = vmatprep.subr.mxu0 0.0
        %2919 = vmatpush1.msra.mxu0 0.0
        %2920 = vmatprep.subr.mxu0 0.0
        %2921 = vmatpush1.msra.mxu0 0.0
        %2922 = vmatprep.subr.mxu0 0.0
        %2923 = vmatpush1.msra.mxu0 0.0
        %2924 = vmatprep.subr.mxu0 0.0
        %2925 = vmatpush1.msra.mxu0 0.0
        %2926 = vmatprep.subr.mxu0 0.0
        %2927 = vmatpush1.msra.mxu0 0.0
        %2928 = vmatprep.subr.mxu0 0.0
        %2929 = vmatpush1.msra.mxu0 0.0
        %2930 = vmatprep.mubr.f32.mxu0 0.0
        %2931 = vmatmul.mubr.f32.gmra.mrb[0].mxu0 %v675
        %v2932 = vpop.f32.mrb[0].mxu0
        %v2933 = vadd.f32 0.0, %v2932
        %v2934 = vpop.f32.mrb[0].mxu0
        %2935 = vmatprep.mubr.f32.mxu0 0.0
        %2936 = vmatmul.mubr.f32.gmra.mrb[0].mxu0 %v677
        %v2937 = vpop.f32.mrb[0].mxu0
        %v2938 = vadd.f32 0.0, %v2937
        %v2939 = vpop.f32.mrb[0].mxu0
        %2940 = vmatprep.mubr.f32.mxu0 0.0
        %2941 = vmatmul.mubr.f32.gmra.mrb[0].mxu0 %v679
        %v2942 = vpop.f32.mrb[0].mxu0
        %v2943 = vadd.f32 0.0, %v2942
        %v2944 = vpop.f32.mrb[0].mxu0
        %2945 = vmatprep.mubr.f32.mxu0 0.0
        %2946 = vmatmul.mubr.f32.gmra.mrb[0].mxu0 %v681
        %v2947 = vpop.f32.mrb[0].mxu0
        %v2948 = vadd.f32 0.0, %v2947
        %v2949 = vpop.f32.mrb[0].mxu0
        %2950 = vmatprep.mubr.f32.mxu0 0.0
        %2951 = vmatmul.mubr.f32.gmra.mrb[0].mxu0 %v683
        %v2952 = vpop.f32.mrb[0].mxu0
        %v2953 = vadd.f32 0.0, %v2952
        %v2954 = vpop.f32.mrb[0].mxu0
        %2955 = vmatprep.mubr.f32.mxu0 0.0
        %2956 = vmatmul.mubr.f32.gmra.mrb[0].mxu0 %v685
        %v2957 = vpop.f32.mrb[0].mxu0
        %v2958 = vadd.f32 0.0, %v2957
        %v2959 = vpop.f32.mrb[0].mxu0
        %2960 = vmatprep.mubr.f32.mxu0 0.0
        %2961 = vmatmul.mubr.f32.gmra.mrb[0].mxu0 %v687
        %v2962 = vpop.f32.mrb[0].mxu0
        %v2963 = vadd.f32 0.0, %v2962
        %v2964 = vpop.f32.mrb[0].mxu0
        %2965 = vmatprep.mubr.f32.mxu0 0.0
        %2966 = vmatmul.mubr.f32.gmra.mrb[0].mxu0 %v689
        %v2967 = vpop.f32.mrb[0].mxu0
        %v2968 = vadd.f32 0.0, %v2967
        %v2969 = vpop.f32.mrb[0].mxu0
        %2970 = vmatprep.mubr.f32.mxu0 0.0
        %2971 = vmatmul.mubr.f32.gmra.mrb[0].mxu0 %v691
        %v2972 = vpop.f32.mrb[0].mxu0
        %v2973 = vadd.f32 0.0, %v2972
        %v2974 = vpop.f32.mrb[0].mxu0
        %2975 = vmatprep.mubr.f32.mxu0 0.0
        %2976 = vmatmul.mubr.f32.gmra.mrb[0].mxu0 %v693
        %v2977 = vpop.f32.mrb[0].mxu0
        %v2978 = vadd.f32 0.0, %v2977
        %v2979 = vpop.f32.mrb[0].mxu0
        %2980 = vmatprep.mubr.f32.mxu0 0.0
        %2981 = vmatmul.mubr.f32.gmra.mrb[0].mxu0 %v695
        %v2982 = vpop.f32.mrb[0].mxu0
        %v2983 = vadd.f32 0.0, %v2982
        %v2984 = vpop.f32.mrb[0].mxu0
        %2985 = vmatprep.mubr.f32.mxu0 0.0
        %2986 = vmatmul.mubr.f32.gmra.mrb[0].mxu0 %v697
        %v2987 = vpop.f32.mrb[0].mxu0
        %v2988 = vadd.f32 0.0, %v2987
        %v2989 = vpop.f32.mrb[0].mxu0
        %2990 = vmatprep.mubr.f32.mxu0 0.0
        %2991 = vmatmul.mubr.f32.gmra.mrb[0].mxu0 %v699
        %v2992 = vpop.f32.mrb[0].mxu0
        %v2993 = vadd.f32 0.0, %v2992
        %v2994 = vpop.f32.mrb[0].mxu0
        %2995 = vmatprep.mubr.f32.mxu0 0.0
        %2996 = vmatmul.mubr.f32.gmra.mrb[0].mxu0 %v701
        %v2997 = vpop.f32.mrb[0].mxu0
        %v2998 = vadd.f32 0.0, %v2997
        %v2999 = vpop.f32.mrb[0].mxu0
        %3000 = vmatprep.mubr.f32.mxu0 0.0
        %3001 = vmatmul.mubr.f32.gmra.mrb[0].mxu0 %v703
        %v3002 = vpop.f32.mrb[0].mxu0
        %v3003 = vadd.f32 0.0, %v3002
        %v3004 = vpop.f32.mrb[0].mxu0
        %3005 = vmatprep.mubr.f32.mxu0 0.0
        %3006 = vmatmul.mubr.f32.gmra.mrb[0].mxu0 %v705
        %v3007 = vpop.f32.mrb[0].mxu0
        %v3008 = vadd.f32 0.0, %v3007
        %v3009 = vpop.f32.mrb[0].mxu0
        %3010 = vmatprep.mubr.f32.mxu0 0.0
        %3011 = vmatmul.mubr.f32.gmra.mrb[0].mxu0 %v707
        %v3012 = vpop.f32.mrb[0].mxu0
        %v3013 = vadd.f32 0.0, %v3012
        %v3014 = vpop.f32.mrb[0].mxu0
        %3015 = vmatprep.mubr.f32.mxu0 0.0
        %3016 = vmatmul.mubr.f32.gmra.mrb[0].mxu0 %v709
        %v3017 = vpop.f32.mrb[0].mxu0
        %v3018 = vadd.f32 0.0, %v3017
        %v3019 = vpop.f32.mrb[0].mxu0
        %3020 = vmatprep.mubr.f32.mxu0 0.0
        %3021 = vmatmul.mubr.f32.gmra.mrb[0].mxu0 %v711
        %v3022 = vpop.f32.mrb[0].mxu0
        %v3023 = vadd.f32 0.0, %v3022
        %v3024 = vpop.f32.mrb[0].mxu0
        %3025 = vmatprep.mubr.f32.mxu0 0.0
        %3026 = vmatmul.mubr.f32.gmra.mrb[0].mxu0 %v713
        %v3027 = vpop.f32.mrb[0].mxu0
        %v3028 = vadd.f32 0.0, %v3027
        %v3029 = vpop.f32.mrb[0].mxu0
        %3030 = vmatprep.mubr.f32.mxu0 0.0
        %3031 = vmatmul.mubr.f32.gmra.mrb[0].mxu0 %v715
        %v3032 = vpop.f32.mrb[0].mxu0
        %v3033 = vadd.f32 0.0, %v3032
        %v3034 = vpop.f32.mrb[0].mxu0
        %3035 = vmatprep.mubr.f32.mxu0 0.0
        %3036 = vmatmul.mubr.f32.gmra.mrb[0].mxu0 %v717
        %v3037 = vpop.f32.mrb[0].mxu0
        %v3038 = vadd.f32 0.0, %v3037
        %v3039 = vpop.f32.mrb[0].mxu0
        %3040 = vmatprep.mubr.f32.mxu0 0.0
        %3041 = vmatmul.mubr.f32.gmra.mrb[0].mxu0 %v719
        %v3042 = vpop.f32.mrb[0].mxu0
        %v3043 = vadd.f32 0.0, %v3042
        %v3044 = vpop.f32.mrb[0].mxu0
        %3045 = vmatprep.mubr.f32.mxu0 0.0
        %3046 = vmatmul.mubr.f32.gmra.mrb[0].mxu0 %v721
        %v3047 = vpop.f32.mrb[0].mxu0
        %v3048 = vadd.f32 0.0, %v3047
        %v3049 = vpop.f32.mrb[0].mxu0
        %3050 = vmatprep.mubr.f32.mxu0 0.0
        %3051 = vmatmul.mubr.f32.gmra.mrb[0].mxu0 %v723
        %v3052 = vpop.f32.mrb[0].mxu0
        %v3053 = vadd.f32 0.0, %v3052
        %v3054 = vpop.f32.mrb[0].mxu0
        %3055 = vmatprep.mubr.f32.mxu0 0.0
        %3056 = vmatmul.mubr.f32.gmra.mrb[0].mxu0 %v725
        %v3057 = vpop.f32.mrb[0].mxu0
        %v3058 = vadd.f32 0.0, %v3057
        %v3059 = vpop.f32.mrb[0].mxu0
        %3060 = vmatprep.mubr.f32.mxu0 0.0
        %3061 = vmatmul.mubr.f32.gmra.mrb[0].mxu0 %v727
        %v3062 = vpop.f32.mrb[0].mxu0
        %v3063 = vadd.f32 0.0, %v3062
        %v3064 = vpop.f32.mrb[0].mxu0
        %3065 = vmatprep.mubr.f32.mxu0 0.0
        %3066 = vmatmul.mubr.f32.gmra.mrb[0].mxu0 %v729
        %v3067 = vpop.f32.mrb[0].mxu0
        %v3068 = vadd.f32 0.0, %v3067
        %v3069 = vpop.f32.mrb[0].mxu0
        %3070 = vmatprep.mubr.f32.mxu0 0.0
        %3071 = vmatmul.mubr.f32.gmra.mrb[0].mxu0 %v1776
        %v3072 = vpop.f32.mrb[0].mxu0
        %v3073 = vadd.f32 0.0, %v3072
        %v3074 = vpop.f32.mrb[0].mxu0
        %3075 = vmatprep.mubr.f32.mxu0 0.0
        %3076 = vmatmul.mubr.f32.gmra.mrb[0].mxu0 %v1779
        %v3077 = vpop.f32.mrb[0].mxu0
        %v3078 = vadd.f32 0.0, %v3077
        %v3079 = vpop.f32.mrb[0].mxu0
        %3080 = vmatprep.mubr.f32.mxu0 0.0
        %3081 = vmatmul.mubr.f32.gmra.mrb[0].mxu0 %v2858
        %v3082 = vpop.f32.mrb[0].mxu0
        %v3083 = vadd.f32 0.0, %v3082
        %v3084 = vpop.f32.mrb[0].mxu0
        %3085 = vmatprep.mubr.f32.mxu0 0.0
        %3086 = vmatmul.mubr.f32.gmra.mrb[0].mxu0 %v2861
        %v3087 = vpop.f32.mrb[0].mxu0
        %v3088 = vadd.f32 0.0, %v3087
        %v3089 = vpop.f32.mrb[0].mxu0
        %3090 = vdwg.mxu0
        %v3091 = vadd.f32 %v2823, %v2933
        %v3092 = vadd.f32 %v2824, %v2938
        %v3093 = vadd.f32 %v2825, %v2943
        %v3094 = vadd.f32 %v2826, %v2948
        %v3095 = vadd.f32 %v2827, %v2953
        %v3096 = vadd.f32 %v2828, %v2958
        %v3097 = vadd.f32 %v2829, %v2963
        %v3098 = vadd.f32 %v2830, %v2968
        %v3099 = vadd.f32 %v2831, %v2973
        %v3100 = vadd.f32 %v2832, %v2978
        %v3101 = vadd.f32 %v2833, %v2983
        %v3102 = vadd.f32 %v2834, %v2988
        %v3103 = vadd.f32 %v2835, %v2993
        %v3104 = vadd.f32 %v2836, %v2998
        %v3105 = vadd.f32 %v2837, %v3003
        %v3106 = vadd.f32 %v2838, %v3008
        %v3107 = vadd.f32 %v2839, %v3013
        %v3108 = vadd.f32 %v2840, %v3018
        %v3109 = vadd.f32 %v2841, %v3023
        %v3110 = vadd.f32 %v2842, %v3028
        %v3111 = vadd.f32 %v2843, %v3033
        %v3112 = vadd.f32 %v2844, %v3038
        %v3113 = vadd.f32 %v2845, %v3043
        %v3114 = vadd.f32 %v2846, %v3048
        %v3115 = vadd.f32 %v2847, %v3053
        %v3116 = vadd.f32 %v2848, %v3058
        %v3117 = vadd.f32 %v2849, %v3063
        %v3118 = vadd.f32 %v2850, %v3068
        %v3119 = vadd.f32 %v2851, %v3073
        %v3120 = vadd.f32 %v2852, %v3078
        %v3121 = vadd.f32 %v2853, %v3083
        %v3122 = vadd.f32 %v2854, %v3088
        %v3124 = vrot.slane %v235, 1
        %v3125 = vrot.slane %v236, 1
        %v3126 = vsel %vm290, %v3124, %v3125
        %v3127 = vrot.slane %v237, 1
        %v3128 = vsel %vm290, %v3125, %v3127
        %s3129 = scalar_lea.vmem %s1, 36
        %v3130 = vld [vmem:[%s3129] sm:$0xf]
        %v3131 = vsel %vm373, %v3126, 0
        %v3133 = vsel %vm373, %v3128, 0
        %v3136 = vsel %vm438, %v3130, 0
        %3138 = vmatprep.subr.mxu0 0.0
        %3139 = vmatpush1.msra.mxu0 %v3136
        %3140 = vmatprep.subr.mxu0 0.0
        %3141 = vmatpush1.msra.mxu0 0.0
        %3142 = vmatprep.subr.mxu0 0.0
        %3143 = vmatpush1.msra.mxu0 0.0
        %3144 = vmatprep.subr.mxu0 0.0
        %3145 = vmatpush1.msra.mxu0 0.0
        %3146 = vmatprep.subr.mxu0 0.0
        %3147 = vmatpush1.msra.mxu0 0.0
        %3148 = vmatprep.subr.mxu0 0.0
        %3149 = vmatpush1.msra.mxu0 0.0
        %3150 = vmatprep.subr.mxu0 0.0
        %3151 = vmatpush1.msra.mxu0 0.0
        %3152 = vmatprep.subr.mxu0 0.0
        %3153 = vmatpush1.msra.mxu0 0.0
        %3154 = vmatprep.subr.mxu0 0.0
        %3155 = vmatpush1.msra.mxu0 0.0
        %3156 = vmatprep.subr.mxu0 0.0
        %3157 = vmatpush1.msra.mxu0 0.0
        %3158 = vmatprep.subr.mxu0 0.0
        %3159 = vmatpush1.msra.mxu0 0.0
        %3160 = vmatprep.subr.mxu0 0.0
        %3161 = vmatpush1.msra.mxu0 0.0
        %3162 = vmatprep.subr.mxu0 0.0
        %3163 = vmatpush1.msra.mxu0 0.0
        %3164 = vmatprep.subr.mxu0 0.0
        %3165 = vmatpush1.msra.mxu0 0.0
        %3166 = vmatprep.subr.mxu0 0.0
        %3167 = vmatpush1.msra.mxu0 0.0
        %3168 = vmatprep.subr.mxu0 0.0
        %3169 = vmatpush1.msra.mxu0 0.0
        %3170 = vmatprep.subr.mxu0 0.0
        %3171 = vmatpush1.msra.mxu0 0.0
        %3172 = vmatprep.subr.mxu0 0.0
        %3173 = vmatpush1.msra.mxu0 0.0
        %3174 = vmatprep.subr.mxu0 0.0
        %3175 = vmatpush1.msra.mxu0 0.0
        %3176 = vmatprep.subr.mxu0 0.0
        %3177 = vmatpush1.msra.mxu0 0.0
        %3178 = vmatprep.subr.mxu0 0.0
        %3179 = vmatpush1.msra.mxu0 0.0
        %3180 = vmatprep.subr.mxu0 0.0
        %3181 = vmatpush1.msra.mxu0 0.0
        %3182 = vmatprep.subr.mxu0 0.0
        %3183 = vmatpush1.msra.mxu0 0.0
        %3184 = vmatprep.subr.mxu0 0.0
        %3185 = vmatpush1.msra.mxu0 0.0
        %3186 = vmatprep.subr.mxu0 0.0
        %3187 = vmatpush1.msra.mxu0 0.0
        %3188 = vmatprep.subr.mxu0 0.0
        %3189 = vmatpush1.msra.mxu0 0.0
        %3190 = vmatprep.subr.mxu0 0.0
        %3191 = vmatpush1.msra.mxu0 0.0
        %3192 = vmatprep.subr.mxu0 0.0
        %3193 = vmatpush1.msra.mxu0 0.0
        %3194 = vmatprep.subr.mxu0 0.0
        %3195 = vmatpush1.msra.mxu0 0.0
        %3196 = vmatprep.subr.mxu0 0.0
        %3197 = vmatpush1.msra.mxu0 0.0
        %3198 = vmatprep.subr.mxu0 0.0
        %3199 = vmatpush1.msra.mxu0 0.0
        %3200 = vmatprep.subr.mxu0 0.0
        %3201 = vmatpush1.msra.mxu0 0.0
        %3202 = vmatprep.mubr.f32.mxu0 0.0
        %3203 = vmatmul.mubr.f32.gmra.mrb[0].mxu0 %v382
        %v3204 = vpop.f32.mrb[0].mxu0
        %v3205 = vadd.f32 0.0, %v3204
        %v3206 = vpop.f32.mrb[0].mxu0
        %3207 = vmatprep.mubr.f32.mxu0 0.0
        %3208 = vmatmul.mubr.f32.gmra.mrb[0].mxu0 %v384
        %v3209 = vpop.f32.mrb[0].mxu0
        %v3210 = vadd.f32 0.0, %v3209
        %v3211 = vpop.f32.mrb[0].mxu0
        %3212 = vmatprep.mubr.f32.mxu0 0.0
        %3213 = vmatmul.mubr.f32.gmra.mrb[0].mxu0 %v386
        %v3214 = vpop.f32.mrb[0].mxu0
        %v3215 = vadd.f32 0.0, %v3214
        %v3216 = vpop.f32.mrb[0].mxu0
        %3217 = vmatprep.mubr.f32.mxu0 0.0
        %3218 = vmatmul.mubr.f32.gmra.mrb[0].mxu0 %v388
        %v3219 = vpop.f32.mrb[0].mxu0
        %v3220 = vadd.f32 0.0, %v3219
        %v3221 = vpop.f32.mrb[0].mxu0
        %3222 = vmatprep.mubr.f32.mxu0 0.0
        %3223 = vmatmul.mubr.f32.gmra.mrb[0].mxu0 %v390
        %v3224 = vpop.f32.mrb[0].mxu0
        %v3225 = vadd.f32 0.0, %v3224
        %v3226 = vpop.f32.mrb[0].mxu0
        %3227 = vmatprep.mubr.f32.mxu0 0.0
        %3228 = vmatmul.mubr.f32.gmra.mrb[0].mxu0 %v392
        %v3229 = vpop.f32.mrb[0].mxu0
        %v3230 = vadd.f32 0.0, %v3229
        %v3231 = vpop.f32.mrb[0].mxu0
        %3232 = vmatprep.mubr.f32.mxu0 0.0
        %3233 = vmatmul.mubr.f32.gmra.mrb[0].mxu0 %v394
        %v3234 = vpop.f32.mrb[0].mxu0
        %v3235 = vadd.f32 0.0, %v3234
        %v3236 = vpop.f32.mrb[0].mxu0
        %3237 = vmatprep.mubr.f32.mxu0 0.0
        %3238 = vmatmul.mubr.f32.gmra.mrb[0].mxu0 %v396
        %v3239 = vpop.f32.mrb[0].mxu0
        %v3240 = vadd.f32 0.0, %v3239
        %v3241 = vpop.f32.mrb[0].mxu0
        %3242 = vmatprep.mubr.f32.mxu0 0.0
        %3243 = vmatmul.mubr.f32.gmra.mrb[0].mxu0 %v398
        %v3244 = vpop.f32.mrb[0].mxu0
        %v3245 = vadd.f32 0.0, %v3244
        %v3246 = vpop.f32.mrb[0].mxu0
        %3247 = vmatprep.mubr.f32.mxu0 0.0
        %3248 = vmatmul.mubr.f32.gmra.mrb[0].mxu0 %v400
        %v3249 = vpop.f32.mrb[0].mxu0
        %v3250 = vadd.f32 0.0, %v3249
        %v3251 = vpop.f32.mrb[0].mxu0
        %3252 = vmatprep.mubr.f32.mxu0 0.0
        %3253 = vmatmul.mubr.f32.gmra.mrb[0].mxu0 %v402
        %v3254 = vpop.f32.mrb[0].mxu0
        %v3255 = vadd.f32 0.0, %v3254
        %v3256 = vpop.f32.mrb[0].mxu0
        %3257 = vmatprep.mubr.f32.mxu0 0.0
        %3258 = vmatmul.mubr.f32.gmra.mrb[0].mxu0 %v404
        %v3259 = vpop.f32.mrb[0].mxu0
        %v3260 = vadd.f32 0.0, %v3259
        %v3261 = vpop.f32.mrb[0].mxu0
        %3262 = vmatprep.mubr.f32.mxu0 0.0
        %3263 = vmatmul.mubr.f32.gmra.mrb[0].mxu0 %v406
        %v3264 = vpop.f32.mrb[0].mxu0
        %v3265 = vadd.f32 0.0, %v3264
        %v3266 = vpop.f32.mrb[0].mxu0
        %3267 = vmatprep.mubr.f32.mxu0 0.0
        %3268 = vmatmul.mubr.f32.gmra.mrb[0].mxu0 %v408
        %v3269 = vpop.f32.mrb[0].mxu0
        %v3270 = vadd.f32 0.0, %v3269
        %v3271 = vpop.f32.mrb[0].mxu0
        %3272 = vmatprep.mubr.f32.mxu0 0.0
        %3273 = vmatmul.mubr.f32.gmra.mrb[0].mxu0 %v410
        %v3274 = vpop.f32.mrb[0].mxu0
        %v3275 = vadd.f32 0.0, %v3274
        %v3276 = vpop.f32.mrb[0].mxu0
        %3277 = vmatprep.mubr.f32.mxu0 0.0
        %3278 = vmatmul.mubr.f32.gmra.mrb[0].mxu0 %v412
        %v3279 = vpop.f32.mrb[0].mxu0
        %v3280 = vadd.f32 0.0, %v3279
        %v3281 = vpop.f32.mrb[0].mxu0
        %3282 = vmatprep.mubr.f32.mxu0 0.0
        %3283 = vmatmul.mubr.f32.gmra.mrb[0].mxu0 %v414
        %v3284 = vpop.f32.mrb[0].mxu0
        %v3285 = vadd.f32 0.0, %v3284
        %v3286 = vpop.f32.mrb[0].mxu0
        %3287 = vmatprep.mubr.f32.mxu0 0.0
        %3288 = vmatmul.mubr.f32.gmra.mrb[0].mxu0 %v416
        %v3289 = vpop.f32.mrb[0].mxu0
        %v3290 = vadd.f32 0.0, %v3289
        %v3291 = vpop.f32.mrb[0].mxu0
        %3292 = vmatprep.mubr.f32.mxu0 0.0
        %3293 = vmatmul.mubr.f32.gmra.mrb[0].mxu0 %v418
        %v3294 = vpop.f32.mrb[0].mxu0
        %v3295 = vadd.f32 0.0, %v3294
        %v3296 = vpop.f32.mrb[0].mxu0
        %3297 = vmatprep.mubr.f32.mxu0 0.0
        %3298 = vmatmul.mubr.f32.gmra.mrb[0].mxu0 %v420
        %v3299 = vpop.f32.mrb[0].mxu0
        %v3300 = vadd.f32 0.0, %v3299
        %v3301 = vpop.f32.mrb[0].mxu0
        %3302 = vmatprep.mubr.f32.mxu0 0.0
        %3303 = vmatmul.mubr.f32.gmra.mrb[0].mxu0 %v422
        %v3304 = vpop.f32.mrb[0].mxu0
        %v3305 = vadd.f32 0.0, %v3304
        %v3306 = vpop.f32.mrb[0].mxu0
        %3307 = vmatprep.mubr.f32.mxu0 0.0
        %3308 = vmatmul.mubr.f32.gmra.mrb[0].mxu0 %v424
        %v3309 = vpop.f32.mrb[0].mxu0
        %v3310 = vadd.f32 0.0, %v3309
        %v3311 = vpop.f32.mrb[0].mxu0
        %3312 = vmatprep.mubr.f32.mxu0 0.0
        %3313 = vmatmul.mubr.f32.gmra.mrb[0].mxu0 %v426
        %v3314 = vpop.f32.mrb[0].mxu0
        %v3315 = vadd.f32 0.0, %v3314
        %v3316 = vpop.f32.mrb[0].mxu0
        %3317 = vmatprep.mubr.f32.mxu0 0.0
        %3318 = vmatmul.mubr.f32.gmra.mrb[0].mxu0 %v428
        %v3319 = vpop.f32.mrb[0].mxu0
        %v3320 = vadd.f32 0.0, %v3319
        %v3321 = vpop.f32.mrb[0].mxu0
        %3322 = vmatprep.mubr.f32.mxu0 0.0
        %3323 = vmatmul.mubr.f32.gmra.mrb[0].mxu0 %v430
        %v3324 = vpop.f32.mrb[0].mxu0
        %v3325 = vadd.f32 0.0, %v3324
        %v3326 = vpop.f32.mrb[0].mxu0
        %3327 = vmatprep.mubr.f32.mxu0 0.0
        %3328 = vmatmul.mubr.f32.gmra.mrb[0].mxu0 %v432
        %v3329 = vpop.f32.mrb[0].mxu0
        %v3330 = vadd.f32 0.0, %v3329
        %v3331 = vpop.f32.mrb[0].mxu0
        %3332 = vmatprep.mubr.f32.mxu0 0.0
        %3333 = vmatmul.mubr.f32.gmra.mrb[0].mxu0 %v434
        %v3334 = vpop.f32.mrb[0].mxu0
        %v3335 = vadd.f32 0.0, %v3334
        %v3336 = vpop.f32.mrb[0].mxu0
        %3337 = vmatprep.mubr.f32.mxu0 0.0
        %3338 = vmatmul.mubr.f32.gmra.mrb[0].mxu0 %v436
        %v3339 = vpop.f32.mrb[0].mxu0
        %v3340 = vadd.f32 0.0, %v3339
        %v3341 = vpop.f32.mrb[0].mxu0
        %3342 = vmatprep.mubr.f32.mxu0 0.0
        %3343 = vmatmul.mubr.f32.gmra.mrb[0].mxu0 %v2049
        %v3344 = vpop.f32.mrb[0].mxu0
        %v3345 = vadd.f32 0.0, %v3344
        %v3346 = vpop.f32.mrb[0].mxu0
        %3347 = vmatprep.mubr.f32.mxu0 0.0
        %3348 = vmatmul.mubr.f32.gmra.mrb[0].mxu0 %v2051
        %v3349 = vpop.f32.mrb[0].mxu0
        %v3350 = vadd.f32 0.0, %v3349
        %v3351 = vpop.f32.mrb[0].mxu0
        %3352 = vmatprep.mubr.f32.mxu0 0.0
        %3353 = vmatmul.mubr.f32.gmra.mrb[0].mxu0 %v3131
        %v3354 = vpop.f32.mrb[0].mxu0
        %v3355 = vadd.f32 0.0, %v3354
        %v3356 = vpop.f32.mrb[0].mxu0
        %3357 = vmatprep.mubr.f32.mxu0 0.0
        %3358 = vmatmul.mubr.f32.gmra.mrb[0].mxu0 %v3133
        %v3359 = vpop.f32.mrb[0].mxu0
        %v3360 = vadd.f32 0.0, %v3359
        %v3361 = vpop.f32.mrb[0].mxu0
        %3362 = vdwg.mxu0
        %v3363 = vadd.f32 %v3091, %v3205
        %v3364 = vadd.f32 %v3092, %v3210
        %v3365 = vadd.f32 %v3093, %v3215
        %v3366 = vadd.f32 %v3094, %v3220
        %v3367 = vadd.f32 %v3095, %v3225
        %v3368 = vadd.f32 %v3096, %v3230
        %v3369 = vadd.f32 %v3097, %v3235
        %v3370 = vadd.f32 %v3098, %v3240
        %v3371 = vadd.f32 %v3099, %v3245
        %v3372 = vadd.f32 %v3100, %v3250
        %v3373 = vadd.f32 %v3101, %v3255
        %v3374 = vadd.f32 %v3102, %v3260
        %v3375 = vadd.f32 %v3103, %v3265
        %v3376 = vadd.f32 %v3104, %v3270
        %v3377 = vadd.f32 %v3105, %v3275
        %v3378 = vadd.f32 %v3106, %v3280
        %v3379 = vadd.f32 %v3107, %v3285
        %v3380 = vadd.f32 %v3108, %v3290
        %v3381 = vadd.f32 %v3109, %v3295
        %v3382 = vadd.f32 %v3110, %v3300
        %v3383 = vadd.f32 %v3111, %v3305
        %v3384 = vadd.f32 %v3112, %v3310
        %v3385 = vadd.f32 %v3113, %v3315
        %v3386 = vadd.f32 %v3114, %v3320
        %v3387 = vadd.f32 %v3115, %v3325
        %v3388 = vadd.f32 %v3116, %v3330
        %v3389 = vadd.f32 %v3117, %v3335
        %v3390 = vadd.f32 %v3118, %v3340
        %v3391 = vadd.f32 %v3119, %v3345
        %v3392 = vadd.f32 %v3120, %v3350
        %v3393 = vadd.f32 %v3121, %v3355
        %v3394 = vadd.f32 %v3122, %v3360
        %v3395 = vrot.slane %v235, 2
        %v3396 = vrot.slane %v236, 2
        %v3397 = vsel %vm959, %v3395, %v3396
        %v3398 = vrot.slane %v237, 2
        %v3399 = vsel %vm959, %v3396, %v3398
        %s3400 = scalar_lea.vmem %s1, 40
        %v3401 = vld [vmem:[%s3400] sm:$0xf]
        %v3402 = vsel %vm373, %v3397, 0
        %v3404 = vsel %vm373, %v3399, 0
        %v3407 = vsel %vm438, %v3401, 0
        %3409 = vmatprep.subr.mxu0 0.0
        %3410 = vmatpush1.msra.mxu0 %v3407
        %3411 = vmatprep.subr.mxu0 0.0
        %3412 = vmatpush1.msra.mxu0 0.0
        %3413 = vmatprep.subr.mxu0 0.0
        %3414 = vmatpush1.msra.mxu0 0.0
        %3415 = vmatprep.subr.mxu0 0.0
        %3416 = vmatpush1.msra.mxu0 0.0
        %3417 = vmatprep.subr.mxu0 0.0
        %3418 = vmatpush1.msra.mxu0 0.0
        %3419 = vmatprep.subr.mxu0 0.0
        %3420 = vmatpush1.msra.mxu0 0.0
        %3421 = vmatprep.subr.mxu0 0.0
        %3422 = vmatpush1.msra.mxu0 0.0
        %3423 = vmatprep.subr.mxu0 0.0
        %3424 = vmatpush1.msra.mxu0 0.0
        %3425 = vmatprep.subr.mxu0 0.0
        %3426 = vmatpush1.msra.mxu0 0.0
        %3427 = vmatprep.subr.mxu0 0.0
        %3428 = vmatpush1.msra.mxu0 0.0
        %3429 = vmatprep.subr.mxu0 0.0
        %3430 = vmatpush1.msra.mxu0 0.0
        %3431 = vmatprep.subr.mxu0 0.0
        %3432 = vmatpush1.msra.mxu0 0.0
        %3433 = vmatprep.subr.mxu0 0.0
        %3434 = vmatpush1.msra.mxu0 0.0
        %3435 = vmatprep.subr.mxu0 0.0
        %3436 = vmatpush1.msra.mxu0 0.0
        %3437 = vmatprep.subr.mxu0 0.0
        %3438 = vmatpush1.msra.mxu0 0.0
        %3439 = vmatprep.subr.mxu0 0.0
        %3440 = vmatpush1.msra.mxu0 0.0
        %3441 = vmatprep.subr.mxu0 0.0
        %3442 = vmatpush1.msra.mxu0 0.0
        %3443 = vmatprep.subr.mxu0 0.0
        %3444 = vmatpush1.msra.mxu0 0.0
        %3445 = vmatprep.subr.mxu0 0.0
        %3446 = vmatpush1.msra.mxu0 0.0
        %3447 = vmatprep.subr.mxu0 0.0
        %3448 = vmatpush1.msra.mxu0 0.0
        %3449 = vmatprep.subr.mxu0 0.0
        %3450 = vmatpush1.msra.mxu0 0.0
        %3451 = vmatprep.subr.mxu0 0.0
        %3452 = vmatpush1.msra.mxu0 0.0
        %3453 = vmatprep.subr.mxu0 0.0
        %3454 = vmatpush1.msra.mxu0 0.0
        %3455 = vmatprep.subr.mxu0 0.0
        %3456 = vmatpush1.msra.mxu0 0.0
        %3457 = vmatprep.subr.mxu0 0.0
        %3458 = vmatpush1.msra.mxu0 0.0
        %3459 = vmatprep.subr.mxu0 0.0
        %3460 = vmatpush1.msra.mxu0 0.0
        %3461 = vmatprep.subr.mxu0 0.0
        %3462 = vmatpush1.msra.mxu0 0.0
        %3463 = vmatprep.subr.mxu0 0.0
        %3464 = vmatpush1.msra.mxu0 0.0
        %3465 = vmatprep.subr.mxu0 0.0
        %3466 = vmatpush1.msra.mxu0 0.0
        %3467 = vmatprep.subr.mxu0 0.0
        %3468 = vmatpush1.msra.mxu0 0.0
        %3469 = vmatprep.subr.mxu0 0.0
        %3470 = vmatpush1.msra.mxu0 0.0
        %3471 = vmatprep.subr.mxu0 0.0
        %3472 = vmatpush1.msra.mxu0 0.0
        %3473 = vmatprep.mubr.f32.mxu0 0.0
        %3474 = vmatmul.mubr.f32.gmra.mrb[0].mxu0 %v1050
        %v3475 = vpop.f32.mrb[0].mxu0
        %v3476 = vadd.f32 0.0, %v3475
        %v3477 = vpop.f32.mrb[0].mxu0
        %3478 = vmatprep.mubr.f32.mxu0 0.0
        %3479 = vmatmul.mubr.f32.gmra.mrb[0].mxu0 %v1052
        %v3480 = vpop.f32.mrb[0].mxu0
        %v3481 = vadd.f32 0.0, %v3480
        %v3482 = vpop.f32.mrb[0].mxu0
        %3483 = vmatprep.mubr.f32.mxu0 0.0
        %3484 = vmatmul.mubr.f32.gmra.mrb[0].mxu0 %v1054
        %v3485 = vpop.f32.mrb[0].mxu0
        %v3486 = vadd.f32 0.0, %v3485
        %v3487 = vpop.f32.mrb[0].mxu0
        %3488 = vmatprep.mubr.f32.mxu0 0.0
        %3489 = vmatmul.mubr.f32.gmra.mrb[0].mxu0 %v1056
        %v3490 = vpop.f32.mrb[0].mxu0
        %v3491 = vadd.f32 0.0, %v3490
        %v3492 = vpop.f32.mrb[0].mxu0
        %3493 = vmatprep.mubr.f32.mxu0 0.0
        %3494 = vmatmul.mubr.f32.gmra.mrb[0].mxu0 %v1058
        %v3495 = vpop.f32.mrb[0].mxu0
        %v3496 = vadd.f32 0.0, %v3495
        %v3497 = vpop.f32.mrb[0].mxu0
        %3498 = vmatprep.mubr.f32.mxu0 0.0
        %3499 = vmatmul.mubr.f32.gmra.mrb[0].mxu0 %v1060
        %v3500 = vpop.f32.mrb[0].mxu0
        %v3501 = vadd.f32 0.0, %v3500
        %v3502 = vpop.f32.mrb[0].mxu0
        %3503 = vmatprep.mubr.f32.mxu0 0.0
        %3504 = vmatmul.mubr.f32.gmra.mrb[0].mxu0 %v1062
        %v3505 = vpop.f32.mrb[0].mxu0
        %v3506 = vadd.f32 0.0, %v3505
        %v3507 = vpop.f32.mrb[0].mxu0
        %3508 = vmatprep.mubr.f32.mxu0 0.0
        %3509 = vmatmul.mubr.f32.gmra.mrb[0].mxu0 %v1064
        %v3510 = vpop.f32.mrb[0].mxu0
        %v3511 = vadd.f32 0.0, %v3510
        %v3512 = vpop.f32.mrb[0].mxu0
        %3513 = vmatprep.mubr.f32.mxu0 0.0
        %3514 = vmatmul.mubr.f32.gmra.mrb[0].mxu0 %v1066
        %v3515 = vpop.f32.mrb[0].mxu0
        %v3516 = vadd.f32 0.0, %v3515
        %v3517 = vpop.f32.mrb[0].mxu0
        %3518 = vmatprep.mubr.f32.mxu0 0.0
        %3519 = vmatmul.mubr.f32.gmra.mrb[0].mxu0 %v1068
        %v3520 = vpop.f32.mrb[0].mxu0
        %v3521 = vadd.f32 0.0, %v3520
        %v3522 = vpop.f32.mrb[0].mxu0
        %3523 = vmatprep.mubr.f32.mxu0 0.0
        %3524 = vmatmul.mubr.f32.gmra.mrb[0].mxu0 %v1070
        %v3525 = vpop.f32.mrb[0].mxu0
        %v3526 = vadd.f32 0.0, %v3525
        %v3527 = vpop.f32.mrb[0].mxu0
        %3528 = vmatprep.mubr.f32.mxu0 0.0
        %3529 = vmatmul.mubr.f32.gmra.mrb[0].mxu0 %v1072
        %v3530 = vpop.f32.mrb[0].mxu0
        %v3531 = vadd.f32 0.0, %v3530
        %v3532 = vpop.f32.mrb[0].mxu0
        %3533 = vmatprep.mubr.f32.mxu0 0.0
        %3534 = vmatmul.mubr.f32.gmra.mrb[0].mxu0 %v1074
        %v3535 = vpop.f32.mrb[0].mxu0
        %v3536 = vadd.f32 0.0, %v3535
        %v3537 = vpop.f32.mrb[0].mxu0
        %3538 = vmatprep.mubr.f32.mxu0 0.0
        %3539 = vmatmul.mubr.f32.gmra.mrb[0].mxu0 %v1076
        %v3540 = vpop.f32.mrb[0].mxu0
        %v3541 = vadd.f32 0.0, %v3540
        %v3542 = vpop.f32.mrb[0].mxu0
        %3543 = vmatprep.mubr.f32.mxu0 0.0
        %3544 = vmatmul.mubr.f32.gmra.mrb[0].mxu0 %v1078
        %v3545 = vpop.f32.mrb[0].mxu0
        %v3546 = vadd.f32 0.0, %v3545
        %v3547 = vpop.f32.mrb[0].mxu0
        %3548 = vmatprep.mubr.f32.mxu0 0.0
        %3549 = vmatmul.mubr.f32.gmra.mrb[0].mxu0 %v1080
        %v3550 = vpop.f32.mrb[0].mxu0
        %v3551 = vadd.f32 0.0, %v3550
        %v3552 = vpop.f32.mrb[0].mxu0
        %3553 = vmatprep.mubr.f32.mxu0 0.0
        %3554 = vmatmul.mubr.f32.gmra.mrb[0].mxu0 %v1082
        %v3555 = vpop.f32.mrb[0].mxu0
        %v3556 = vadd.f32 0.0, %v3555
        %v3557 = vpop.f32.mrb[0].mxu0
        %3558 = vmatprep.mubr.f32.mxu0 0.0
        %3559 = vmatmul.mubr.f32.gmra.mrb[0].mxu0 %v1084
        %v3560 = vpop.f32.mrb[0].mxu0
        %v3561 = vadd.f32 0.0, %v3560
        %v3562 = vpop.f32.mrb[0].mxu0
        %3563 = vmatprep.mubr.f32.mxu0 0.0
        %3564 = vmatmul.mubr.f32.gmra.mrb[0].mxu0 %v1086
        %v3565 = vpop.f32.mrb[0].mxu0
        %v3566 = vadd.f32 0.0, %v3565
        %v3567 = vpop.f32.mrb[0].mxu0
        %3568 = vmatprep.mubr.f32.mxu0 0.0
        %3569 = vmatmul.mubr.f32.gmra.mrb[0].mxu0 %v1088
        %v3570 = vpop.f32.mrb[0].mxu0
        %v3571 = vadd.f32 0.0, %v3570
        %v3572 = vpop.f32.mrb[0].mxu0
        %3573 = vmatprep.mubr.f32.mxu0 0.0
        %3574 = vmatmul.mubr.f32.gmra.mrb[0].mxu0 %v1090
        %v3575 = vpop.f32.mrb[0].mxu0
        %v3576 = vadd.f32 0.0, %v3575
        %v3577 = vpop.f32.mrb[0].mxu0
        %3578 = vmatprep.mubr.f32.mxu0 0.0
        %3579 = vmatmul.mubr.f32.gmra.mrb[0].mxu0 %v1092
        %v3580 = vpop.f32.mrb[0].mxu0
        %v3581 = vadd.f32 0.0, %v3580
        %v3582 = vpop.f32.mrb[0].mxu0
        %3583 = vmatprep.mubr.f32.mxu0 0.0
        %3584 = vmatmul.mubr.f32.gmra.mrb[0].mxu0 %v1094
        %v3585 = vpop.f32.mrb[0].mxu0
        %v3586 = vadd.f32 0.0, %v3585
        %v3587 = vpop.f32.mrb[0].mxu0
        %3588 = vmatprep.mubr.f32.mxu0 0.0
        %3589 = vmatmul.mubr.f32.gmra.mrb[0].mxu0 %v1096
        %v3590 = vpop.f32.mrb[0].mxu0
        %v3591 = vadd.f32 0.0, %v3590
        %v3592 = vpop.f32.mrb[0].mxu0
        %3593 = vmatprep.mubr.f32.mxu0 0.0
        %3594 = vmatmul.mubr.f32.gmra.mrb[0].mxu0 %v1098
        %v3595 = vpop.f32.mrb[0].mxu0
        %v3596 = vadd.f32 0.0, %v3595
        %v3597 = vpop.f32.mrb[0].mxu0
        %3598 = vmatprep.mubr.f32.mxu0 0.0
        %3599 = vmatmul.mubr.f32.gmra.mrb[0].mxu0 %v1100
        %v3600 = vpop.f32.mrb[0].mxu0
        %v3601 = vadd.f32 0.0, %v3600
        %v3602 = vpop.f32.mrb[0].mxu0
        %3603 = vmatprep.mubr.f32.mxu0 0.0
        %3604 = vmatmul.mubr.f32.gmra.mrb[0].mxu0 %v1102
        %v3605 = vpop.f32.mrb[0].mxu0
        %v3606 = vadd.f32 0.0, %v3605
        %v3607 = vpop.f32.mrb[0].mxu0
        %3608 = vmatprep.mubr.f32.mxu0 0.0
        %3609 = vmatmul.mubr.f32.gmra.mrb[0].mxu0 %v1104
        %v3610 = vpop.f32.mrb[0].mxu0
        %v3611 = vadd.f32 0.0, %v3610
        %v3612 = vpop.f32.mrb[0].mxu0
        %3613 = vmatprep.mubr.f32.mxu0 0.0
        %3614 = vmatmul.mubr.f32.gmra.mrb[0].mxu0 %v2320
        %v3615 = vpop.f32.mrb[0].mxu0
        %v3616 = vadd.f32 0.0, %v3615
        %v3617 = vpop.f32.mrb[0].mxu0
        %3618 = vmatprep.mubr.f32.mxu0 0.0
        %3619 = vmatmul.mubr.f32.gmra.mrb[0].mxu0 %v2322
        %v3620 = vpop.f32.mrb[0].mxu0
        %v3621 = vadd.f32 0.0, %v3620
        %v3622 = vpop.f32.mrb[0].mxu0
        %3623 = vmatprep.mubr.f32.mxu0 0.0
        %3624 = vmatmul.mubr.f32.gmra.mrb[0].mxu0 %v3402
        %v3625 = vpop.f32.mrb[0].mxu0
        %v3626 = vadd.f32 0.0, %v3625
        %v3627 = vpop.f32.mrb[0].mxu0
        %3628 = vmatprep.mubr.f32.mxu0 0.0
        %3629 = vmatmul.mubr.f32.gmra.mrb[0].mxu0 %v3404
        %v3630 = vpop.f32.mrb[0].mxu0
        %v3631 = vadd.f32 0.0, %v3630
        %v3632 = vpop.f32.mrb[0].mxu0
        %3633 = vdwg.mxu0
        %v3634 = vadd.f32 %v3363, %v3476
        %v3635 = vadd.f32 %v3364, %v3481
        %v3636 = vadd.f32 %v3365, %v3486
        %v3637 = vadd.f32 %v3366, %v3491
        %v3638 = vadd.f32 %v3367, %v3496
        %v3639 = vadd.f32 %v3368, %v3501
        %v3640 = vadd.f32 %v3369, %v3506
        %v3641 = vadd.f32 %v3370, %v3511
        %v3642 = vadd.f32 %v3371, %v3516
        %v3643 = vadd.f32 %v3372, %v3521
        %v3644 = vadd.f32 %v3373, %v3526
        %v3645 = vadd.f32 %v3374, %v3531
        %v3646 = vadd.f32 %v3375, %v3536
        %v3647 = vadd.f32 %v3376, %v3541
        %v3648 = vadd.f32 %v3377, %v3546
        %v3649 = vadd.f32 %v3378, %v3551
        %v3650 = vadd.f32 %v3379, %v3556
        %v3651 = vadd.f32 %v3380, %v3561
        %v3652 = vadd.f32 %v3381, %v3566
        %v3653 = vadd.f32 %v3382, %v3571
        %v3654 = vadd.f32 %v3383, %v3576
        %v3655 = vadd.f32 %v3384, %v3581
        %v3656 = vadd.f32 %v3385, %v3586
        %v3657 = vadd.f32 %v3386, %v3591
        %v3658 = vadd.f32 %v3387, %v3596
        %v3659 = vadd.f32 %v3388, %v3601
        %v3660 = vadd.f32 %v3389, %v3606
        %v3661 = vadd.f32 %v3390, %v3611
        %v3662 = vadd.f32 %v3391, %v3616
        %v3663 = vadd.f32 %v3392, %v3621
        %v3664 = vadd.f32 %v3393, %v3626
        %v3665 = vadd.f32 %v3394, %v3631
        %v3666 = vrot.slane %v235, 3
        %v3667 = vrot.slane %v236, 3
        %v3668 = vsel %vm1366, %v3666, %v3667
        %v3669 = vrot.slane %v237, 3
        %v3670 = vsel %vm1366, %v3667, %v3669
        %s3671 = scalar_lea.vmem %s1, 44
        %v3672 = vld [vmem:[%s3671] sm:$0xf]
        %v3673 = vsel %vm373, %v3668, 0
        %v3675 = vsel %vm373, %v3670, 0
        %v3678 = vsel %vm438, %v3672, 0
        %3680 = vmatprep.subr.mxu0 0.0
        %3681 = vmatpush1.msra.mxu0 %v3678
        %3682 = vmatprep.subr.mxu0 0.0
        %3683 = vmatpush1.msra.mxu0 0.0
        %3684 = vmatprep.subr.mxu0 0.0
        %3685 = vmatpush1.msra.mxu0 0.0
        %3686 = vmatprep.subr.mxu0 0.0
        %3687 = vmatpush1.msra.mxu0 0.0
        %3688 = vmatprep.subr.mxu0 0.0
        %3689 = vmatpush1.msra.mxu0 0.0
        %3690 = vmatprep.subr.mxu0 0.0
        %3691 = vmatpush1.msra.mxu0 0.0
        %3692 = vmatprep.subr.mxu0 0.0
        %3693 = vmatpush1.msra.mxu0 0.0
        %3694 = vmatprep.subr.mxu0 0.0
        %3695 = vmatpush1.msra.mxu0 0.0
        %3696 = vmatprep.subr.mxu0 0.0
        %3697 = vmatpush1.msra.mxu0 0.0
        %3698 = vmatprep.subr.mxu0 0.0
        %3699 = vmatpush1.msra.mxu0 0.0
        %3700 = vmatprep.subr.mxu0 0.0
        %3701 = vmatpush1.msra.mxu0 0.0
        %3702 = vmatprep.subr.mxu0 0.0
        %3703 = vmatpush1.msra.mxu0 0.0
        %3704 = vmatprep.subr.mxu0 0.0
        %3705 = vmatpush1.msra.mxu0 0.0
        %3706 = vmatprep.subr.mxu0 0.0
        %3707 = vmatpush1.msra.mxu0 0.0
        %3708 = vmatprep.subr.mxu0 0.0
        %3709 = vmatpush1.msra.mxu0 0.0
        %3710 = vmatprep.subr.mxu0 0.0
        %3711 = vmatpush1.msra.mxu0 0.0
        %3712 = vmatprep.subr.mxu0 0.0
        %3713 = vmatpush1.msra.mxu0 0.0
        %3714 = vmatprep.subr.mxu0 0.0
        %3715 = vmatpush1.msra.mxu0 0.0
        %3716 = vmatprep.subr.mxu0 0.0
        %3717 = vmatpush1.msra.mxu0 0.0
        %3718 = vmatprep.subr.mxu0 0.0
        %3719 = vmatpush1.msra.mxu0 0.0
        %3720 = vmatprep.subr.mxu0 0.0
        %3721 = vmatpush1.msra.mxu0 0.0
        %3722 = vmatprep.subr.mxu0 0.0
        %3723 = vmatpush1.msra.mxu0 0.0
        %3724 = vmatprep.subr.mxu0 0.0
        %3725 = vmatpush1.msra.mxu0 0.0
        %3726 = vmatprep.subr.mxu0 0.0
        %3727 = vmatpush1.msra.mxu0 0.0
        %3728 = vmatprep.subr.mxu0 0.0
        %3729 = vmatpush1.msra.mxu0 0.0
        %3730 = vmatprep.subr.mxu0 0.0
        %3731 = vmatpush1.msra.mxu0 0.0
        %3732 = vmatprep.subr.mxu0 0.0
        %3733 = vmatpush1.msra.mxu0 0.0
        %3734 = vmatprep.subr.mxu0 0.0
        %3735 = vmatpush1.msra.mxu0 0.0
        %3736 = vmatprep.subr.mxu0 0.0
        %3737 = vmatpush1.msra.mxu0 0.0
        %3738 = vmatprep.subr.mxu0 0.0
        %3739 = vmatpush1.msra.mxu0 0.0
        %3740 = vmatprep.subr.mxu0 0.0
        %3741 = vmatpush1.msra.mxu0 0.0
        %3742 = vmatprep.subr.mxu0 0.0
        %3743 = vmatpush1.msra.mxu0 0.0
        %3744 = vmatprep.mubr.f32.mxu0 0.0
        %3745 = vmatmul.mubr.f32.gmra.mrb[0].mxu0 %v1457
        %v3746 = vpop.f32.mrb[0].mxu0
        %v3747 = vadd.f32 0.0, %v3746
        %v3748 = vpop.f32.mrb[0].mxu0
        %3749 = vmatprep.mubr.f32.mxu0 0.0
        %3750 = vmatmul.mubr.f32.gmra.mrb[0].mxu0 %v1459
        %v3751 = vpop.f32.mrb[0].mxu0
        %v3752 = vadd.f32 0.0, %v3751
        %v3753 = vpop.f32.mrb[0].mxu0
        %3754 = vmatprep.mubr.f32.mxu0 0.0
        %3755 = vmatmul.mubr.f32.gmra.mrb[0].mxu0 %v1461
        %v3756 = vpop.f32.mrb[0].mxu0
        %v3757 = vadd.f32 0.0, %v3756
        %v3758 = vpop.f32.mrb[0].mxu0
        %3759 = vmatprep.mubr.f32.mxu0 0.0
        %3760 = vmatmul.mubr.f32.gmra.mrb[0].mxu0 %v1463
        %v3761 = vpop.f32.mrb[0].mxu0
        %v3762 = vadd.f32 0.0, %v3761
        %v3763 = vpop.f32.mrb[0].mxu0
        %3764 = vmatprep.mubr.f32.mxu0 0.0
        %3765 = vmatmul.mubr.f32.gmra.mrb[0].mxu0 %v1465
        %v3766 = vpop.f32.mrb[0].mxu0
        %v3767 = vadd.f32 0.0, %v3766
        %v3768 = vpop.f32.mrb[0].mxu0
        %3769 = vmatprep.mubr.f32.mxu0 0.0
        %3770 = vmatmul.mubr.f32.gmra.mrb[0].mxu0 %v1467
        %v3771 = vpop.f32.mrb[0].mxu0
        %v3772 = vadd.f32 0.0, %v3771
        %v3773 = vpop.f32.mrb[0].mxu0
        %3774 = vmatprep.mubr.f32.mxu0 0.0
        %3775 = vmatmul.mubr.f32.gmra.mrb[0].mxu0 %v1469
        %v3776 = vpop.f32.mrb[0].mxu0
        %v3777 = vadd.f32 0.0, %v3776
        %v3778 = vpop.f32.mrb[0].mxu0
        %3779 = vmatprep.mubr.f32.mxu0 0.0
        %3780 = vmatmul.mubr.f32.gmra.mrb[0].mxu0 %v1471
        %v3781 = vpop.f32.mrb[0].mxu0
        %v3782 = vadd.f32 0.0, %v3781
        %v3783 = vpop.f32.mrb[0].mxu0
        %3784 = vmatprep.mubr.f32.mxu0 0.0
        %3785 = vmatmul.mubr.f32.gmra.mrb[0].mxu0 %v1473
        %v3786 = vpop.f32.mrb[0].mxu0
        %v3787 = vadd.f32 0.0, %v3786
        %v3788 = vpop.f32.mrb[0].mxu0
        %3789 = vmatprep.mubr.f32.mxu0 0.0
        %3790 = vmatmul.mubr.f32.gmra.mrb[0].mxu0 %v1475
        %v3791 = vpop.f32.mrb[0].mxu0
        %v3792 = vadd.f32 0.0, %v3791
        %v3793 = vpop.f32.mrb[0].mxu0
        %3794 = vmatprep.mubr.f32.mxu0 0.0
        %3795 = vmatmul.mubr.f32.gmra.mrb[0].mxu0 %v1477
        %v3796 = vpop.f32.mrb[0].mxu0
        %v3797 = vadd.f32 0.0, %v3796
        %v3798 = vpop.f32.mrb[0].mxu0
        %3799 = vmatprep.mubr.f32.mxu0 0.0
        %3800 = vmatmul.mubr.f32.gmra.mrb[0].mxu0 %v1479
        %v3801 = vpop.f32.mrb[0].mxu0
        %v3802 = vadd.f32 0.0, %v3801
        %v3803 = vpop.f32.mrb[0].mxu0
        %3804 = vmatprep.mubr.f32.mxu0 0.0
        %3805 = vmatmul.mubr.f32.gmra.mrb[0].mxu0 %v1481
        %v3806 = vpop.f32.mrb[0].mxu0
        %v3807 = vadd.f32 0.0, %v3806
        %v3808 = vpop.f32.mrb[0].mxu0
        %3809 = vmatprep.mubr.f32.mxu0 0.0
        %3810 = vmatmul.mubr.f32.gmra.mrb[0].mxu0 %v1483
        %v3811 = vpop.f32.mrb[0].mxu0
        %v3812 = vadd.f32 0.0, %v3811
        %v3813 = vpop.f32.mrb[0].mxu0
        %3814 = vmatprep.mubr.f32.mxu0 0.0
        %3815 = vmatmul.mubr.f32.gmra.mrb[0].mxu0 %v1485
        %v3816 = vpop.f32.mrb[0].mxu0
        %v3817 = vadd.f32 0.0, %v3816
        %v3818 = vpop.f32.mrb[0].mxu0
        %3819 = vmatprep.mubr.f32.mxu0 0.0
        %3820 = vmatmul.mubr.f32.gmra.mrb[0].mxu0 %v1487
        %v3821 = vpop.f32.mrb[0].mxu0
        %v3822 = vadd.f32 0.0, %v3821
        %v3823 = vpop.f32.mrb[0].mxu0
        %3824 = vmatprep.mubr.f32.mxu0 0.0
        %3825 = vmatmul.mubr.f32.gmra.mrb[0].mxu0 %v1489
        %v3826 = vpop.f32.mrb[0].mxu0
        %v3827 = vadd.f32 0.0, %v3826
        %v3828 = vpop.f32.mrb[0].mxu0
        %3829 = vmatprep.mubr.f32.mxu0 0.0
        %3830 = vmatmul.mubr.f32.gmra.mrb[0].mxu0 %v1491
        %v3831 = vpop.f32.mrb[0].mxu0
        %v3832 = vadd.f32 0.0, %v3831
        %v3833 = vpop.f32.mrb[0].mxu0
        %3834 = vmatprep.mubr.f32.mxu0 0.0
        %3835 = vmatmul.mubr.f32.gmra.mrb[0].mxu0 %v1493
        %v3836 = vpop.f32.mrb[0].mxu0
        %v3837 = vadd.f32 0.0, %v3836
        %v3838 = vpop.f32.mrb[0].mxu0
        %3839 = vmatprep.mubr.f32.mxu0 0.0
        %3840 = vmatmul.mubr.f32.gmra.mrb[0].mxu0 %v1495
        %v3841 = vpop.f32.mrb[0].mxu0
        %v3842 = vadd.f32 0.0, %v3841
        %v3843 = vpop.f32.mrb[0].mxu0
        %3844 = vmatprep.mubr.f32.mxu0 0.0
        %3845 = vmatmul.mubr.f32.gmra.mrb[0].mxu0 %v1497
        %v3846 = vpop.f32.mrb[0].mxu0
        %v3847 = vadd.f32 0.0, %v3846
        %v3848 = vpop.f32.mrb[0].mxu0
        %3849 = vmatprep.mubr.f32.mxu0 0.0
        %3850 = vmatmul.mubr.f32.gmra.mrb[0].mxu0 %v1499
        %v3851 = vpop.f32.mrb[0].mxu0
        %v3852 = vadd.f32 0.0, %v3851
        %v3853 = vpop.f32.mrb[0].mxu0
        %3854 = vmatprep.mubr.f32.mxu0 0.0
        %3855 = vmatmul.mubr.f32.gmra.mrb[0].mxu0 %v1501
        %v3856 = vpop.f32.mrb[0].mxu0
        %v3857 = vadd.f32 0.0, %v3856
        %v3858 = vpop.f32.mrb[0].mxu0
        %3859 = vmatprep.mubr.f32.mxu0 0.0
        %3860 = vmatmul.mubr.f32.gmra.mrb[0].mxu0 %v1503
        %v3861 = vpop.f32.mrb[0].mxu0
        %v3862 = vadd.f32 0.0, %v3861
        %v3863 = vpop.f32.mrb[0].mxu0
        %3864 = vmatprep.mubr.f32.mxu0 0.0
        %3865 = vmatmul.mubr.f32.gmra.mrb[0].mxu0 %v1505
        %v3866 = vpop.f32.mrb[0].mxu0
        %v3867 = vadd.f32 0.0, %v3866
        %v3868 = vpop.f32.mrb[0].mxu0
        %3869 = vmatprep.mubr.f32.mxu0 0.0
        %3870 = vmatmul.mubr.f32.gmra.mrb[0].mxu0 %v1507
        %v3871 = vpop.f32.mrb[0].mxu0
        %v3872 = vadd.f32 0.0, %v3871
        %v3873 = vpop.f32.mrb[0].mxu0
        %3874 = vmatprep.mubr.f32.mxu0 0.0
        %3875 = vmatmul.mubr.f32.gmra.mrb[0].mxu0 %v1509
        %v3876 = vpop.f32.mrb[0].mxu0
        %v3877 = vadd.f32 0.0, %v3876
        %v3878 = vpop.f32.mrb[0].mxu0
        %3879 = vmatprep.mubr.f32.mxu0 0.0
        %3880 = vmatmul.mubr.f32.gmra.mrb[0].mxu0 %v1511
        %v3881 = vpop.f32.mrb[0].mxu0
        %v3882 = vadd.f32 0.0, %v3881
        %v3883 = vpop.f32.mrb[0].mxu0
        %3884 = vmatprep.mubr.f32.mxu0 0.0
        %3885 = vmatmul.mubr.f32.gmra.mrb[0].mxu0 %v2591
        %v3886 = vpop.f32.mrb[0].mxu0
        %v3887 = vadd.f32 0.0, %v3886
        %v3888 = vpop.f32.mrb[0].mxu0
        %3889 = vmatprep.mubr.f32.mxu0 0.0
        %3890 = vmatmul.mubr.f32.gmra.mrb[0].mxu0 %v2593
        %v3891 = vpop.f32.mrb[0].mxu0
        %v3892 = vadd.f32 0.0, %v3891
        %v3893 = vpop.f32.mrb[0].mxu0
        %3894 = vmatprep.mubr.f32.mxu0 0.0
        %3895 = vmatmul.mubr.f32.gmra.mrb[0].mxu0 %v3673
        %v3896 = vpop.f32.mrb[0].mxu0
        %v3897 = vadd.f32 0.0, %v3896
        %v3898 = vpop.f32.mrb[0].mxu0
        %3899 = vmatprep.mubr.f32.mxu0 0.0
        %3900 = vmatmul.mubr.f32.gmra.mrb[0].mxu0 %v3675
        %v3901 = vpop.f32.mrb[0].mxu0
        %v3902 = vadd.f32 0.0, %v3901
        %v3903 = vpop.f32.mrb[0].mxu0
        %3904 = vdwg.mxu0
        %v3905 = vadd.f32 %v3634, %v3747
        %v3906 = vadd.f32 %v3635, %v3752
        %v3907 = vadd.f32 %v3636, %v3757
        %v3908 = vadd.f32 %v3637, %v3762
        %v3909 = vadd.f32 %v3638, %v3767
        %v3910 = vadd.f32 %v3639, %v3772
        %v3911 = vadd.f32 %v3640, %v3777
        %v3912 = vadd.f32 %v3641, %v3782
        %v3913 = vadd.f32 %v3642, %v3787
        %v3914 = vadd.f32 %v3643, %v3792
        %v3915 = vadd.f32 %v3644, %v3797
        %v3916 = vadd.f32 %v3645, %v3802
        %v3917 = vadd.f32 %v3646, %v3807
        %v3918 = vadd.f32 %v3647, %v3812
        %v3919 = vadd.f32 %v3648, %v3817
        %v3920 = vadd.f32 %v3649, %v3822
        %v3921 = vadd.f32 %v3650, %v3827
        %v3922 = vadd.f32 %v3651, %v3832
        %v3923 = vadd.f32 %v3652, %v3837
        %v3924 = vadd.f32 %v3653, %v3842
        %v3925 = vadd.f32 %v3654, %v3847
        %v3926 = vadd.f32 %v3655, %v3852
        %v3927 = vadd.f32 %v3656, %v3857
        %v3928 = vadd.f32 %v3657, %v3862
        %v3929 = vadd.f32 %v3658, %v3867
        %v3930 = vadd.f32 %v3659, %v3872
        %v3931 = vadd.f32 %v3660, %v3877
        %v3932 = vadd.f32 %v3661, %v3882
        %v3933 = vadd.f32 %v3662, %v3887
        %v3934 = vadd.f32 %v3663, %v3892
        %v3935 = vadd.f32 %v3664, %v3897
        %v3936 = vadd.f32 %v3665, %v3902
        %s3937 = scalar_lea.vmem %s1, 48
        %v3938 = vld [vmem:[%s3937] sm:$0xf]
        %v3940 = vsel %vm373, %v238, 0
        %v3943 = vsel %vm373, %v239, 0
        %v3946 = vsel %vm438, %v3938, 0
        %3948 = vmatprep.subr.mxu0 0.0
        %3949 = vmatpush1.msra.mxu0 %v3946
        %3950 = vmatprep.subr.mxu0 0.0
        %3951 = vmatpush1.msra.mxu0 0.0
        %3952 = vmatprep.subr.mxu0 0.0
        %3953 = vmatpush1.msra.mxu0 0.0
        %3954 = vmatprep.subr.mxu0 0.0
        %3955 = vmatpush1.msra.mxu0 0.0
        %3956 = vmatprep.subr.mxu0 0.0
        %3957 = vmatpush1.msra.mxu0 0.0
        %3958 = vmatprep.subr.mxu0 0.0
        %3959 = vmatpush1.msra.mxu0 0.0
        %3960 = vmatprep.subr.mxu0 0.0
        %3961 = vmatpush1.msra.mxu0 0.0
        %3962 = vmatprep.subr.mxu0 0.0
        %3963 = vmatpush1.msra.mxu0 0.0
        %3964 = vmatprep.subr.mxu0 0.0
        %3965 = vmatpush1.msra.mxu0 0.0
        %3966 = vmatprep.subr.mxu0 0.0
        %3967 = vmatpush1.msra.mxu0 0.0
        %3968 = vmatprep.subr.mxu0 0.0
        %3969 = vmatpush1.msra.mxu0 0.0
        %3970 = vmatprep.subr.mxu0 0.0
        %3971 = vmatpush1.msra.mxu0 0.0
        %3972 = vmatprep.subr.mxu0 0.0
        %3973 = vmatpush1.msra.mxu0 0.0
        %3974 = vmatprep.subr.mxu0 0.0
        %3975 = vmatpush1.msra.mxu0 0.0
        %3976 = vmatprep.subr.mxu0 0.0
        %3977 = vmatpush1.msra.mxu0 0.0
        %3978 = vmatprep.subr.mxu0 0.0
        %3979 = vmatpush1.msra.mxu0 0.0
        %3980 = vmatprep.subr.mxu0 0.0
        %3981 = vmatpush1.msra.mxu0 0.0
        %3982 = vmatprep.subr.mxu0 0.0
        %3983 = vmatpush1.msra.mxu0 0.0
        %3984 = vmatprep.subr.mxu0 0.0
        %3985 = vmatpush1.msra.mxu0 0.0
        %3986 = vmatprep.subr.mxu0 0.0
        %3987 = vmatpush1.msra.mxu0 0.0
        %3988 = vmatprep.subr.mxu0 0.0
        %3989 = vmatpush1.msra.mxu0 0.0
        %3990 = vmatprep.subr.mxu0 0.0
        %3991 = vmatpush1.msra.mxu0 0.0
        %3992 = vmatprep.subr.mxu0 0.0
        %3993 = vmatpush1.msra.mxu0 0.0
        %3994 = vmatprep.subr.mxu0 0.0
        %3995 = vmatpush1.msra.mxu0 0.0
        %3996 = vmatprep.subr.mxu0 0.0
        %3997 = vmatpush1.msra.mxu0 0.0
        %3998 = vmatprep.subr.mxu0 0.0
        %3999 = vmatpush1.msra.mxu0 0.0
        %4000 = vmatprep.subr.mxu0 0.0
        %4001 = vmatpush1.msra.mxu0 0.0
        %4002 = vmatprep.subr.mxu0 0.0
        %4003 = vmatpush1.msra.mxu0 0.0
        %4004 = vmatprep.subr.mxu0 0.0
        %4005 = vmatpush1.msra.mxu0 0.0
        %4006 = vmatprep.subr.mxu0 0.0
        %4007 = vmatpush1.msra.mxu0 0.0
        %4008 = vmatprep.subr.mxu0 0.0
        %4009 = vmatpush1.msra.mxu0 0.0
        %4010 = vmatprep.subr.mxu0 0.0
        %4011 = vmatpush1.msra.mxu0 0.0
        %4012 = vmatprep.mubr.f32.mxu0 0.0
        %4013 = vmatmul.mubr.f32.gmra.mrb[0].mxu0 %v679
        %v4014 = vpop.f32.mrb[0].mxu0
        %v4015 = vadd.f32 0.0, %v4014
        %v4016 = vpop.f32.mrb[0].mxu0
        %4017 = vmatprep.mubr.f32.mxu0 0.0
        %4018 = vmatmul.mubr.f32.gmra.mrb[0].mxu0 %v681
        %v4019 = vpop.f32.mrb[0].mxu0
        %v4020 = vadd.f32 0.0, %v4019
        %v4021 = vpop.f32.mrb[0].mxu0
        %4022 = vmatprep.mubr.f32.mxu0 0.0
        %4023 = vmatmul.mubr.f32.gmra.mrb[0].mxu0 %v683
        %v4024 = vpop.f32.mrb[0].mxu0
        %v4025 = vadd.f32 0.0, %v4024
        %v4026 = vpop.f32.mrb[0].mxu0
        %4027 = vmatprep.mubr.f32.mxu0 0.0
        %4028 = vmatmul.mubr.f32.gmra.mrb[0].mxu0 %v685
        %v4029 = vpop.f32.mrb[0].mxu0
        %v4030 = vadd.f32 0.0, %v4029
        %v4031 = vpop.f32.mrb[0].mxu0
        %4032 = vmatprep.mubr.f32.mxu0 0.0
        %4033 = vmatmul.mubr.f32.gmra.mrb[0].mxu0 %v687
        %v4034 = vpop.f32.mrb[0].mxu0
        %v4035 = vadd.f32 0.0, %v4034
        %v4036 = vpop.f32.mrb[0].mxu0
        %4037 = vmatprep.mubr.f32.mxu0 0.0
        %4038 = vmatmul.mubr.f32.gmra.mrb[0].mxu0 %v689
        %v4039 = vpop.f32.mrb[0].mxu0
        %v4040 = vadd.f32 0.0, %v4039
        %v4041 = vpop.f32.mrb[0].mxu0
        %4042 = vmatprep.mubr.f32.mxu0 0.0
        %4043 = vmatmul.mubr.f32.gmra.mrb[0].mxu0 %v691
        %v4044 = vpop.f32.mrb[0].mxu0
        %v4045 = vadd.f32 0.0, %v4044
        %v4046 = vpop.f32.mrb[0].mxu0
        %4047 = vmatprep.mubr.f32.mxu0 0.0
        %4048 = vmatmul.mubr.f32.gmra.mrb[0].mxu0 %v693
        %v4049 = vpop.f32.mrb[0].mxu0
        %v4050 = vadd.f32 0.0, %v4049
        %v4051 = vpop.f32.mrb[0].mxu0
        %4052 = vmatprep.mubr.f32.mxu0 0.0
        %4053 = vmatmul.mubr.f32.gmra.mrb[0].mxu0 %v695
        %v4054 = vpop.f32.mrb[0].mxu0
        %v4055 = vadd.f32 0.0, %v4054
        %v4056 = vpop.f32.mrb[0].mxu0
        %4057 = vmatprep.mubr.f32.mxu0 0.0
        %4058 = vmatmul.mubr.f32.gmra.mrb[0].mxu0 %v697
        %v4059 = vpop.f32.mrb[0].mxu0
        %v4060 = vadd.f32 0.0, %v4059
        %v4061 = vpop.f32.mrb[0].mxu0
        %4062 = vmatprep.mubr.f32.mxu0 0.0
        %4063 = vmatmul.mubr.f32.gmra.mrb[0].mxu0 %v699
        %v4064 = vpop.f32.mrb[0].mxu0
        %v4065 = vadd.f32 0.0, %v4064
        %v4066 = vpop.f32.mrb[0].mxu0
        %4067 = vmatprep.mubr.f32.mxu0 0.0
        %4068 = vmatmul.mubr.f32.gmra.mrb[0].mxu0 %v701
        %v4069 = vpop.f32.mrb[0].mxu0
        %v4070 = vadd.f32 0.0, %v4069
        %v4071 = vpop.f32.mrb[0].mxu0
        %4072 = vmatprep.mubr.f32.mxu0 0.0
        %4073 = vmatmul.mubr.f32.gmra.mrb[0].mxu0 %v703
        %v4074 = vpop.f32.mrb[0].mxu0
        %v4075 = vadd.f32 0.0, %v4074
        %v4076 = vpop.f32.mrb[0].mxu0
        %4077 = vmatprep.mubr.f32.mxu0 0.0
        %4078 = vmatmul.mubr.f32.gmra.mrb[0].mxu0 %v705
        %v4079 = vpop.f32.mrb[0].mxu0
        %v4080 = vadd.f32 0.0, %v4079
        %v4081 = vpop.f32.mrb[0].mxu0
        %4082 = vmatprep.mubr.f32.mxu0 0.0
        %4083 = vmatmul.mubr.f32.gmra.mrb[0].mxu0 %v707
        %v4084 = vpop.f32.mrb[0].mxu0
        %v4085 = vadd.f32 0.0, %v4084
        %v4086 = vpop.f32.mrb[0].mxu0
        %4087 = vmatprep.mubr.f32.mxu0 0.0
        %4088 = vmatmul.mubr.f32.gmra.mrb[0].mxu0 %v709
        %v4089 = vpop.f32.mrb[0].mxu0
        %v4090 = vadd.f32 0.0, %v4089
        %v4091 = vpop.f32.mrb[0].mxu0
        %4092 = vmatprep.mubr.f32.mxu0 0.0
        %4093 = vmatmul.mubr.f32.gmra.mrb[0].mxu0 %v711
        %v4094 = vpop.f32.mrb[0].mxu0
        %v4095 = vadd.f32 0.0, %v4094
        %v4096 = vpop.f32.mrb[0].mxu0
        %4097 = vmatprep.mubr.f32.mxu0 0.0
        %4098 = vmatmul.mubr.f32.gmra.mrb[0].mxu0 %v713
        %v4099 = vpop.f32.mrb[0].mxu0
        %v4100 = vadd.f32 0.0, %v4099
        %v4101 = vpop.f32.mrb[0].mxu0
        %4102 = vmatprep.mubr.f32.mxu0 0.0
        %4103 = vmatmul.mubr.f32.gmra.mrb[0].mxu0 %v715
        %v4104 = vpop.f32.mrb[0].mxu0
        %v4105 = vadd.f32 0.0, %v4104
        %v4106 = vpop.f32.mrb[0].mxu0
        %4107 = vmatprep.mubr.f32.mxu0 0.0
        %4108 = vmatmul.mubr.f32.gmra.mrb[0].mxu0 %v717
        %v4109 = vpop.f32.mrb[0].mxu0
        %v4110 = vadd.f32 0.0, %v4109
        %v4111 = vpop.f32.mrb[0].mxu0
        %4112 = vmatprep.mubr.f32.mxu0 0.0
        %4113 = vmatmul.mubr.f32.gmra.mrb[0].mxu0 %v719
        %v4114 = vpop.f32.mrb[0].mxu0
        %v4115 = vadd.f32 0.0, %v4114
        %v4116 = vpop.f32.mrb[0].mxu0
        %4117 = vmatprep.mubr.f32.mxu0 0.0
        %4118 = vmatmul.mubr.f32.gmra.mrb[0].mxu0 %v721
        %v4119 = vpop.f32.mrb[0].mxu0
        %v4120 = vadd.f32 0.0, %v4119
        %v4121 = vpop.f32.mrb[0].mxu0
        %4122 = vmatprep.mubr.f32.mxu0 0.0
        %4123 = vmatmul.mubr.f32.gmra.mrb[0].mxu0 %v723
        %v4124 = vpop.f32.mrb[0].mxu0
        %v4125 = vadd.f32 0.0, %v4124
        %v4126 = vpop.f32.mrb[0].mxu0
        %4127 = vmatprep.mubr.f32.mxu0 0.0
        %4128 = vmatmul.mubr.f32.gmra.mrb[0].mxu0 %v725
        %v4129 = vpop.f32.mrb[0].mxu0
        %v4130 = vadd.f32 0.0, %v4129
        %v4131 = vpop.f32.mrb[0].mxu0
        %4132 = vmatprep.mubr.f32.mxu0 0.0
        %4133 = vmatmul.mubr.f32.gmra.mrb[0].mxu0 %v727
        %v4134 = vpop.f32.mrb[0].mxu0
        %v4135 = vadd.f32 0.0, %v4134
        %v4136 = vpop.f32.mrb[0].mxu0
        %4137 = vmatprep.mubr.f32.mxu0 0.0
        %4138 = vmatmul.mubr.f32.gmra.mrb[0].mxu0 %v729
        %v4139 = vpop.f32.mrb[0].mxu0
        %v4140 = vadd.f32 0.0, %v4139
        %v4141 = vpop.f32.mrb[0].mxu0
        %4142 = vmatprep.mubr.f32.mxu0 0.0
        %4143 = vmatmul.mubr.f32.gmra.mrb[0].mxu0 %v1776
        %v4144 = vpop.f32.mrb[0].mxu0
        %v4145 = vadd.f32 0.0, %v4144
        %v4146 = vpop.f32.mrb[0].mxu0
        %4147 = vmatprep.mubr.f32.mxu0 0.0
        %4148 = vmatmul.mubr.f32.gmra.mrb[0].mxu0 %v1779
        %v4149 = vpop.f32.mrb[0].mxu0
        %v4150 = vadd.f32 0.0, %v4149
        %v4151 = vpop.f32.mrb[0].mxu0
        %4152 = vmatprep.mubr.f32.mxu0 0.0
        %4153 = vmatmul.mubr.f32.gmra.mrb[0].mxu0 %v2858
        %v4154 = vpop.f32.mrb[0].mxu0
        %v4155 = vadd.f32 0.0, %v4154
        %v4156 = vpop.f32.mrb[0].mxu0
        %4157 = vmatprep.mubr.f32.mxu0 0.0
        %4158 = vmatmul.mubr.f32.gmra.mrb[0].mxu0 %v2861
        %v4159 = vpop.f32.mrb[0].mxu0
        %v4160 = vadd.f32 0.0, %v4159
        %v4161 = vpop.f32.mrb[0].mxu0
        %4162 = vmatprep.mubr.f32.mxu0 0.0
        %4163 = vmatmul.mubr.f32.gmra.mrb[0].mxu0 %v3940
        %v4164 = vpop.f32.mrb[0].mxu0
        %v4165 = vadd.f32 0.0, %v4164
        %v4166 = vpop.f32.mrb[0].mxu0
        %4167 = vmatprep.mubr.f32.mxu0 0.0
        %4168 = vmatmul.mubr.f32.gmra.mrb[0].mxu0 %v3943
        %v4169 = vpop.f32.mrb[0].mxu0
        %v4170 = vadd.f32 0.0, %v4169
        %v4171 = vpop.f32.mrb[0].mxu0
        %4172 = vdwg.mxu0
        %v4173 = vadd.f32 %v3905, %v4015
        %v4174 = vadd.f32 %v3906, %v4020
        %v4175 = vadd.f32 %v3907, %v4025
        %v4176 = vadd.f32 %v3908, %v4030
        %v4177 = vadd.f32 %v3909, %v4035
        %v4178 = vadd.f32 %v3910, %v4040
        %v4179 = vadd.f32 %v3911, %v4045
        %v4180 = vadd.f32 %v3912, %v4050
        %v4181 = vadd.f32 %v3913, %v4055
        %v4182 = vadd.f32 %v3914, %v4060
        %v4183 = vadd.f32 %v3915, %v4065
        %v4184 = vadd.f32 %v3916, %v4070
        %v4185 = vadd.f32 %v3917, %v4075
        %v4186 = vadd.f32 %v3918, %v4080
        %v4187 = vadd.f32 %v3919, %v4085
        %v4188 = vadd.f32 %v3920, %v4090
        %v4189 = vadd.f32 %v3921, %v4095
        %v4190 = vadd.f32 %v3922, %v4100
        %v4191 = vadd.f32 %v3923, %v4105
        %v4192 = vadd.f32 %v3924, %v4110
        %v4193 = vadd.f32 %v3925, %v4115
        %v4194 = vadd.f32 %v3926, %v4120
        %v4195 = vadd.f32 %v3927, %v4125
        %v4196 = vadd.f32 %v3928, %v4130
        %v4197 = vadd.f32 %v3929, %v4135
        %v4198 = vadd.f32 %v3930, %v4140
        %v4199 = vadd.f32 %v3931, %v4145
        %v4200 = vadd.f32 %v3932, %v4150
        %v4201 = vadd.f32 %v3933, %v4155
        %v4202 = vadd.f32 %v3934, %v4160
        %v4203 = vadd.f32 %v3935, %v4165
        %v4204 = vadd.f32 %v3936, %v4170
        %v4206 = vrot.slane %v238, 1
        %v4207 = vrot.slane %v239, 1
        %v4208 = vsel %vm290, %v4206, %v4207
        %v4209 = vrot.slane %v240, 1
        %v4210 = vsel %vm290, %v4207, %v4209
        %s4211 = scalar_lea.vmem %s1, 52
        %v4212 = vld [vmem:[%s4211] sm:$0xf]
        %v4213 = vsel %vm373, %v4208, 0
        %v4215 = vsel %vm373, %v4210, 0
        %v4218 = vsel %vm438, %v4212, 0
        %4220 = vmatprep.subr.mxu0 0.0
        %4221 = vmatpush1.msra.mxu0 %v4218
        %4222 = vmatprep.subr.mxu0 0.0
        %4223 = vmatpush1.msra.mxu0 0.0
        %4224 = vmatprep.subr.mxu0 0.0
        %4225 = vmatpush1.msra.mxu0 0.0
        %4226 = vmatprep.subr.mxu0 0.0
        %4227 = vmatpush1.msra.mxu0 0.0
        %4228 = vmatprep.subr.mxu0 0.0
        %4229 = vmatpush1.msra.mxu0 0.0
        %4230 = vmatprep.subr.mxu0 0.0
        %4231 = vmatpush1.msra.mxu0 0.0
        %4232 = vmatprep.subr.mxu0 0.0
        %4233 = vmatpush1.msra.mxu0 0.0
        %4234 = vmatprep.subr.mxu0 0.0
        %4235 = vmatpush1.msra.mxu0 0.0
        %4236 = vmatprep.subr.mxu0 0.0
        %4237 = vmatpush1.msra.mxu0 0.0
        %4238 = vmatprep.subr.mxu0 0.0
        %4239 = vmatpush1.msra.mxu0 0.0
        %4240 = vmatprep.subr.mxu0 0.0
        %4241 = vmatpush1.msra.mxu0 0.0
        %4242 = vmatprep.subr.mxu0 0.0
        %4243 = vmatpush1.msra.mxu0 0.0
        %4244 = vmatprep.subr.mxu0 0.0
        %4245 = vmatpush1.msra.mxu0 0.0
        %4246 = vmatprep.subr.mxu0 0.0
        %4247 = vmatpush1.msra.mxu0 0.0
        %4248 = vmatprep.subr.mxu0 0.0
        %4249 = vmatpush1.msra.mxu0 0.0
        %4250 = vmatprep.subr.mxu0 0.0
        %4251 = vmatpush1.msra.mxu0 0.0
        %4252 = vmatprep.subr.mxu0 0.0
        %4253 = vmatpush1.msra.mxu0 0.0
        %4254 = vmatprep.subr.mxu0 0.0
        %4255 = vmatpush1.msra.mxu0 0.0
        %4256 = vmatprep.subr.mxu0 0.0
        %4257 = vmatpush1.msra.mxu0 0.0
        %4258 = vmatprep.subr.mxu0 0.0
        %4259 = vmatpush1.msra.mxu0 0.0
        %4260 = vmatprep.subr.mxu0 0.0
        %4261 = vmatpush1.msra.mxu0 0.0
        %4262 = vmatprep.subr.mxu0 0.0
        %4263 = vmatpush1.msra.mxu0 0.0
        %4264 = vmatprep.subr.mxu0 0.0
        %4265 = vmatpush1.msra.mxu0 0.0
        %4266 = vmatprep.subr.mxu0 0.0
        %4267 = vmatpush1.msra.mxu0 0.0
        %4268 = vmatprep.subr.mxu0 0.0
        %4269 = vmatpush1.msra.mxu0 0.0
        %4270 = vmatprep.subr.mxu0 0.0
        %4271 = vmatpush1.msra.mxu0 0.0
        %4272 = vmatprep.subr.mxu0 0.0
        %4273 = vmatpush1.msra.mxu0 0.0
        %4274 = vmatprep.subr.mxu0 0.0
        %4275 = vmatpush1.msra.mxu0 0.0
        %4276 = vmatprep.subr.mxu0 0.0
        %4277 = vmatpush1.msra.mxu0 0.0
        %4278 = vmatprep.subr.mxu0 0.0
        %4279 = vmatpush1.msra.mxu0 0.0
        %4280 = vmatprep.subr.mxu0 0.0
        %4281 = vmatpush1.msra.mxu0 0.0
        %4282 = vmatprep.subr.mxu0 0.0
        %4283 = vmatpush1.msra.mxu0 0.0
        %4284 = vmatprep.mubr.f32.mxu0 0.0
        %4285 = vmatmul.mubr.f32.gmra.mrb[0].mxu0 %v386
        %v4286 = vpop.f32.mrb[0].mxu0
        %v4287 = vadd.f32 0.0, %v4286
        %v4288 = vpop.f32.mrb[0].mxu0
        %4289 = vmatprep.mubr.f32.mxu0 0.0
        %4290 = vmatmul.mubr.f32.gmra.mrb[0].mxu0 %v388
        %v4291 = vpop.f32.mrb[0].mxu0
        %v4292 = vadd.f32 0.0, %v4291
        %v4293 = vpop.f32.mrb[0].mxu0
        %4294 = vmatprep.mubr.f32.mxu0 0.0
        %4295 = vmatmul.mubr.f32.gmra.mrb[0].mxu0 %v390
        %v4296 = vpop.f32.mrb[0].mxu0
        %v4297 = vadd.f32 0.0, %v4296
        %v4298 = vpop.f32.mrb[0].mxu0
        %4299 = vmatprep.mubr.f32.mxu0 0.0
        %4300 = vmatmul.mubr.f32.gmra.mrb[0].mxu0 %v392
        %v4301 = vpop.f32.mrb[0].mxu0
        %v4302 = vadd.f32 0.0, %v4301
        %v4303 = vpop.f32.mrb[0].mxu0
        %4304 = vmatprep.mubr.f32.mxu0 0.0
        %4305 = vmatmul.mubr.f32.gmra.mrb[0].mxu0 %v394
        %v4306 = vpop.f32.mrb[0].mxu0
        %v4307 = vadd.f32 0.0, %v4306
        %v4308 = vpop.f32.mrb[0].mxu0
        %4309 = vmatprep.mubr.f32.mxu0 0.0
        %4310 = vmatmul.mubr.f32.gmra.mrb[0].mxu0 %v396
        %v4311 = vpop.f32.mrb[0].mxu0
        %v4312 = vadd.f32 0.0, %v4311
        %v4313 = vpop.f32.mrb[0].mxu0
        %4314 = vmatprep.mubr.f32.mxu0 0.0
        %4315 = vmatmul.mubr.f32.gmra.mrb[0].mxu0 %v398
        %v4316 = vpop.f32.mrb[0].mxu0
        %v4317 = vadd.f32 0.0, %v4316
        %v4318 = vpop.f32.mrb[0].mxu0
        %4319 = vmatprep.mubr.f32.mxu0 0.0
        %4320 = vmatmul.mubr.f32.gmra.mrb[0].mxu0 %v400
        %v4321 = vpop.f32.mrb[0].mxu0
        %v4322 = vadd.f32 0.0, %v4321
        %v4323 = vpop.f32.mrb[0].mxu0
        %4324 = vmatprep.mubr.f32.mxu0 0.0
        %4325 = vmatmul.mubr.f32.gmra.mrb[0].mxu0 %v402
        %v4326 = vpop.f32.mrb[0].mxu0
        %v4327 = vadd.f32 0.0, %v4326
        %v4328 = vpop.f32.mrb[0].mxu0
        %4329 = vmatprep.mubr.f32.mxu0 0.0
        %4330 = vmatmul.mubr.f32.gmra.mrb[0].mxu0 %v404
        %v4331 = vpop.f32.mrb[0].mxu0
        %v4332 = vadd.f32 0.0, %v4331
        %v4333 = vpop.f32.mrb[0].mxu0
        %4334 = vmatprep.mubr.f32.mxu0 0.0
        %4335 = vmatmul.mubr.f32.gmra.mrb[0].mxu0 %v406
        %v4336 = vpop.f32.mrb[0].mxu0
        %v4337 = vadd.f32 0.0, %v4336
        %v4338 = vpop.f32.mrb[0].mxu0
        %4339 = vmatprep.mubr.f32.mxu0 0.0
        %4340 = vmatmul.mubr.f32.gmra.mrb[0].mxu0 %v408
        %v4341 = vpop.f32.mrb[0].mxu0
        %v4342 = vadd.f32 0.0, %v4341
        %v4343 = vpop.f32.mrb[0].mxu0
        %4344 = vmatprep.mubr.f32.mxu0 0.0
        %4345 = vmatmul.mubr.f32.gmra.mrb[0].mxu0 %v410
        %v4346 = vpop.f32.mrb[0].mxu0
        %v4347 = vadd.f32 0.0, %v4346
        %v4348 = vpop.f32.mrb[0].mxu0
        %4349 = vmatprep.mubr.f32.mxu0 0.0
        %4350 = vmatmul.mubr.f32.gmra.mrb[0].mxu0 %v412
        %v4351 = vpop.f32.mrb[0].mxu0
        %v4352 = vadd.f32 0.0, %v4351
        %v4353 = vpop.f32.mrb[0].mxu0
        %4354 = vmatprep.mubr.f32.mxu0 0.0
        %4355 = vmatmul.mubr.f32.gmra.mrb[0].mxu0 %v414
        %v4356 = vpop.f32.mrb[0].mxu0
        %v4357 = vadd.f32 0.0, %v4356
        %v4358 = vpop.f32.mrb[0].mxu0
        %4359 = vmatprep.mubr.f32.mxu0 0.0
        %4360 = vmatmul.mubr.f32.gmra.mrb[0].mxu0 %v416
        %v4361 = vpop.f32.mrb[0].mxu0
        %v4362 = vadd.f32 0.0, %v4361
        %v4363 = vpop.f32.mrb[0].mxu0
        %4364 = vmatprep.mubr.f32.mxu0 0.0
        %4365 = vmatmul.mubr.f32.gmra.mrb[0].mxu0 %v418
        %v4366 = vpop.f32.mrb[0].mxu0
        %v4367 = vadd.f32 0.0, %v4366
        %v4368 = vpop.f32.mrb[0].mxu0
        %4369 = vmatprep.mubr.f32.mxu0 0.0
        %4370 = vmatmul.mubr.f32.gmra.mrb[0].mxu0 %v420
        %v4371 = vpop.f32.mrb[0].mxu0
        %v4372 = vadd.f32 0.0, %v4371
        %v4373 = vpop.f32.mrb[0].mxu0
        %4374 = vmatprep.mubr.f32.mxu0 0.0
        %4375 = vmatmul.mubr.f32.gmra.mrb[0].mxu0 %v422
        %v4376 = vpop.f32.mrb[0].mxu0
        %v4377 = vadd.f32 0.0, %v4376
        %v4378 = vpop.f32.mrb[0].mxu0
        %4379 = vmatprep.mubr.f32.mxu0 0.0
        %4380 = vmatmul.mubr.f32.gmra.mrb[0].mxu0 %v424
        %v4381 = vpop.f32.mrb[0].mxu0
        %v4382 = vadd.f32 0.0, %v4381
        %v4383 = vpop.f32.mrb[0].mxu0
        %4384 = vmatprep.mubr.f32.mxu0 0.0
        %4385 = vmatmul.mubr.f32.gmra.mrb[0].mxu0 %v426
        %v4386 = vpop.f32.mrb[0].mxu0
        %v4387 = vadd.f32 0.0, %v4386
        %v4388 = vpop.f32.mrb[0].mxu0
        %4389 = vmatprep.mubr.f32.mxu0 0.0
        %4390 = vmatmul.mubr.f32.gmra.mrb[0].mxu0 %v428
        %v4391 = vpop.f32.mrb[0].mxu0
        %v4392 = vadd.f32 0.0, %v4391
        %v4393 = vpop.f32.mrb[0].mxu0
        %4394 = vmatprep.mubr.f32.mxu0 0.0
        %4395 = vmatmul.mubr.f32.gmra.mrb[0].mxu0 %v430
        %v4396 = vpop.f32.mrb[0].mxu0
        %v4397 = vadd.f32 0.0, %v4396
        %v4398 = vpop.f32.mrb[0].mxu0
        %4399 = vmatprep.mubr.f32.mxu0 0.0
        %4400 = vmatmul.mubr.f32.gmra.mrb[0].mxu0 %v432
        %v4401 = vpop.f32.mrb[0].mxu0
        %v4402 = vadd.f32 0.0, %v4401
        %v4403 = vpop.f32.mrb[0].mxu0
        %4404 = vmatprep.mubr.f32.mxu0 0.0
        %4405 = vmatmul.mubr.f32.gmra.mrb[0].mxu0 %v434
        %v4406 = vpop.f32.mrb[0].mxu0
        %v4407 = vadd.f32 0.0, %v4406
        %v4408 = vpop.f32.mrb[0].mxu0
        %4409 = vmatprep.mubr.f32.mxu0 0.0
        %4410 = vmatmul.mubr.f32.gmra.mrb[0].mxu0 %v436
        %v4411 = vpop.f32.mrb[0].mxu0
        %v4412 = vadd.f32 0.0, %v4411
        %v4413 = vpop.f32.mrb[0].mxu0
        %4414 = vmatprep.mubr.f32.mxu0 0.0
        %4415 = vmatmul.mubr.f32.gmra.mrb[0].mxu0 %v2049
        %v4416 = vpop.f32.mrb[0].mxu0
        %v4417 = vadd.f32 0.0, %v4416
        %v4418 = vpop.f32.mrb[0].mxu0
        %4419 = vmatprep.mubr.f32.mxu0 0.0
        %4420 = vmatmul.mubr.f32.gmra.mrb[0].mxu0 %v2051
        %v4421 = vpop.f32.mrb[0].mxu0
        %v4422 = vadd.f32 0.0, %v4421
        %v4423 = vpop.f32.mrb[0].mxu0
        %4424 = vmatprep.mubr.f32.mxu0 0.0
        %4425 = vmatmul.mubr.f32.gmra.mrb[0].mxu0 %v3131
        %v4426 = vpop.f32.mrb[0].mxu0
        %v4427 = vadd.f32 0.0, %v4426
        %v4428 = vpop.f32.mrb[0].mxu0
        %4429 = vmatprep.mubr.f32.mxu0 0.0
        %4430 = vmatmul.mubr.f32.gmra.mrb[0].mxu0 %v3133
        %v4431 = vpop.f32.mrb[0].mxu0
        %v4432 = vadd.f32 0.0, %v4431
        %v4433 = vpop.f32.mrb[0].mxu0
        %4434 = vmatprep.mubr.f32.mxu0 0.0
        %4435 = vmatmul.mubr.f32.gmra.mrb[0].mxu0 %v4213
        %v4436 = vpop.f32.mrb[0].mxu0
        %v4437 = vadd.f32 0.0, %v4436
        %v4438 = vpop.f32.mrb[0].mxu0
        %4439 = vmatprep.mubr.f32.mxu0 0.0
        %4440 = vmatmul.mubr.f32.gmra.mrb[0].mxu0 %v4215
        %v4441 = vpop.f32.mrb[0].mxu0
        %v4442 = vadd.f32 0.0, %v4441
        %v4443 = vpop.f32.mrb[0].mxu0
        %4444 = vdwg.mxu0
        %v4445 = vadd.f32 %v4173, %v4287
        %v4446 = vadd.f32 %v4174, %v4292
        %v4447 = vadd.f32 %v4175, %v4297
        %v4448 = vadd.f32 %v4176, %v4302
        %v4449 = vadd.f32 %v4177, %v4307
        %v4450 = vadd.f32 %v4178, %v4312
        %v4451 = vadd.f32 %v4179, %v4317
        %v4452 = vadd.f32 %v4180, %v4322
        %v4453 = vadd.f32 %v4181, %v4327
        %v4454 = vadd.f32 %v4182, %v4332
        %v4455 = vadd.f32 %v4183, %v4337
        %v4456 = vadd.f32 %v4184, %v4342
        %v4457 = vadd.f32 %v4185, %v4347
        %v4458 = vadd.f32 %v4186, %v4352
        %v4459 = vadd.f32 %v4187, %v4357
        %v4460 = vadd.f32 %v4188, %v4362
        %v4461 = vadd.f32 %v4189, %v4367
        %v4462 = vadd.f32 %v4190, %v4372
        %v4463 = vadd.f32 %v4191, %v4377
        %v4464 = vadd.f32 %v4192, %v4382
        %v4465 = vadd.f32 %v4193, %v4387
        %v4466 = vadd.f32 %v4194, %v4392
        %v4467 = vadd.f32 %v4195, %v4397
        %v4468 = vadd.f32 %v4196, %v4402
        %v4469 = vadd.f32 %v4197, %v4407
        %v4470 = vadd.f32 %v4198, %v4412
        %v4471 = vadd.f32 %v4199, %v4417
        %v4472 = vadd.f32 %v4200, %v4422
        %v4473 = vadd.f32 %v4201, %v4427
        %v4474 = vadd.f32 %v4202, %v4432
        %v4475 = vadd.f32 %v4203, %v4437
        %v4476 = vadd.f32 %v4204, %v4442
        %v4477 = vrot.slane %v238, 2
        %v4478 = vrot.slane %v239, 2
        %v4479 = vsel %vm959, %v4477, %v4478
        %v4480 = vrot.slane %v240, 2
        %v4481 = vsel %vm959, %v4478, %v4480
        %s4482 = scalar_lea.vmem %s1, 56
        %v4483 = vld [vmem:[%s4482] sm:$0xf]
        %v4484 = vsel %vm373, %v4479, 0
        %v4486 = vsel %vm373, %v4481, 0
        %v4489 = vsel %vm438, %v4483, 0
        %4491 = vmatprep.subr.mxu0 0.0
        %4492 = vmatpush1.msra.mxu0 %v4489
        %4493 = vmatprep.subr.mxu0 0.0
        %4494 = vmatpush1.msra.mxu0 0.0
        %4495 = vmatprep.subr.mxu0 0.0
        %4496 = vmatpush1.msra.mxu0 0.0
        %4497 = vmatprep.subr.mxu0 0.0
        %4498 = vmatpush1.msra.mxu0 0.0
        %4499 = vmatprep.subr.mxu0 0.0
        %4500 = vmatpush1.msra.mxu0 0.0
        %4501 = vmatprep.subr.mxu0 0.0
        %4502 = vmatpush1.msra.mxu0 0.0
        %4503 = vmatprep.subr.mxu0 0.0
        %4504 = vmatpush1.msra.mxu0 0.0
        %4505 = vmatprep.subr.mxu0 0.0
        %4506 = vmatpush1.msra.mxu0 0.0
        %4507 = vmatprep.subr.mxu0 0.0
        %4508 = vmatpush1.msra.mxu0 0.0
        %4509 = vmatprep.subr.mxu0 0.0
        %4510 = vmatpush1.msra.mxu0 0.0
        %4511 = vmatprep.subr.mxu0 0.0
        %4512 = vmatpush1.msra.mxu0 0.0
        %4513 = vmatprep.subr.mxu0 0.0
        %4514 = vmatpush1.msra.mxu0 0.0
        %4515 = vmatprep.subr.mxu0 0.0
        %4516 = vmatpush1.msra.mxu0 0.0
        %4517 = vmatprep.subr.mxu0 0.0
        %4518 = vmatpush1.msra.mxu0 0.0
        %4519 = vmatprep.subr.mxu0 0.0
        %4520 = vmatpush1.msra.mxu0 0.0
        %4521 = vmatprep.subr.mxu0 0.0
        %4522 = vmatpush1.msra.mxu0 0.0
        %4523 = vmatprep.subr.mxu0 0.0
        %4524 = vmatpush1.msra.mxu0 0.0
        %4525 = vmatprep.subr.mxu0 0.0
        %4526 = vmatpush1.msra.mxu0 0.0
        %4527 = vmatprep.subr.mxu0 0.0
        %4528 = vmatpush1.msra.mxu0 0.0
        %4529 = vmatprep.subr.mxu0 0.0
        %4530 = vmatpush1.msra.mxu0 0.0
        %4531 = vmatprep.subr.mxu0 0.0
        %4532 = vmatpush1.msra.mxu0 0.0
        %4533 = vmatprep.subr.mxu0 0.0
        %4534 = vmatpush1.msra.mxu0 0.0
        %4535 = vmatprep.subr.mxu0 0.0
        %4536 = vmatpush1.msra.mxu0 0.0
        %4537 = vmatprep.subr.mxu0 0.0
        %4538 = vmatpush1.msra.mxu0 0.0
        %4539 = vmatprep.subr.mxu0 0.0
        %4540 = vmatpush1.msra.mxu0 0.0
        %4541 = vmatprep.subr.mxu0 0.0
        %4542 = vmatpush1.msra.mxu0 0.0
        %4543 = vmatprep.subr.mxu0 0.0
        %4544 = vmatpush1.msra.mxu0 0.0
        %4545 = vmatprep.subr.mxu0 0.0
        %4546 = vmatpush1.msra.mxu0 0.0
        %4547 = vmatprep.subr.mxu0 0.0
        %4548 = vmatpush1.msra.mxu0 0.0
        %4549 = vmatprep.subr.mxu0 0.0
        %4550 = vmatpush1.msra.mxu0 0.0
        %4551 = vmatprep.subr.mxu0 0.0
        %4552 = vmatpush1.msra.mxu0 0.0
        %4553 = vmatprep.subr.mxu0 0.0
        %4554 = vmatpush1.msra.mxu0 0.0
        %4555 = vmatprep.mubr.f32.mxu0 0.0
        %4556 = vmatmul.mubr.f32.gmra.mrb[0].mxu0 %v1054
        %v4557 = vpop.f32.mrb[0].mxu0
        %v4558 = vadd.f32 0.0, %v4557
        %v4559 = vpop.f32.mrb[0].mxu0
        %4560 = vmatprep.mubr.f32.mxu0 0.0
        %4561 = vmatmul.mubr.f32.gmra.mrb[0].mxu0 %v1056
        %v4562 = vpop.f32.mrb[0].mxu0
        %v4563 = vadd.f32 0.0, %v4562
        %v4564 = vpop.f32.mrb[0].mxu0
        %4565 = vmatprep.mubr.f32.mxu0 0.0
        %4566 = vmatmul.mubr.f32.gmra.mrb[0].mxu0 %v1058
        %v4567 = vpop.f32.mrb[0].mxu0
        %v4568 = vadd.f32 0.0, %v4567
        %v4569 = vpop.f32.mrb[0].mxu0
        %4570 = vmatprep.mubr.f32.mxu0 0.0
        %4571 = vmatmul.mubr.f32.gmra.mrb[0].mxu0 %v1060
        %v4572 = vpop.f32.mrb[0].mxu0
        %v4573 = vadd.f32 0.0, %v4572
        %v4574 = vpop.f32.mrb[0].mxu0
        %4575 = vmatprep.mubr.f32.mxu0 0.0
        %4576 = vmatmul.mubr.f32.gmra.mrb[0].mxu0 %v1062
        %v4577 = vpop.f32.mrb[0].mxu0
        %v4578 = vadd.f32 0.0, %v4577
        %v4579 = vpop.f32.mrb[0].mxu0
        %4580 = vmatprep.mubr.f32.mxu0 0.0
        %4581 = vmatmul.mubr.f32.gmra.mrb[0].mxu0 %v1064
        %v4582 = vpop.f32.mrb[0].mxu0
        %v4583 = vadd.f32 0.0, %v4582
        %v4584 = vpop.f32.mrb[0].mxu0
        %4585 = vmatprep.mubr.f32.mxu0 0.0
        %4586 = vmatmul.mubr.f32.gmra.mrb[0].mxu0 %v1066
        %v4587 = vpop.f32.mrb[0].mxu0
        %v4588 = vadd.f32 0.0, %v4587
        %v4589 = vpop.f32.mrb[0].mxu0
        %4590 = vmatprep.mubr.f32.mxu0 0.0
        %4591 = vmatmul.mubr.f32.gmra.mrb[0].mxu0 %v1068
        %v4592 = vpop.f32.mrb[0].mxu0
        %v4593 = vadd.f32 0.0, %v4592
        %v4594 = vpop.f32.mrb[0].mxu0
        %4595 = vmatprep.mubr.f32.mxu0 0.0
        %4596 = vmatmul.mubr.f32.gmra.mrb[0].mxu0 %v1070
        %v4597 = vpop.f32.mrb[0].mxu0
        %v4598 = vadd.f32 0.0, %v4597
        %v4599 = vpop.f32.mrb[0].mxu0
        %4600 = vmatprep.mubr.f32.mxu0 0.0
        %4601 = vmatmul.mubr.f32.gmra.mrb[0].mxu0 %v1072
        %v4602 = vpop.f32.mrb[0].mxu0
        %v4603 = vadd.f32 0.0, %v4602
        %v4604 = vpop.f32.mrb[0].mxu0
        %4605 = vmatprep.mubr.f32.mxu0 0.0
        %4606 = vmatmul.mubr.f32.gmra.mrb[0].mxu0 %v1074
        %v4607 = vpop.f32.mrb[0].mxu0
        %v4608 = vadd.f32 0.0, %v4607
        %v4609 = vpop.f32.mrb[0].mxu0
        %4610 = vmatprep.mubr.f32.mxu0 0.0
        %4611 = vmatmul.mubr.f32.gmra.mrb[0].mxu0 %v1076
        %v4612 = vpop.f32.mrb[0].mxu0
        %v4613 = vadd.f32 0.0, %v4612
        %v4614 = vpop.f32.mrb[0].mxu0
        %4615 = vmatprep.mubr.f32.mxu0 0.0
        %4616 = vmatmul.mubr.f32.gmra.mrb[0].mxu0 %v1078
        %v4617 = vpop.f32.mrb[0].mxu0
        %v4618 = vadd.f32 0.0, %v4617
        %v4619 = vpop.f32.mrb[0].mxu0
        %4620 = vmatprep.mubr.f32.mxu0 0.0
        %4621 = vmatmul.mubr.f32.gmra.mrb[0].mxu0 %v1080
        %v4622 = vpop.f32.mrb[0].mxu0
        %v4623 = vadd.f32 0.0, %v4622
        %v4624 = vpop.f32.mrb[0].mxu0
        %4625 = vmatprep.mubr.f32.mxu0 0.0
        %4626 = vmatmul.mubr.f32.gmra.mrb[0].mxu0 %v1082
        %v4627 = vpop.f32.mrb[0].mxu0
        %v4628 = vadd.f32 0.0, %v4627
        %v4629 = vpop.f32.mrb[0].mxu0
        %4630 = vmatprep.mubr.f32.mxu0 0.0
        %4631 = vmatmul.mubr.f32.gmra.mrb[0].mxu0 %v1084
        %v4632 = vpop.f32.mrb[0].mxu0
        %v4633 = vadd.f32 0.0, %v4632
        %v4634 = vpop.f32.mrb[0].mxu0
        %4635 = vmatprep.mubr.f32.mxu0 0.0
        %4636 = vmatmul.mubr.f32.gmra.mrb[0].mxu0 %v1086
        %v4637 = vpop.f32.mrb[0].mxu0
        %v4638 = vadd.f32 0.0, %v4637
        %v4639 = vpop.f32.mrb[0].mxu0
        %4640 = vmatprep.mubr.f32.mxu0 0.0
        %4641 = vmatmul.mubr.f32.gmra.mrb[0].mxu0 %v1088
        %v4642 = vpop.f32.mrb[0].mxu0
        %v4643 = vadd.f32 0.0, %v4642
        %v4644 = vpop.f32.mrb[0].mxu0
        %4645 = vmatprep.mubr.f32.mxu0 0.0
        %4646 = vmatmul.mubr.f32.gmra.mrb[0].mxu0 %v1090
        %v4647 = vpop.f32.mrb[0].mxu0
        %v4648 = vadd.f32 0.0, %v4647
        %v4649 = vpop.f32.mrb[0].mxu0
        %4650 = vmatprep.mubr.f32.mxu0 0.0
        %4651 = vmatmul.mubr.f32.gmra.mrb[0].mxu0 %v1092
        %v4652 = vpop.f32.mrb[0].mxu0
        %v4653 = vadd.f32 0.0, %v4652
        %v4654 = vpop.f32.mrb[0].mxu0
        %4655 = vmatprep.mubr.f32.mxu0 0.0
        %4656 = vmatmul.mubr.f32.gmra.mrb[0].mxu0 %v1094
        %v4657 = vpop.f32.mrb[0].mxu0
        %v4658 = vadd.f32 0.0, %v4657
        %v4659 = vpop.f32.mrb[0].mxu0
        %4660 = vmatprep.mubr.f32.mxu0 0.0
        %4661 = vmatmul.mubr.f32.gmra.mrb[0].mxu0 %v1096
        %v4662 = vpop.f32.mrb[0].mxu0
        %v4663 = vadd.f32 0.0, %v4662
        %v4664 = vpop.f32.mrb[0].mxu0
        %4665 = vmatprep.mubr.f32.mxu0 0.0
        %4666 = vmatmul.mubr.f32.gmra.mrb[0].mxu0 %v1098
        %v4667 = vpop.f32.mrb[0].mxu0
        %v4668 = vadd.f32 0.0, %v4667
        %v4669 = vpop.f32.mrb[0].mxu0
        %4670 = vmatprep.mubr.f32.mxu0 0.0
        %4671 = vmatmul.mubr.f32.gmra.mrb[0].mxu0 %v1100
        %v4672 = vpop.f32.mrb[0].mxu0
        %v4673 = vadd.f32 0.0, %v4672
        %v4674 = vpop.f32.mrb[0].mxu0
        %4675 = vmatprep.mubr.f32.mxu0 0.0
        %4676 = vmatmul.mubr.f32.gmra.mrb[0].mxu0 %v1102
        %v4677 = vpop.f32.mrb[0].mxu0
        %v4678 = vadd.f32 0.0, %v4677
        %v4679 = vpop.f32.mrb[0].mxu0
        %4680 = vmatprep.mubr.f32.mxu0 0.0
        %4681 = vmatmul.mubr.f32.gmra.mrb[0].mxu0 %v1104
        %v4682 = vpop.f32.mrb[0].mxu0
        %v4683 = vadd.f32 0.0, %v4682
        %v4684 = vpop.f32.mrb[0].mxu0
        %4685 = vmatprep.mubr.f32.mxu0 0.0
        %4686 = vmatmul.mubr.f32.gmra.mrb[0].mxu0 %v2320
        %v4687 = vpop.f32.mrb[0].mxu0
        %v4688 = vadd.f32 0.0, %v4687
        %v4689 = vpop.f32.mrb[0].mxu0
        %4690 = vmatprep.mubr.f32.mxu0 0.0
        %4691 = vmatmul.mubr.f32.gmra.mrb[0].mxu0 %v2322
        %v4692 = vpop.f32.mrb[0].mxu0
        %v4693 = vadd.f32 0.0, %v4692
        %v4694 = vpop.f32.mrb[0].mxu0
        %4695 = vmatprep.mubr.f32.mxu0 0.0
        %4696 = vmatmul.mubr.f32.gmra.mrb[0].mxu0 %v3402
        %v4697 = vpop.f32.mrb[0].mxu0
        %v4698 = vadd.f32 0.0, %v4697
        %v4699 = vpop.f32.mrb[0].mxu0
        %4700 = vmatprep.mubr.f32.mxu0 0.0
        %4701 = vmatmul.mubr.f32.gmra.mrb[0].mxu0 %v3404
        %v4702 = vpop.f32.mrb[0].mxu0
        %v4703 = vadd.f32 0.0, %v4702
        %v4704 = vpop.f32.mrb[0].mxu0
        %4705 = vmatprep.mubr.f32.mxu0 0.0
        %4706 = vmatmul.mubr.f32.gmra.mrb[0].mxu0 %v4484
        %v4707 = vpop.f32.mrb[0].mxu0
        %v4708 = vadd.f32 0.0, %v4707
        %v4709 = vpop.f32.mrb[0].mxu0
        %4710 = vmatprep.mubr.f32.mxu0 0.0
        %4711 = vmatmul.mubr.f32.gmra.mrb[0].mxu0 %v4486
        %v4712 = vpop.f32.mrb[0].mxu0
        %v4713 = vadd.f32 0.0, %v4712
        %v4714 = vpop.f32.mrb[0].mxu0
        %4715 = vdwg.mxu0
        %v4716 = vadd.f32 %v4445, %v4558
        %v4717 = vadd.f32 %v4446, %v4563
        %v4718 = vadd.f32 %v4447, %v4568
        %v4719 = vadd.f32 %v4448, %v4573
        %v4720 = vadd.f32 %v4449, %v4578
        %v4721 = vadd.f32 %v4450, %v4583
        %v4722 = vadd.f32 %v4451, %v4588
        %v4723 = vadd.f32 %v4452, %v4593
        %v4724 = vadd.f32 %v4453, %v4598
        %v4725 = vadd.f32 %v4454, %v4603
        %v4726 = vadd.f32 %v4455, %v4608
        %v4727 = vadd.f32 %v4456, %v4613
        %v4728 = vadd.f32 %v4457, %v4618
        %v4729 = vadd.f32 %v4458, %v4623
        %v4730 = vadd.f32 %v4459, %v4628
        %v4731 = vadd.f32 %v4460, %v4633
        %v4732 = vadd.f32 %v4461, %v4638
        %v4733 = vadd.f32 %v4462, %v4643
        %v4734 = vadd.f32 %v4463, %v4648
        %v4735 = vadd.f32 %v4464, %v4653
        %v4736 = vadd.f32 %v4465, %v4658
        %v4737 = vadd.f32 %v4466, %v4663
        %v4738 = vadd.f32 %v4467, %v4668
        %v4739 = vadd.f32 %v4468, %v4673
        %v4740 = vadd.f32 %v4469, %v4678
        %v4741 = vadd.f32 %v4470, %v4683
        %v4742 = vadd.f32 %v4471, %v4688
        %v4743 = vadd.f32 %v4472, %v4693
        %v4744 = vadd.f32 %v4473, %v4698
        %v4745 = vadd.f32 %v4474, %v4703
        %v4746 = vadd.f32 %v4475, %v4708
        %v4747 = vadd.f32 %v4476, %v4713
        %v4748 = vrot.slane %v238, 3
        %v4749 = vrot.slane %v239, 3
        %v4750 = vsel %vm1366, %v4748, %v4749
        %v4751 = vrot.slane %v240, 3
        %v4752 = vsel %vm1366, %v4749, %v4751
        %s4753 = scalar_lea.vmem %s1, 60
        %v4754 = vld [vmem:[%s4753] sm:$0xf]
        %v4755 = vsel %vm373, %v4750, 0
        %v4757 = vsel %vm373, %v4752, 0
        %v4760 = vsel %vm438, %v4754, 0
        %4762 = vmatprep.subr.mxu0 0.0
        %4763 = vmatpush1.msra.mxu0 %v4760
        %4764 = vmatprep.subr.mxu0 0.0
        %4765 = vmatpush1.msra.mxu0 0.0
        %4766 = vmatprep.subr.mxu0 0.0
        %4767 = vmatpush1.msra.mxu0 0.0
        %4768 = vmatprep.subr.mxu0 0.0
        %4769 = vmatpush1.msra.mxu0 0.0
        %4770 = vmatprep.subr.mxu0 0.0
        %4771 = vmatpush1.msra.mxu0 0.0
        %4772 = vmatprep.subr.mxu0 0.0
        %4773 = vmatpush1.msra.mxu0 0.0
        %4774 = vmatprep.subr.mxu0 0.0
        %4775 = vmatpush1.msra.mxu0 0.0
        %4776 = vmatprep.subr.mxu0 0.0
        %4777 = vmatpush1.msra.mxu0 0.0
        %4778 = vmatprep.subr.mxu0 0.0
        %4779 = vmatpush1.msra.mxu0 0.0
        %4780 = vmatprep.subr.mxu0 0.0
        %4781 = vmatpush1.msra.mxu0 0.0
        %4782 = vmatprep.subr.mxu0 0.0
        %4783 = vmatpush1.msra.mxu0 0.0
        %4784 = vmatprep.subr.mxu0 0.0
        %4785 = vmatpush1.msra.mxu0 0.0
        %4786 = vmatprep.subr.mxu0 0.0
        %4787 = vmatpush1.msra.mxu0 0.0
        %4788 = vmatprep.subr.mxu0 0.0
        %4789 = vmatpush1.msra.mxu0 0.0
        %4790 = vmatprep.subr.mxu0 0.0
        %4791 = vmatpush1.msra.mxu0 0.0
        %4792 = vmatprep.subr.mxu0 0.0
        %4793 = vmatpush1.msra.mxu0 0.0
        %4794 = vmatprep.subr.mxu0 0.0
        %4795 = vmatpush1.msra.mxu0 0.0
        %4796 = vmatprep.subr.mxu0 0.0
        %4797 = vmatpush1.msra.mxu0 0.0
        %4798 = vmatprep.subr.mxu0 0.0
        %4799 = vmatpush1.msra.mxu0 0.0
        %4800 = vmatprep.subr.mxu0 0.0
        %4801 = vmatpush1.msra.mxu0 0.0
        %4802 = vmatprep.subr.mxu0 0.0
        %4803 = vmatpush1.msra.mxu0 0.0
        %4804 = vmatprep.subr.mxu0 0.0
        %4805 = vmatpush1.msra.mxu0 0.0
        %4806 = vmatprep.subr.mxu0 0.0
        %4807 = vmatpush1.msra.mxu0 0.0
        %4808 = vmatprep.subr.mxu0 0.0
        %4809 = vmatpush1.msra.mxu0 0.0
        %4810 = vmatprep.subr.mxu0 0.0
        %4811 = vmatpush1.msra.mxu0 0.0
        %4812 = vmatprep.subr.mxu0 0.0
        %4813 = vmatpush1.msra.mxu0 0.0
        %4814 = vmatprep.subr.mxu0 0.0
        %4815 = vmatpush1.msra.mxu0 0.0
        %4816 = vmatprep.subr.mxu0 0.0
        %4817 = vmatpush1.msra.mxu0 0.0
        %4818 = vmatprep.subr.mxu0 0.0
        %4819 = vmatpush1.msra.mxu0 0.0
        %4820 = vmatprep.subr.mxu0 0.0
        %4821 = vmatpush1.msra.mxu0 0.0
        %4822 = vmatprep.subr.mxu0 0.0
        %4823 = vmatpush1.msra.mxu0 0.0
        %4824 = vmatprep.subr.mxu0 0.0
        %4825 = vmatpush1.msra.mxu0 0.0
        %4826 = vmatprep.mubr.f32.mxu0 0.0
        %4827 = vmatmul.mubr.f32.gmra.mrb[0].mxu0 %v1461
        %v4828 = vpop.f32.mrb[0].mxu0
        %v4829 = vadd.f32 0.0, %v4828
        %v4830 = vpop.f32.mrb[0].mxu0
        %4831 = vmatprep.mubr.f32.mxu0 0.0
        %4832 = vmatmul.mubr.f32.gmra.mrb[0].mxu0 %v1463
        %v4833 = vpop.f32.mrb[0].mxu0
        %v4834 = vadd.f32 0.0, %v4833
        %v4835 = vpop.f32.mrb[0].mxu0
        %4836 = vmatprep.mubr.f32.mxu0 0.0
        %4837 = vmatmul.mubr.f32.gmra.mrb[0].mxu0 %v1465
        %v4838 = vpop.f32.mrb[0].mxu0
        %v4839 = vadd.f32 0.0, %v4838
        %v4840 = vpop.f32.mrb[0].mxu0
        %4841 = vmatprep.mubr.f32.mxu0 0.0
        %4842 = vmatmul.mubr.f32.gmra.mrb[0].mxu0 %v1467
        %v4843 = vpop.f32.mrb[0].mxu0
        %v4844 = vadd.f32 0.0, %v4843
        %v4845 = vpop.f32.mrb[0].mxu0
        %4846 = vmatprep.mubr.f32.mxu0 0.0
        %4847 = vmatmul.mubr.f32.gmra.mrb[0].mxu0 %v1469
        %v4848 = vpop.f32.mrb[0].mxu0
        %v4849 = vadd.f32 0.0, %v4848
        %v4850 = vpop.f32.mrb[0].mxu0
        %4851 = vmatprep.mubr.f32.mxu0 0.0
        %4852 = vmatmul.mubr.f32.gmra.mrb[0].mxu0 %v1471
        %v4853 = vpop.f32.mrb[0].mxu0
        %v4854 = vadd.f32 0.0, %v4853
        %v4855 = vpop.f32.mrb[0].mxu0
        %4856 = vmatprep.mubr.f32.mxu0 0.0
        %4857 = vmatmul.mubr.f32.gmra.mrb[0].mxu0 %v1473
        %v4858 = vpop.f32.mrb[0].mxu0
        %v4859 = vadd.f32 0.0, %v4858
        %v4860 = vpop.f32.mrb[0].mxu0
        %4861 = vmatprep.mubr.f32.mxu0 0.0
        %4862 = vmatmul.mubr.f32.gmra.mrb[0].mxu0 %v1475
        %v4863 = vpop.f32.mrb[0].mxu0
        %v4864 = vadd.f32 0.0, %v4863
        %v4865 = vpop.f32.mrb[0].mxu0
        %4866 = vmatprep.mubr.f32.mxu0 0.0
        %4867 = vmatmul.mubr.f32.gmra.mrb[0].mxu0 %v1477
        %v4868 = vpop.f32.mrb[0].mxu0
        %v4869 = vadd.f32 0.0, %v4868
        %v4870 = vpop.f32.mrb[0].mxu0
        %4871 = vmatprep.mubr.f32.mxu0 0.0
        %4872 = vmatmul.mubr.f32.gmra.mrb[0].mxu0 %v1479
        %v4873 = vpop.f32.mrb[0].mxu0
        %v4874 = vadd.f32 0.0, %v4873
        %v4875 = vpop.f32.mrb[0].mxu0
        %4876 = vmatprep.mubr.f32.mxu0 0.0
        %4877 = vmatmul.mubr.f32.gmra.mrb[0].mxu0 %v1481
        %v4878 = vpop.f32.mrb[0].mxu0
        %v4879 = vadd.f32 0.0, %v4878
        %v4880 = vpop.f32.mrb[0].mxu0
        %4881 = vmatprep.mubr.f32.mxu0 0.0
        %4882 = vmatmul.mubr.f32.gmra.mrb[0].mxu0 %v1483
        %v4883 = vpop.f32.mrb[0].mxu0
        %v4884 = vadd.f32 0.0, %v4883
        %v4885 = vpop.f32.mrb[0].mxu0
        %4886 = vmatprep.mubr.f32.mxu0 0.0
        %4887 = vmatmul.mubr.f32.gmra.mrb[0].mxu0 %v1485
        %v4888 = vpop.f32.mrb[0].mxu0
        %v4889 = vadd.f32 0.0, %v4888
        %v4890 = vpop.f32.mrb[0].mxu0
        %4891 = vmatprep.mubr.f32.mxu0 0.0
        %4892 = vmatmul.mubr.f32.gmra.mrb[0].mxu0 %v1487
        %v4893 = vpop.f32.mrb[0].mxu0
        %v4894 = vadd.f32 0.0, %v4893
        %v4895 = vpop.f32.mrb[0].mxu0
        %4896 = vmatprep.mubr.f32.mxu0 0.0
        %4897 = vmatmul.mubr.f32.gmra.mrb[0].mxu0 %v1489
        %v4898 = vpop.f32.mrb[0].mxu0
        %v4899 = vadd.f32 0.0, %v4898
        %v4900 = vpop.f32.mrb[0].mxu0
        %4901 = vmatprep.mubr.f32.mxu0 0.0
        %4902 = vmatmul.mubr.f32.gmra.mrb[0].mxu0 %v1491
        %v4903 = vpop.f32.mrb[0].mxu0
        %v4904 = vadd.f32 0.0, %v4903
        %v4905 = vpop.f32.mrb[0].mxu0
        %4906 = vmatprep.mubr.f32.mxu0 0.0
        %4907 = vmatmul.mubr.f32.gmra.mrb[0].mxu0 %v1493
        %v4908 = vpop.f32.mrb[0].mxu0
        %v4909 = vadd.f32 0.0, %v4908
        %v4910 = vpop.f32.mrb[0].mxu0
        %4911 = vmatprep.mubr.f32.mxu0 0.0
        %4912 = vmatmul.mubr.f32.gmra.mrb[0].mxu0 %v1495
        %v4913 = vpop.f32.mrb[0].mxu0
        %v4914 = vadd.f32 0.0, %v4913
        %v4915 = vpop.f32.mrb[0].mxu0
        %4916 = vmatprep.mubr.f32.mxu0 0.0
        %4917 = vmatmul.mubr.f32.gmra.mrb[0].mxu0 %v1497
        %v4918 = vpop.f32.mrb[0].mxu0
        %v4919 = vadd.f32 0.0, %v4918
        %v4920 = vpop.f32.mrb[0].mxu0
        %4921 = vmatprep.mubr.f32.mxu0 0.0
        %4922 = vmatmul.mubr.f32.gmra.mrb[0].mxu0 %v1499
        %v4923 = vpop.f32.mrb[0].mxu0
        %v4924 = vadd.f32 0.0, %v4923
        %v4925 = vpop.f32.mrb[0].mxu0
        %4926 = vmatprep.mubr.f32.mxu0 0.0
        %4927 = vmatmul.mubr.f32.gmra.mrb[0].mxu0 %v1501
        %v4928 = vpop.f32.mrb[0].mxu0
        %v4929 = vadd.f32 0.0, %v4928
        %v4930 = vpop.f32.mrb[0].mxu0
        %4931 = vmatprep.mubr.f32.mxu0 0.0
        %4932 = vmatmul.mubr.f32.gmra.mrb[0].mxu0 %v1503
        %v4933 = vpop.f32.mrb[0].mxu0
        %v4934 = vadd.f32 0.0, %v4933
        %v4935 = vpop.f32.mrb[0].mxu0
        %4936 = vmatprep.mubr.f32.mxu0 0.0
        %4937 = vmatmul.mubr.f32.gmra.mrb[0].mxu0 %v1505
        %v4938 = vpop.f32.mrb[0].mxu0
        %v4939 = vadd.f32 0.0, %v4938
        %v4940 = vpop.f32.mrb[0].mxu0
        %4941 = vmatprep.mubr.f32.mxu0 0.0
        %4942 = vmatmul.mubr.f32.gmra.mrb[0].mxu0 %v1507
        %v4943 = vpop.f32.mrb[0].mxu0
        %v4944 = vadd.f32 0.0, %v4943
        %v4945 = vpop.f32.mrb[0].mxu0
        %4946 = vmatprep.mubr.f32.mxu0 0.0
        %4947 = vmatmul.mubr.f32.gmra.mrb[0].mxu0 %v1509
        %v4948 = vpop.f32.mrb[0].mxu0
        %v4949 = vadd.f32 0.0, %v4948
        %v4950 = vpop.f32.mrb[0].mxu0
        %4951 = vmatprep.mubr.f32.mxu0 0.0
        %4952 = vmatmul.mubr.f32.gmra.mrb[0].mxu0 %v1511
        %v4953 = vpop.f32.mrb[0].mxu0
        %v4954 = vadd.f32 0.0, %v4953
        %v4955 = vpop.f32.mrb[0].mxu0
        %4956 = vmatprep.mubr.f32.mxu0 0.0
        %4957 = vmatmul.mubr.f32.gmra.mrb[0].mxu0 %v2591
        %v4958 = vpop.f32.mrb[0].mxu0
        %v4959 = vadd.f32 0.0, %v4958
        %v4960 = vpop.f32.mrb[0].mxu0
        %4961 = vmatprep.mubr.f32.mxu0 0.0
        %4962 = vmatmul.mubr.f32.gmra.mrb[0].mxu0 %v2593
        %v4963 = vpop.f32.mrb[0].mxu0
        %v4964 = vadd.f32 0.0, %v4963
        %v4965 = vpop.f32.mrb[0].mxu0
        %4966 = vmatprep.mubr.f32.mxu0 0.0
        %4967 = vmatmul.mubr.f32.gmra.mrb[0].mxu0 %v3673
        %v4968 = vpop.f32.mrb[0].mxu0
        %v4969 = vadd.f32 0.0, %v4968
        %v4970 = vpop.f32.mrb[0].mxu0
        %4971 = vmatprep.mubr.f32.mxu0 0.0
        %4972 = vmatmul.mubr.f32.gmra.mrb[0].mxu0 %v3675
        %v4973 = vpop.f32.mrb[0].mxu0
        %v4974 = vadd.f32 0.0, %v4973
        %v4975 = vpop.f32.mrb[0].mxu0
        %4976 = vmatprep.mubr.f32.mxu0 0.0
        %4977 = vmatmul.mubr.f32.gmra.mrb[0].mxu0 %v4755
        %v4978 = vpop.f32.mrb[0].mxu0
        %v4979 = vadd.f32 0.0, %v4978
        %v4980 = vpop.f32.mrb[0].mxu0
        %4981 = vmatprep.mubr.f32.mxu0 0.0
        %4982 = vmatmul.mubr.f32.gmra.mrb[0].mxu0 %v4757
        %v4983 = vpop.f32.mrb[0].mxu0
        %v4984 = vadd.f32 0.0, %v4983
        %v4985 = vpop.f32.mrb[0].mxu0
        %4986 = vdwg.mxu0
        %v4987 = vadd.f32 %v4716, %v4829
        %v4988 = vadd.f32 %v4717, %v4834
        %v4989 = vadd.f32 %v4718, %v4839
        %v4990 = vadd.f32 %v4719, %v4844
        %v4991 = vadd.f32 %v4720, %v4849
        %v4992 = vadd.f32 %v4721, %v4854
        %v4993 = vadd.f32 %v4722, %v4859
        %v4994 = vadd.f32 %v4723, %v4864
        %v4995 = vadd.f32 %v4724, %v4869
        %v4996 = vadd.f32 %v4725, %v4874
        %v4997 = vadd.f32 %v4726, %v4879
        %v4998 = vadd.f32 %v4727, %v4884
        %v4999 = vadd.f32 %v4728, %v4889
        %v5000 = vadd.f32 %v4729, %v4894
        %v5001 = vadd.f32 %v4730, %v4899
        %v5002 = vadd.f32 %v4731, %v4904
        %v5003 = vadd.f32 %v4732, %v4909
        %v5004 = vadd.f32 %v4733, %v4914
        %v5005 = vadd.f32 %v4734, %v4919
        %v5006 = vadd.f32 %v4735, %v4924
        %v5007 = vadd.f32 %v4736, %v4929
        %v5008 = vadd.f32 %v4737, %v4934
        %v5009 = vadd.f32 %v4738, %v4939
        %v5010 = vadd.f32 %v4739, %v4944
        %v5011 = vadd.f32 %v4740, %v4949
        %v5012 = vadd.f32 %v4741, %v4954
        %v5013 = vadd.f32 %v4742, %v4959
        %v5014 = vadd.f32 %v4743, %v4964
        %v5015 = vadd.f32 %v4744, %v4969
        %v5016 = vadd.f32 %v4745, %v4974
        %v5017 = vadd.f32 %v4746, %v4979
        %v5018 = vadd.f32 %v4747, %v4984
        %p5019 = scmp.eq.s32.totalorder %s21, 0
        %p5020 = scmp.eq.s32.totalorder %s22, 0
        %p5021 = pnand %p5019, %p5020
        %p5022 = pneg %p5021
        // Predicated region
        $region33: #{tpu_custom_call.1} parent=31 // pred_check
          _
        $region34: #{tpu_custom_call.1} parent=31 // pred_check_branch
          %5024 = sbr.rel (%p5021) target = $region36
        $region35: #{tpu_custom_call.1} parent=31 // pred_region
          %5025 = vst [vmem:[#allocation2] sm:$0x1] 0.0
          %5026 = vst [vmem:[#allocation3] sm:$0x1] 0.0
        $region36: #{tpu_custom_call.1} parent=31 // pred_fallthru
          _
        // Predicated region
        $region37: #{tpu_custom_call.1} parent=31 // pred_check
          %p5027 = pneg %p5019
        $region38: #{tpu_custom_call.1} parent=31 // pred_check_branch
          %5029 = sbr.rel (%p5027) target = $region40
        $region39: #{tpu_custom_call.1} parent=31 // pred_region
          %v5030 = vld [vmem:[#allocation2] sm:$0x1]
          %v5031 = vadd.f32 %v4987, %v4988
          %v5032 = vadd.f32 %v5031, %v4989
          %v5033 = vadd.f32 %v5032, %v4990
          %v5034 = vadd.f32 %v5033, %v4991
          %v5035 = vadd.f32 %v5034, %v4992
          %v5036 = vadd.f32 %v5035, %v4993
          %v5037 = vadd.f32 %v5036, %v4994
          %v5038 = vadd.f32 %v5037, %v4995
          %v5039 = vadd.f32 %v5038, %v4996
          %v5040 = vadd.f32 %v5039, %v4997
          %v5041 = vadd.f32 %v5040, %v4998
          %v5042 = vadd.f32 %v5041, %v4999
          %v5043 = vadd.f32 %v5042, %v5000
          %v5044 = vadd.f32 %v5043, %v5001
          %v5045 = vadd.f32 %v5044, %v5002
          %v5046 = vadd.f32 %v5045, %v5003
          %v5047 = vadd.f32 %v5046, %v5004
          %v5048 = vadd.f32 %v5047, %v5005
          %v5049 = vadd.f32 %v5048, %v5006
          %v5050 = vadd.f32 %v5049, %v5007
          %v5051 = vadd.f32 %v5050, %v5008
          %v5052 = vadd.f32 %v5051, %v5009
          %v5053 = vadd.f32 %v5052, %v5010
          %v5054 = vadd.f32 %v5053, %v5011
          %v5055 = vadd.f32 %v5054, %v5012
          %v5056 = vadd.f32 %v5055, %v5013
          %v5057 = vadd.f32 %v5056, %v5014
          %v5058 = vadd.f32 %v5057, %v5015
          %v5059 = vadd.f32 %v5058, %v5016
          %v5060 = vadd.f32 %v5059, %v5017
          %v5061 = vadd.f32 %v5060, %v5018
          %v5062 = vrot.slane %v5061, 4
          %v5063 = vadd.f32 %v5061, %v5062
          %v5064 = vrot.slane %v5063, 2
          %v5065 = vadd.f32 %v5063, %v5064
          %v5066 = vrot.slane %v5065, 1
          %v5067 = vadd.f32 %v5065, %v5066
          %v5068 = vadd.f32 %v5030, %v5067
          %5069 = vst [vmem:[#allocation2] sm:$0x1] %v5068
          %v5070 = vld [vmem:[#allocation3] sm:$0x1]
          %v5071 = vmul.f32 %v4987, %v4987
          %v5072 = vmul.f32 %v4988, %v4988
          %v5073 = vmul.f32 %v4989, %v4989
          %v5074 = vmul.f32 %v4990, %v4990
          %v5075 = vmul.f32 %v4991, %v4991
          %v5076 = vmul.f32 %v4992, %v4992
          %v5077 = vmul.f32 %v4993, %v4993
          %v5078 = vmul.f32 %v4994, %v4994
          %v5079 = vmul.f32 %v4995, %v4995
          %v5080 = vmul.f32 %v4996, %v4996
          %v5081 = vmul.f32 %v4997, %v4997
          %v5082 = vmul.f32 %v4998, %v4998
          %v5083 = vmul.f32 %v4999, %v4999
          %v5084 = vmul.f32 %v5000, %v5000
          %v5085 = vmul.f32 %v5001, %v5001
          %v5086 = vmul.f32 %v5002, %v5002
          %v5087 = vmul.f32 %v5003, %v5003
          %v5088 = vmul.f32 %v5004, %v5004
          %v5089 = vmul.f32 %v5005, %v5005
          %v5090 = vmul.f32 %v5006, %v5006
          %v5091 = vmul.f32 %v5007, %v5007
          %v5092 = vmul.f32 %v5008, %v5008
          %v5093 = vmul.f32 %v5009, %v5009
          %v5094 = vmul.f32 %v5010, %v5010
          %v5095 = vmul.f32 %v5011, %v5011
          %v5096 = vmul.f32 %v5012, %v5012
          %v5097 = vmul.f32 %v5013, %v5013
          %v5098 = vmul.f32 %v5014, %v5014
          %v5099 = vmul.f32 %v5015, %v5015
          %v5100 = vmul.f32 %v5016, %v5016
          %v5101 = vmul.f32 %v5017, %v5017
          %v5102 = vmul.f32 %v5018, %v5018
          %v5103 = vadd.f32 %v5071, %v5072
          %v5104 = vadd.f32 %v5103, %v5073
          %v5105 = vadd.f32 %v5104, %v5074
          %v5106 = vadd.f32 %v5105, %v5075
          %v5107 = vadd.f32 %v5106, %v5076
          %v5108 = vadd.f32 %v5107, %v5077
          %v5109 = vadd.f32 %v5108, %v5078
          %v5110 = vadd.f32 %v5109, %v5079
          %v5111 = vadd.f32 %v5110, %v5080
          %v5112 = vadd.f32 %v5111, %v5081
          %v5113 = vadd.f32 %v5112, %v5082
          %v5114 = vadd.f32 %v5113, %v5083
          %v5115 = vadd.f32 %v5114, %v5084
          %v5116 = vadd.f32 %v5115, %v5085
          %v5117 = vadd.f32 %v5116, %v5086
          %v5118 = vadd.f32 %v5117, %v5087
          %v5119 = vadd.f32 %v5118, %v5088
          %v5120 = vadd.f32 %v5119, %v5089
          %v5121 = vadd.f32 %v5120, %v5090
          %v5122 = vadd.f32 %v5121, %v5091
          %v5123 = vadd.f32 %v5122, %v5092
          %v5124 = vadd.f32 %v5123, %v5093
          %v5125 = vadd.f32 %v5124, %v5094
          %v5126 = vadd.f32 %v5125, %v5095
          %v5127 = vadd.f32 %v5126, %v5096
          %v5128 = vadd.f32 %v5127, %v5097
          %v5129 = vadd.f32 %v5128, %v5098
          %v5130 = vadd.f32 %v5129, %v5099
          %v5131 = vadd.f32 %v5130, %v5100
          %v5132 = vadd.f32 %v5131, %v5101
          %v5133 = vadd.f32 %v5132, %v5102
          %v5134 = vrot.slane %v5133, 4
          %v5135 = vadd.f32 %v5133, %v5134
          %v5136 = vrot.slane %v5135, 2
          %v5137 = vadd.f32 %v5135, %v5136
          %v5138 = vrot.slane %v5137, 1
          %v5139 = vadd.f32 %v5137, %v5138
          %v5140 = vadd.f32 %v5070, %v5139
          %5141 = vst [vmem:[#allocation3] sm:$0x1] %v5140
        $region40: #{tpu_custom_call.1} parent=31 // pred_fallthru
          _
        %p5142 = scmp.eq.s32.totalorder %s21, 1
        // Predicated region
        $region41: #{tpu_custom_call.1} parent=31 // pred_check
          %p5143 = pneg %p5142
        $region42: #{tpu_custom_call.1} parent=31 // pred_check_branch
          %5145 = sbr.rel (%p5143) target = $region44
        $region43: #{tpu_custom_call.1} parent=31 // pred_region
          %v5146 = vld [vmem:[#allocation2] sm:$0x1]
          %v5147 = vmul.f32 %v5146, 0.001953125
          %v5148 = vld [vmem:[#allocation3] sm:$0x1]
          %v5149 = vmul.f32 %v5148, 0.001953125
          %v5150 = vmul.f32 %v5147, %v5147
          %v5151 = vsub.f32 %v5149, %v5150
          %v5152 = vmax.f32 %v5151, 0.0
          %v5153 = vld [vmem:[%s2] sm:$0x1]
          %v5154 = vadd.f32 %v5152, 1e-05
          %v5155 = vrsqrt.pop %v5154
          %v5156 = vmul.f32 %v5153, %v5155
          %v5157 = vld [vmem:[%s2 + $0x1] sm:$0x1]
          %v5158 = vmul.f32 %v5147, %v5156
          %v5159 = vsub.f32 %v5157, %v5158
          %v5160 = vlaneseq
          %v5161 = vshrl.u32 %v5160, 7
          %v5162 = vsub.s32 0, %v5161
          %v5163 = vrot.slane %v5156, %v5162
          %v5164 = vmul.f32 %v4987, %v5163
          %v5165 = vmul.f32 %v4988, %v5163
          %v5166 = vmul.f32 %v4989, %v5163
          %v5167 = vmul.f32 %v4990, %v5163
          %v5168 = vmul.f32 %v4991, %v5163
          %v5169 = vmul.f32 %v4992, %v5163
          %v5170 = vmul.f32 %v4993, %v5163
          %v5171 = vmul.f32 %v4994, %v5163
          %v5172 = vmul.f32 %v4995, %v5163
          %v5173 = vmul.f32 %v4996, %v5163
          %v5174 = vmul.f32 %v4997, %v5163
          %v5175 = vmul.f32 %v4998, %v5163
          %v5176 = vmul.f32 %v4999, %v5163
          %v5177 = vmul.f32 %v5000, %v5163
          %v5178 = vmul.f32 %v5001, %v5163
          %v5179 = vmul.f32 %v5002, %v5163
          %v5180 = vmul.f32 %v5003, %v5163
          %v5181 = vmul.f32 %v5004, %v5163
          %v5182 = vmul.f32 %v5005, %v5163
          %v5183 = vmul.f32 %v5006, %v5163
          %v5184 = vmul.f32 %v5007, %v5163
          %v5185 = vmul.f32 %v5008, %v5163
          %v5186 = vmul.f32 %v5009, %v5163
          %v5187 = vmul.f32 %v5010, %v5163
          %v5188 = vmul.f32 %v5011, %v5163
          %v5189 = vmul.f32 %v5012, %v5163
          %v5190 = vmul.f32 %v5013, %v5163
          %v5191 = vmul.f32 %v5014, %v5163
          %v5192 = vmul.f32 %v5015, %v5163
          %v5193 = vmul.f32 %v5016, %v5163
          %v5194 = vmul.f32 %v5017, %v5163
          %v5195 = vmul.f32 %v5018, %v5163
          %v5196 = vlaneseq
          %v5197 = vshrl.u32 %v5196, 7
          %v5198 = vsub.s32 0, %v5197
          %v5199 = vrot.slane %v5159, %v5198
          %v5200 = vadd.f32 %v5164, %v5199
          %v5201 = vadd.f32 %v5165, %v5199
          %v5202 = vadd.f32 %v5166, %v5199
          %v5203 = vadd.f32 %v5167, %v5199
          %v5204 = vadd.f32 %v5168, %v5199
          %v5205 = vadd.f32 %v5169, %v5199
          %v5206 = vadd.f32 %v5170, %v5199
          %v5207 = vadd.f32 %v5171, %v5199
          %v5208 = vadd.f32 %v5172, %v5199
          %v5209 = vadd.f32 %v5173, %v5199
          %v5210 = vadd.f32 %v5174, %v5199
          %v5211 = vadd.f32 %v5175, %v5199
          %v5212 = vadd.f32 %v5176, %v5199
          %v5213 = vadd.f32 %v5177, %v5199
          %v5214 = vadd.f32 %v5178, %v5199
          %v5215 = vadd.f32 %v5179, %v5199
          %v5216 = vadd.f32 %v5180, %v5199
          %v5217 = vadd.f32 %v5181, %v5199
          %v5218 = vadd.f32 %v5182, %v5199
          %v5219 = vadd.f32 %v5183, %v5199
          %v5220 = vadd.f32 %v5184, %v5199
          %v5221 = vadd.f32 %v5185, %v5199
          %v5222 = vadd.f32 %v5186, %v5199
          %v5223 = vadd.f32 %v5187, %v5199
          %v5224 = vadd.f32 %v5188, %v5199
          %v5225 = vadd.f32 %v5189, %v5199
          %v5226 = vadd.f32 %v5190, %v5199
          %v5227 = vadd.f32 %v5191, %v5199
          %v5228 = vadd.f32 %v5192, %v5199
          %v5229 = vadd.f32 %v5193, %v5199
          %v5230 = vadd.f32 %v5194, %v5199
          %v5231 = vadd.f32 %v5195, %v5199
          %vm5232 = vcmp.ge.f32.partialorder %v5200, 0.0
          %vm5233 = vcmp.ge.f32.partialorder %v5201, 0.0
          %vm5234 = vcmp.ge.f32.partialorder %v5202, 0.0
          %vm5235 = vcmp.ge.f32.partialorder %v5203, 0.0
          %vm5236 = vcmp.ge.f32.partialorder %v5204, 0.0
          %vm5237 = vcmp.ge.f32.partialorder %v5205, 0.0
          %vm5238 = vcmp.ge.f32.partialorder %v5206, 0.0
          %vm5239 = vcmp.ge.f32.partialorder %v5207, 0.0
          %vm5240 = vcmp.ge.f32.partialorder %v5208, 0.0
          %vm5241 = vcmp.ge.f32.partialorder %v5209, 0.0
          %vm5242 = vcmp.ge.f32.partialorder %v5210, 0.0
          %vm5243 = vcmp.ge.f32.partialorder %v5211, 0.0
          %vm5244 = vcmp.ge.f32.partialorder %v5212, 0.0
          %vm5245 = vcmp.ge.f32.partialorder %v5213, 0.0
          %vm5246 = vcmp.ge.f32.partialorder %v5214, 0.0
          %vm5247 = vcmp.ge.f32.partialorder %v5215, 0.0
          %vm5248 = vcmp.ge.f32.partialorder %v5216, 0.0
          %vm5249 = vcmp.ge.f32.partialorder %v5217, 0.0
          %vm5250 = vcmp.ge.f32.partialorder %v5218, 0.0
          %vm5251 = vcmp.ge.f32.partialorder %v5219, 0.0
          %vm5252 = vcmp.ge.f32.partialorder %v5220, 0.0
          %vm5253 = vcmp.ge.f32.partialorder %v5221, 0.0
          %vm5254 = vcmp.ge.f32.partialorder %v5222, 0.0
          %vm5255 = vcmp.ge.f32.partialorder %v5223, 0.0
          %vm5256 = vcmp.ge.f32.partialorder %v5224, 0.0
          %vm5257 = vcmp.ge.f32.partialorder %v5225, 0.0
          %vm5258 = vcmp.ge.f32.partialorder %v5226, 0.0
          %vm5259 = vcmp.ge.f32.partialorder %v5227, 0.0
          %vm5260 = vcmp.ge.f32.partialorder %v5228, 0.0
          %vm5261 = vcmp.ge.f32.partialorder %v5229, 0.0
          %vm5262 = vcmp.ge.f32.partialorder %v5230, 0.0
          %vm5263 = vcmp.ge.f32.partialorder %v5231, 0.0
          %v5264 = vmul.f32 %v5200, 0.2
          %v5265 = vmul.f32 %v5201, 0.2
          %v5266 = vmul.f32 %v5202, 0.2
          %v5267 = vmul.f32 %v5203, 0.2
          %v5268 = vmul.f32 %v5204, 0.2
          %v5269 = vmul.f32 %v5205, 0.2
          %v5270 = vmul.f32 %v5206, 0.2
          %v5271 = vmul.f32 %v5207, 0.2
          %v5272 = vmul.f32 %v5208, 0.2
          %v5273 = vmul.f32 %v5209, 0.2
          %v5274 = vmul.f32 %v5210, 0.2
          %v5275 = vmul.f32 %v5211, 0.2
          %v5276 = vmul.f32 %v5212, 0.2
          %v5277 = vmul.f32 %v5213, 0.2
          %v5278 = vmul.f32 %v5214, 0.2
          %v5279 = vmul.f32 %v5215, 0.2
          %v5280 = vmul.f32 %v5216, 0.2
          %v5281 = vmul.f32 %v5217, 0.2
          %v5282 = vmul.f32 %v5218, 0.2
          %v5283 = vmul.f32 %v5219, 0.2
          %v5284 = vmul.f32 %v5220, 0.2
          %v5285 = vmul.f32 %v5221, 0.2
          %v5286 = vmul.f32 %v5222, 0.2
          %v5287 = vmul.f32 %v5223, 0.2
          %v5288 = vmul.f32 %v5224, 0.2
          %v5289 = vmul.f32 %v5225, 0.2
          %v5290 = vmul.f32 %v5226, 0.2
          %v5291 = vmul.f32 %v5227, 0.2
          %v5292 = vmul.f32 %v5228, 0.2
          %v5293 = vmul.f32 %v5229, 0.2
          %v5294 = vmul.f32 %v5230, 0.2
          %v5295 = vmul.f32 %v5231, 0.2
          %v5296 = vsel %vm5232, %v5200, %v5264
          %v5297 = vsel %vm5233, %v5201, %v5265
          %v5298 = vsel %vm5234, %v5202, %v5266
          %v5299 = vsel %vm5235, %v5203, %v5267
          %v5300 = vsel %vm5236, %v5204, %v5268
          %v5301 = vsel %vm5237, %v5205, %v5269
          %v5302 = vsel %vm5238, %v5206, %v5270
          %v5303 = vsel %vm5239, %v5207, %v5271
          %v5304 = vsel %vm5240, %v5208, %v5272
          %v5305 = vsel %vm5241, %v5209, %v5273
          %v5306 = vsel %vm5242, %v5210, %v5274
          %v5307 = vsel %vm5243, %v5211, %v5275
          %v5308 = vsel %vm5244, %v5212, %v5276
          %v5309 = vsel %vm5245, %v5213, %v5277
          %v5310 = vsel %vm5246, %v5214, %v5278
          %v5311 = vsel %vm5247, %v5215, %v5279
          %v5312 = vsel %vm5248, %v5216, %v5280
          %v5313 = vsel %vm5249, %v5217, %v5281
          %v5314 = vsel %vm5250, %v5218, %v5282
          %v5315 = vsel %vm5251, %v5219, %v5283
          %v5316 = vsel %vm5252, %v5220, %v5284
          %v5317 = vsel %vm5253, %v5221, %v5285
          %v5318 = vsel %vm5254, %v5222, %v5286
          %v5319 = vsel %vm5255, %v5223, %v5287
          %v5320 = vsel %vm5256, %v5224, %v5288
          %v5321 = vsel %vm5257, %v5225, %v5289
          %v5322 = vsel %vm5258, %v5226, %v5290
          %v5323 = vsel %vm5259, %v5227, %v5291
          %v5324 = vsel %vm5260, %v5228, %v5292
          %v5325 = vsel %vm5261, %v5229, %v5293
          %v5326 = vsel %vm5262, %v5230, %v5294
          %v5327 = vsel %vm5263, %v5231, %v5295
          %5328 = vxpose.xlu0.b32.start [1/16] %v5296, 128
          %5329 = vxpose.xlu0.b32.cont [2/16] %v5297, 128
          %5330 = vxpose.xlu0.b32.cont [3/16] %v5298, 128
          %5331 = vxpose.xlu0.b32.cont [4/16] %v5299, 128
          %5332 = vxpose.xlu0.b32.cont [5/16] %v5300, 128
          %5333 = vxpose.xlu0.b32.cont [6/16] %v5301, 128
          %5334 = vxpose.xlu0.b32.cont [7/16] %v5302, 128
          %5335 = vxpose.xlu0.b32.cont [8/16] %v5303, 128
          %5336 = vxpose.xlu0.b32.cont [9/16] %v5304, 128
          %5337 = vxpose.xlu0.b32.cont [10/16] %v5305, 128
          %5338 = vxpose.xlu0.b32.cont [11/16] %v5306, 128
          %5339 = vxpose.xlu0.b32.cont [12/16] %v5307, 128
          %5340 = vxpose.xlu0.b32.cont [13/16] %v5308, 128
          %5341 = vxpose.xlu0.b32.cont [14/16] %v5309, 128
          %5342 = vxpose.xlu0.b32.cont [15/16] %v5310, 128
          %5343 = vxpose.xlu0.b32.end [16/16] %v5311, 128
          %v5344 = vpop.trf.xlu0
          %v5345 = vpop.trf.xlu0
          %v5346 = vpop.trf.xlu0
          %v5347 = vpop.trf.xlu0
          %v5348 = vpop.trf.xlu0
          %v5349 = vpop.trf.xlu0
          %v5350 = vpop.trf.xlu0
          %v5351 = vpop.trf.xlu0
          %v5352 = vpop.trf.xlu0
          %v5353 = vpop.trf.xlu0
          %v5354 = vpop.trf.xlu0
          %v5355 = vpop.trf.xlu0
          %v5356 = vpop.trf.xlu0
          %v5357 = vpop.trf.xlu0
          %v5358 = vpop.trf.xlu0
          %v5359 = vpop.trf.xlu0
          %5360 = vxpose.xlu0.b32.start [1/16] %v5312, 128
          %5361 = vxpose.xlu0.b32.cont [2/16] %v5313, 128
          %5362 = vxpose.xlu0.b32.cont [3/16] %v5314, 128
          %5363 = vxpose.xlu0.b32.cont [4/16] %v5315, 128
          %5364 = vxpose.xlu0.b32.cont [5/16] %v5316, 128
          %5365 = vxpose.xlu0.b32.cont [6/16] %v5317, 128
          %5366 = vxpose.xlu0.b32.cont [7/16] %v5318, 128
          %5367 = vxpose.xlu0.b32.cont [8/16] %v5319, 128
          %5368 = vxpose.xlu0.b32.cont [9/16] %v5320, 128
          %5369 = vxpose.xlu0.b32.cont [10/16] %v5321, 128
          %5370 = vxpose.xlu0.b32.cont [11/16] %v5322, 128
          %5371 = vxpose.xlu0.b32.cont [12/16] %v5323, 128
          %5372 = vxpose.xlu0.b32.cont [13/16] %v5324, 128
          %5373 = vxpose.xlu0.b32.cont [14/16] %v5325, 128
          %5374 = vxpose.xlu0.b32.cont [15/16] %v5326, 128
          %5375 = vxpose.xlu0.b32.end [16/16] %v5327, 128
          %v5376 = vpop.trf.xlu0
          %v5377 = vpop.trf.xlu0
          %v5378 = vpop.trf.xlu0
          %v5379 = vpop.trf.xlu0
          %v5380 = vpop.trf.xlu0
          %v5381 = vpop.trf.xlu0
          %v5382 = vpop.trf.xlu0
          %v5383 = vpop.trf.xlu0
          %v5384 = vpop.trf.xlu0
          %v5385 = vpop.trf.xlu0
          %v5386 = vpop.trf.xlu0
          %v5387 = vpop.trf.xlu0
          %v5388 = vpop.trf.xlu0
          %v5389 = vpop.trf.xlu0
          %v5390 = vpop.trf.xlu0
          %v5391 = vpop.trf.xlu0
          %5392 = vst [vmem:[%s177] sm:$0xff] %v5344
          %5393 = vst [vmem:[%s177 + $0x8] sm:$0xff] %v5376
        $region44: #{tpu_custom_call.1} parent=31 // pred_fallthru
          _
        %s5394 = sand.u32 %s107, 1
        %s5395 = scalar_lea.sflag [#allocation5], %s5394
        %s5396 = sand.u32 %s107, 1
        %s5397 = smul.addr %s5396, 16
        %s5398 = scalar_lea.vmem [#allocation4], %s5397
        // Predicated region
        $region45: #{tpu_custom_call.1} parent=31 // pred_check
          %p5399 = pneg %p117
        $region46: #{tpu_custom_call.1} parent=31 // pred_check_branch
          %5401 = sbr.rel (%p5399) target = $region48
        $region47: #{tpu_custom_call.1} parent=31 // pred_region
          %s5402 = smul.u32 %s21, %s22
          %s5404 = ssub.s32 256, 256
          %5405 = vsyncadd %s5395, %s5404
          %s5406 = smul.addr %s5402, 2
          %s5407 = smul.addr %s5406, 128
          %s5408 = scalar_lea.hbm %s3, %s5407
          %s5410 = sshll.u32 %s5398, 4
          %s5411 = int_to_ptr.vmem [resolvable:$true] %s5410
          %5413 = dma.vmem_to_hbm [thread:$0]  %s5411, 256, %s5408, %s5395
        $region48: #{tpu_custom_call.1} parent=31 // pred_fallthru
          _
      $region32: #{tpu_custom_call.1} parent=5 // pred_fallthru
        _
      %p5414 = scmp.le.s32.totalorder 2, %s12
      // Predicated region
      $region49: #{tpu_custom_call.1} parent=5 // pred_check
        %p5415 = pneg %p5414
      $region50: #{tpu_custom_call.1} parent=5 // pred_check_branch
        %5417 = sbr.rel (%p5415) target = $region52
      $region51: #{tpu_custom_call.1} parent=5 // pred_region
        %s5418 = ssub.s32 %s12, 2
        // Predicated region
        $region53: #{tpu_custom_call.1} parent=51 // pred_check
          %p5419 = pneg %p123
        $region54: #{tpu_custom_call.1} parent=51 // pred_check_branch
          %5421 = sbr.rel (%p5419) target = $region56
        $region55: #{tpu_custom_call.1} parent=51 // pred_region
          %s5422 = sand.u32 %s108, 1
          %s5423 = scalar_lea.sflag [#allocation5], %s5422
          %s5424 = sand.u32 %s108, 1
          %s5425 = smul.addr %s5424, 16
          %s5426 = scalar_lea.vmem [#allocation4], %s5425
          %5427 = dma.done %s5423, 256
        $region56: #{tpu_custom_call.1} parent=51 // pred_fallthru
          _
      $region52: #{tpu_custom_call.1} parent=5 // pred_fallthru
        _
    $region6: #{tpu_custom_call.1} parent=1 // loop_footer
      %s16 = sadd.s32 1, %s12
    $region7: #{tpu_custom_call.1} parent=1 // loop_footer_branch
      %11 = sbr.rel target = $region3
    $region8: #{tpu_custom_call.1} parent=1 // loop_exit
      _
    %5428 = vsyncpa [#allocation5], 1
    %s5429 = scalar_lea.sflag [#allocation5], 1
    %5430 = vsyncpa %s5429, 1

</llo_original>
